<compile_context>
chip_gen: v7x
topology: tpu7x:2x2x1
jax: 0.10.0
libtpu: 0.0.40
codegen_flags: <defaults>
</compile_context>

<pallas_src>
import math

import jax
import jax.numpy as jnp
import numpy as np
from jax import lax
from jax.experimental import pallas as pl
from jax.experimental.pallas import tpu as pltpu

NEG_SLOPE = 0.01  # PyTorch default LeakyReLU slope


def _leaky_relu(v):
    return jnp.where(v > 0, v, NEG_SLOPE * v)


# ---------------------------------------------------------------------------
# Fused Pallas kernel.  One grid step processes NB full (H, W) planes:
#   xcat = [xup | prev]                 (lane concat, built once)
#   t1   = xcat @ w11 + b11             (1x1 conv, single matmul)
#   x1   = leaky_relu(conv3x3(t1))      (3 matmuls, K = 3*Cm, dw folded into K)
#   t2   = [xcat | x1] @ w21 + b21      (1x1 conv, single matmul)
#   out  = leaky_relu(conv3x3(t2))      (3 matmuls, K = 3*Cm)
# ---------------------------------------------------------------------------
def _fused_up_block_kernel(xup_ref, prev_ref,
                           w11_ref, b11_ref, w12_ref, b12_ref,
                           w21_ref, b21_ref, w22_ref, b22_ref,
                           o_ref, pad1_ref, pad2_ref):
    NB, H, W, Cup = xup_ref.shape
    Cprev = prev_ref.shape[3]
    Cm = w11_ref.shape[1]
    Co = w22_ref.shape[2]
    M = NB * H * W
    f32 = jnp.float32
    cd = pad1_ref.dtype

    def w_tap_slab(t_f32, cin):
        # (M, cin) f32 -> (NB, H+2, W, 3*cin) cd: zero-padded along H only, with
        # the three W taps [w-1 | w | w+1] stacked on the channel (lane) axis so
        # the 3x3 conv's dw dimension folds into the matmul contraction dim.
        t3 = t_f32.reshape(NB * H, W, cin)
        w_idx = lax.broadcasted_iota(jnp.int32, (1, W, 1), 1)
        # reads w-1 (kernel column dw=0): sublane roll by +1, zero column 0.
        t_l = jnp.where(w_idx > 0, pltpu.roll(t3, 1, axis=1), 0.0)
        # reads w+1 (kernel column dw=2): sublane roll by W-1 (== -1), zero col W-1.
        t_r = jnp.where(w_idx < W - 1, pltpu.roll(t3, W - 1, axis=1), 0.0)
        taps = jnp.concatenate([t_l, t3, t_r], axis=-1).astype(cd)
        taps = taps.reshape(NB, H, W, 3 * cin)
        zrow = jnp.zeros((NB, 1, W, 3 * cin), cd)
        return jnp.concatenate([zrow, taps, zrow], axis=1)

    def conv3x3(pad_ref, w_ref, b_ref):
        # 3x3 conv as 3 matmuls (one per kernel row dh); K = 3*Cin.  Every window
        # slice is an H-offset slice (H is outside the tiled last-2 dims), so the
        # loads stay (8, 128)-aligned.
        c3 = pad_ref.shape[3]
        acc = (jnp.dot(pad_ref[:, 0:H].reshape(M, c3), w_ref[0],
                       preferred_element_type=f32)
               + b_ref[...])
        for dh in (1, 2):
            acc = acc + jnp.dot(pad_ref[:, dh:dh + H].reshape(M, c3), w_ref[dh],
                                preferred_element_type=f32)
        return acc

    # --- fused input concat (reused by both 1x1 convs) -----------------------
    xcat = jnp.concatenate([xup_ref[...].reshape(M, Cup),
                            prev_ref[...].reshape(M, Cprev)], axis=1)

    # --- conv11 (1x1) over cat([xup, prev]): one matmul, K = Cup + Cprev ------
    t1 = jnp.dot(xcat, w11_ref[...], preferred_element_type=f32) + b11_ref[...]

    # --- conv12 (3x3, pad=1) + LeakyReLU --------------------------------------
    pad1_ref[...] = w_tap_slab(t1, Cm)
    x1 = _leaky_relu(conv3x3(pad1_ref, w12_ref, b12_ref))            # (M, Cm) f32

    # --- conv21 (1x1) over cat([xup, prev, x1]): one matmul -------------------
    x21 = jnp.concatenate([xcat, x1.astype(xcat.dtype)], axis=1)
    t2 = jnp.dot(x21, w21_ref[...], preferred_element_type=f32) + b21_ref[...]

    # --- conv22 (3x3, pad=1) + LeakyReLU --------------------------------------
    pad2_ref[...] = w_tap_slab(t2, Cm)
    out = _leaky_relu(conv3x3(pad2_ref, w22_ref, b22_ref))            # (M, Co) f32

    o_ref[...] = out.reshape(NB, H, W, Co).astype(o_ref.dtype)


# ---------------------------------------------------------------------------
# VMEM sizing (generation-aware; dtype-correct sublane rounding).
# ---------------------------------------------------------------------------
def _round_up(x, m):
    return (x + m - 1) // m * m


def _vmem_budgets():
    mib = 1024 * 1024
    try:
        cap = int(pltpu.get_tpu_info().vmem_capacity_bytes)
    except Exception:
        cap = 128 * mib
    budget = max(16 * mib, cap // 2 - 4 * mib)          # ~60 MiB on 128 MiB, ~28 MiB on 64 MiB
    limit = int(min(cap - 16 * mib, budget + 36 * mib)) # ~96 MiB on 128 MiB, ~48 MiB on 64 MiB
    return budget, limit


def _vmem_bytes_per_batch(H, W, Cup, Cprev, Cm, Co, cd):
    isz = jnp.dtype(cd).itemsize

    def slab(w, c, i):  # padded (W, C) footprint of one H row, itemsize i
        rows_tile = 8 * (4 // i)                  # 8 (f32), 16 (bf16)
        return _round_up(w, rows_tile) * _round_up(c, 128) * i

    ccat1, ccat2 = Cup + Cprev, Cup + Cprev + Cm
    b = 0
    # double-buffered pipeline blocks
    b += 2 * H * slab(W, Cup, isz)
    b += 2 * H * slab(W, Cprev, isz)
    b += 2 * H * slab(W, Co, 4)
    # two H-padded tap scratches
    b += 2 * (H + 2) * slab(W, 3 * Cm, isz)
    # live vector values (conservative): lane-concatenated inputs, f32 conv
    # outputs, one tap slab in flight (f32 pre-cast + cd post-cast), matmul window.
    b += H * slab(W, ccat1, isz) + H * slab(W, ccat2, isz)
    b += 3 * H * slab(W, Cm, 4) + H * slab(W, Co, 4)
    b += (H + 2) * (slab(W, 3 * Cm, 4) + slab(W, 3 * Cm, isz))
    b += H * slab(W, 3 * Cm, isz)
    return b


def _pick_batch_block(N, per_batch_bytes, budget_bytes):
    # Prefer a grid of length >= 2 so (a) the "parallel" batch axis can shard
    # across v7x's two TensorCores and (b) input-DMA / compute pipelining overlaps.
    hi = max(1, N // 2)
    for cand in range(hi, 0, -1):
        if N % cand == 0 and cand * per_batch_bytes <= budget_bytes:
            return cand
    return 1


# ---------------------------------------------------------------------------
# pallas_call wrapper for the fused block.
# ---------------------------------------------------------------------------
def _fused_up_block(xup, prev, w11, b11, w12, b12, w21, b21, w22, b22,
                    *, compute_dtype=jnp.bfloat16):
    N, H, W, Cup = xup.shape
    Cprev = prev.shape[3]
    Cm = w11.shape[1]
    Co = w22.shape[3]
    # Keep W sublane-aligned so the (NB,H,W,C) <-> (M,C) reshapes and slab
    # stores never need an in-VMEM repack (16 is preferred for bf16).
    assert W % 8 == 0, "W must be a multiple of 8 (sublane tile)"

    cd = jnp.dtype(compute_dtype)
    xup = xup.astype(cd)
    prev = prev.astype(cd)
    w11c = w11.astype(cd)
    w21c = w21.astype(cd)
    # Fold the 3x3 kernels' (dw, Cin) dims into one contraction dim -> (3, 3*Cin, Cout)
    w12c = w12.reshape(3, 3 * Cm, Cm).astype(cd)
    w22c = w22.reshape(3, 3 * Cm, Co).astype(cd)
    b11c, b12c, b21c, b22c = (b.astype(jnp.float32).reshape(1, -1)
                              for b in (b11, b12, b21, b22))

    budget, limit = _vmem_budgets()
    per_batch = _vmem_bytes_per_batch(H, W, Cup, Cprev, Cm, Co, cd)
    nb = _pick_batch_block(N, per_batch, budget)
    grid = (N // nb,)

    def wspec(shape):
        zeros = (0,) * len(shape)
        return pl.BlockSpec(shape, lambda n: zeros)

    in_specs = [
        pl.BlockSpec((nb, H, W, Cup), lambda n: (n, 0, 0, 0)),
        pl.BlockSpec((nb, H, W, Cprev), lambda n: (n, 0, 0, 0)),
        wspec((Cup + Cprev, Cm)),        # w11
        wspec((1, Cm)),                  # b11
        wspec((3, 3 * Cm, Cm)),          # w12 (dw folded into rows)
        wspec((1, Cm)),                  # b12
        wspec((Cup + Cprev + Cm, Cm)),   # w21
        wspec((1, Cm)),                  # b21
        wspec((3, 3 * Cm, Co)),          # w22 (dw folded into rows)
        wspec((1, Co)),                  # b22
    ]
    out_specs = pl.BlockSpec((nb, H, W, Co), lambda n: (n, 0, 0, 0))

    return pl.pallas_call(
        _fused_up_block_kernel,
        out_shape=jax.ShapeDtypeStruct((N, H, W, Co), jnp.float32),
        grid_spec=pltpu.PrefetchScalarGridSpec(
            num_scalar_prefetch=0,
            grid=grid,
            in_specs=in_specs,
            out_specs=out_specs,
            scratch_shapes=[
                pltpu.VMEM((nb, H + 2, W, 3 * Cm), cd),   # conv12 tap slab (H-padded)
                pltpu.VMEM((nb, H + 2, W, 3 * Cm), cd),   # conv22 tap slab (H-padded)
            ],
        ),
        compiler_params=pltpu.CompilerParams(
            dimension_semantics=("parallel",),
            vmem_limit_bytes=limit,
        ),
    )(xup, prev, w11c, b11c, w12c, b12c, w21c, b21c, w22c, b22c)


# ---------------------------------------------------------------------------
# Bilinear upsample matching F.interpolate(mode='bilinear', align_corners=False).
# Integer strides: shift + lerp (no gathers).  Non-integer: gather fallback.
# ---------------------------------------------------------------------------
def _upsample_axis_integer(x, axis, scale):
    n = x.shape[axis]
    first = lax.slice_in_dim(x, 0, 1, axis=axis)
    last = lax.slice_in_dim(x, n - 1, n, axis=axis)
    x_prev = jnp.concatenate([first, lax.slice_in_dim(x, 0, n - 1, axis=axis)], axis=axis)
    x_next = jnp.concatenate([lax.slice_in_dim(x, 1, n, axis=axis), last], axis=axis)
    planes = []
    for r in range(scale):
        frac = (r + 0.5) / scale - 0.5
        if frac < 0:          # neighbour is j-1 (clamped at the left edge)
            lam = 1.0 + frac
            planes.append((1.0 - lam) * x_prev + lam * x)
        else:                 # neighbour is j+1 (clamped at the right edge)
            planes.append((1.0 - frac) * x + frac * x_next)
    y = jnp.stack(planes, axis=axis + 1)
    new_shape = list(x.shape)
    new_shape[axis] = n * scale
    return y.reshape(new_shape)


def _bilinear_upsample_gather(x, scale):
    N, H, W, C = x.shape
    Ho, Wo = int(math.floor(H * scale)), int(math.floor(W * scale))

    def src_idx(out_size, in_size):
        i = jnp.arange(out_size, dtype=jnp.float32)
        src = (i + 0.5) * (in_size / out_size) - 0.5
        src = jnp.maximum(src, 0.0)                       # PyTorch clamps to 0
        i0 = jnp.floor(src).astype(jnp.int32)
        i0 = jnp.minimum(i0, in_size - 1)
        i1 = jnp.minimum(i0 + 1, in_size - 1)
        lam = src - i0.astype(jnp.float32)
        return i0, i1, lam

    h0, h1, lh = src_idx(Ho, H)
    w0, w1, lw = src_idx(Wo, W)
    xh0, xh1 = x[:, h0], x[:, h1]
    lw_ = lw[None, None, :, None]
    top = xh0[:, :, w0] * (1.0 - lw_) + xh0[:, :, w1] * lw_
    bot = xh1[:, :, w0] * (1.0 - lw_) + xh1[:, :, w1] * lw_
    lh_ = lh[None, :, None, None]
    return top * (1.0 - lh_) + bot * lh_


def bilinear_upsample_nhwc(x, scale):
    s = float(scale)
    if s.is_integer() and s >= 1.0:
        si = int(s)
        if si == 1:
            return x
        y = _upsample_axis_integer(x, axis=1, scale=si)
        return _upsample_axis_integer(y, axis=2, scale=si)
    return _bilinear_upsample_gather(x, scale)


# ---------------------------------------------------------------------------
# Module forward + deterministic parameter init
# ---------------------------------------------------------------------------
def init_params(key, skip_c, in_c, out_c):
    c11_in = skip_c + in_c
    c21_in = skip_c + in_c + out_c
    ks = jax.random.split(key, 8)

    def u(k, shape, fan_in):
        bound = 1.0 / math.sqrt(fan_in)
        return jax.random.uniform(k, shape, jnp.float32, -bound, bound)

    return {
        # 1x1 conv weights stored as (Cin, Cout); 3x3 as (kh, kw, Cin, Cout)
        "w11": u(ks[0], (c11_in, out_c), c11_in),
        "b11": u(ks[1], (1, out_c), c11_in),
        "w12": u(ks[2], (3, 3, out_c, out_c), out_c * 9),
        "b12": u(ks[3], (1, out_c), out_c * 9),
        "w21": u(ks[4], (c21_in, out_c), c21_in),
        "b21": u(ks[5], (1, out_c), c21_in),
        "w22": u(ks[6], (3, 3, out_c, out_c), out_c * 9),
        "b22": u(ks[7], (1, out_c), out_c * 9),
    }


def densenet2d_up_block(prev_feature_map, x, params, up_stride,
                        *, compute_dtype=jnp.bfloat16):
    """Inputs/outputs in NCHW (PyTorch convention); compute in NHWC."""
    prev = jnp.transpose(prev_feature_map, (0, 2, 3, 1)).astype(jnp.float32)
    xin = jnp.transpose(x, (0, 2, 3, 1)).astype(jnp.float32)

    xup = bilinear_upsample_nhwc(xin, up_stride)

    out_nhwc = _fused_up_block(
        xup, prev,
        params["w11"], params["b11"], params["w12"], params["b12"],
        params["w21"], params["b21"], params["w22"], params["b22"],
        compute_dtype=compute_dtype)

    return jnp.transpose(out_nhwc, (0, 3, 1, 2))          # back to NCHW


# ---------------------------------------------------------------------------
# Plain-JAX reference (lax.conv) for a correctness cross-check.
# ---------------------------------------------------------------------------
def _reference_forward_nhwc(xup, prev, params):
    def conv(xv, w_hwio, b, pad):
        y = jax.lax.conv_general_dilated(
            xv, w_hwio, window_strides=(1, 1),
            padding=((pad, pad), (pad, pad)),
            dimension_numbers=("NHWC", "HWIO", "NHWC"),
            precision=jax.lax.Precision.HIGHEST)
        return y + b.reshape(1, 1, 1, -1)

    xcat = jnp.concatenate([xup, prev], axis=-1)
    t1 = conv(xcat, params["w11"][None, None], params["b11"], 0)
    x1 = _leaky_relu(conv(t1, params["w12"], params["b12"], 1))
    x21 = jnp.concatenate([xcat, x1], axis=-1)
    t2 = conv(x21, params["w21"][None, None], params["b21"], 0)
    return _leaky_relu(conv(t2, params["w22"], params["b22"], 1))


if __name__ == "__main__":
    skip_c, in_c, out_c, up_stride = 4, 4, 4, 2
    N, H, W = 2, 16, 16

    key = jax.random.PRNGKey(0)
    kp, k1, k2 = jax.random.split(key, 3)
    params = init_params(kp, skip_c, in_c, out_c)

    prev_feature_map = jax.random.normal(k1, (N, skip_c, H, W), jnp.float32)
    x = jax.random.normal(k2, (N, in_c, H // up_stride, W // up_stride), jnp.float32)

    # f32 compute path (tight check) and the default bf16 path (loose check).
    out_f32 = jax.block_until_ready(
        densenet2d_up_block(prev_feature_map, x, params, up_stride,
                            compute_dtype=jnp.float32))
    out_bf16 = jax.block_until_ready(
        densenet2d_up_block(prev_feature_map, x, params, up_stride))
    assert out_f32.shape == (N, out_c, H, W), out_f32.shape
    assert out_bf16.shape == (N, out_c, H, W), out_bf16.shape
    assert jnp.isfinite(out_f32).all() and jnp.isfinite(out_bf16).all()

    # Upsample: shift+lerp path vs the gather-based PyTorch-exact reference.
    x_nhwc = jnp.transpose(x, (0, 2, 3, 1))
    xup_fast = bilinear_upsample_nhwc(x_nhwc, up_stride)
    xup_ref = _bilinear_upsample_gather(x_nhwc, up_stride)
    up_err = float(jnp.max(jnp.abs(xup_fast - xup_ref)))
    assert up_err < 1e-5, f"upsample mismatch: {up_err}"

    # Cross-check the fused Pallas kernel against a plain-JAX conv reference.
    prev_nhwc = jnp.transpose(prev_feature_map, (0, 2, 3, 1))
    ref = jnp.transpose(_reference_forward_nhwc(xup_ref, prev_nhwc, params),
                        (0, 3, 1, 2))
    err32 = float(jnp.max(jnp.abs(out_f32 - ref)))
    errbf = float(jnp.max(jnp.abs(out_bf16 - ref)))
    assert err32 < 5e-3, f"f32 mismatch vs reference: max abs err = {err32}"
    assert errbf < 2e-1, f"bf16 mismatch vs reference: max abs err = {errbf}"

    print("KERNEL_OK")
</pallas_src>

<mosaic_0001>
module attributes {stable_mosaic.version = 11 : i64} {
  func.func @_fused_up_block_kernel(%arg0: i32, %arg1: memref<1x16x16x4xf32, #tpu.memory_space<vmem>>, %arg2: memref<1x16x16x4xf32, #tpu.memory_space<vmem>>, %arg3: memref<8x4xf32, #tpu.memory_space<vmem>>, %arg4: memref<1x4xf32, #tpu.memory_space<vmem>>, %arg5: memref<3x12x4xf32, #tpu.memory_space<vmem>>, %arg6: memref<1x4xf32, #tpu.memory_space<vmem>>, %arg7: memref<12x4xf32, #tpu.memory_space<vmem>>, %arg8: memref<1x4xf32, #tpu.memory_space<vmem>>, %arg9: memref<3x12x4xf32, #tpu.memory_space<vmem>>, %arg10: memref<1x4xf32, #tpu.memory_space<vmem>>, %arg11: memref<1x16x16x4xf32, #tpu.memory_space<vmem>>, %arg12: memref<1x18x16x12xf32, #tpu.memory_space<vmem>>, %arg13: memref<1x18x16x12xf32, #tpu.memory_space<vmem>>) attributes {dimension_semantics = [#tpu.dimension_semantics<parallel>], iteration_bounds = array<i64: 2>, scalar_prefetch = 0 : i64, scratch_operands = 2 : i64, tpu.core_type = #tpu.core_type<tc>, window_params = [{transform_indices = @transform_0, window_bounds = array<i64: 1, 16, 16, 4>}, {transform_indices = @transform_1, window_bounds = array<i64: 1, 16, 16, 4>}, {pipeline_mode = #tpu.pipeline_mode<synchronous>, transform_indices = @transform_2, window_bounds = array<i64: 8, 4>}, {pipeline_mode = #tpu.pipeline_mode<synchronous>, transform_indices = @transform_3, window_bounds = array<i64: 1, 4>}, {pipeline_mode = #tpu.pipeline_mode<synchronous>, transform_indices = @transform_4, window_bounds = array<i64: 3, 12, 4>}, {pipeline_mode = #tpu.pipeline_mode<synchronous>, transform_indices = @transform_5, window_bounds = array<i64: 1, 4>}, {pipeline_mode = #tpu.pipeline_mode<synchronous>, transform_indices = @transform_6, window_bounds = array<i64: 12, 4>}, {pipeline_mode = #tpu.pipeline_mode<synchronous>, transform_indices = @transform_7, window_bounds = array<i64: 1, 4>}, {pipeline_mode = #tpu.pipeline_mode<synchronous>, transform_indices = @transform_8, window_bounds = array<i64: 3, 12, 4>}, {pipeline_mode = #tpu.pipeline_mode<synchronous>, transform_indices = @transform_9, window_bounds = array<i64: 1, 4>}, {transform_indices = @transform_10, window_bounds = array<i64: 1, 16, 16, 4>}]} {
    %c0 = arith.constant 0 : index
    %c0_0 = arith.constant 0 : index
    %c0_1 = arith.constant 0 : index
    %c0_2 = arith.constant 0 : index
    %0 = vector.load %arg1[%c0, %c0_0, %c0_1, %c0_2] : memref<1x16x16x4xf32, #tpu.memory_space<vmem>>, vector<1x16x16x4xf32>
    %1 = vector.shape_cast %0 : vector<1x16x16x4xf32> to vector<256x4xf32>
    %c0_3 = arith.constant 0 : index
    %c0_4 = arith.constant 0 : index
    %c0_5 = arith.constant 0 : index
    %c0_6 = arith.constant 0 : index
    %2 = vector.load %arg2[%c0_3, %c0_4, %c0_5, %c0_6] : memref<1x16x16x4xf32, #tpu.memory_space<vmem>>, vector<1x16x16x4xf32>
    %3 = vector.shape_cast %2 : vector<1x16x16x4xf32> to vector<256x4xf32>
    %4 = tpu.concatenate %1, %3 in 1 : vector<256x4xf32>, vector<256x4xf32> -> vector<256x8xf32>
    %c0_7 = arith.constant 0 : index
    %c0_8 = arith.constant 0 : index
    %5 = vector.load %arg3[%c0_7, %c0_8] : memref<8x4xf32, #tpu.memory_space<vmem>>, vector<8x4xf32>
    %cst = arith.constant dense<0.000000e+00> : vector<256x4xf32>
    %6 = tpu.matmul %4, %5, %cst {dimension_numbers = #tpu.dot_dimension_numbers<[1], [0], [0], [1], [0, 0, 1, 1], [], []>} : vector<256x8xf32>, vector<8x4xf32>, vector<256x4xf32> -> vector<256x4xf32>
    %c0_9 = arith.constant 0 : index
    %c0_10 = arith.constant 0 : index
    %7 = vector.load %arg4[%c0_9, %c0_10] : memref<1x4xf32, #tpu.memory_space<vmem>>, vector<1x4xf32>
    %8 = vector.broadcast %7 : vector<1x4xf32> to vector<256x4xf32>
    %9 = arith.addf %6, %8 : vector<256x4xf32>
    %10 = vector.shape_cast %9 : vector<256x4xf32> to vector<16x16x4xf32>
    %11 = tpu.iota {dimensions = array<i32: 1>} : vector<1x16x1xi32>
    %c0_i32 = arith.constant 0 : i32
    %12 = vector.broadcast %c0_i32 : i32 to vector<1x16x1xi32>
    %13 = arith.cmpi sgt, %11, %12 : vector<1x16x1xi32>
    %c1_i32 = arith.constant 1 : i32
    %14 = tpu.dynamic_rotate %10 by %c1_i32 dim 1 : vector<16x16x4xf32>, i32 -> vector<16x16x4xf32>
    %cst_11 = arith.constant 0.000000e+00 : f32
    %15 = vector.shape_cast %13 : vector<1x16x1xi1> to vector<1x16x1xi1>
    %16 = vector.broadcast %15 : vector<1x16x1xi1> to vector<16x16x4xi1>
    %17 = vector.broadcast %cst_11 : f32 to vector<16x16x4xf32>
    %18 = arith.select %16, %14, %17 : vector<16x16x4xi1>, vector<16x16x4xf32>
    %c15_i32 = arith.constant 15 : i32
    %19 = vector.broadcast %c15_i32 : i32 to vector<1x16x1xi32>
    %20 = arith.cmpi slt, %11, %19 : vector<1x16x1xi32>
    %c15_i32_12 = arith.constant 15 : i32
    %21 = tpu.dynamic_rotate %10 by %c15_i32_12 dim 1 : vector<16x16x4xf32>, i32 -> vector<16x16x4xf32>
    %cst_13 = arith.constant 0.000000e+00 : f32
    %22 = vector.shape_cast %20 : vector<1x16x1xi1> to vector<1x16x1xi1>
    %23 = vector.broadcast %22 : vector<1x16x1xi1> to vector<16x16x4xi1>
    %24 = vector.broadcast %cst_13 : f32 to vector<16x16x4xf32>
    %25 = arith.select %23, %21, %24 : vector<16x16x4xi1>, vector<16x16x4xf32>
    %26 = tpu.concatenate %18, %10, %25 in 2 : vector<16x16x4xf32>, vector<16x16x4xf32>, vector<16x16x4xf32> -> vector<16x16x12xf32>
    %27 = vector.shape_cast %26 : vector<16x16x12xf32> to vector<1x16x16x12xf32>
    %cst_14 = arith.constant 0.000000e+00 : f32
    %28 = vector.broadcast %cst_14 : f32 to vector<1x1x16x12xf32>
    %29 = tpu.concatenate %28, %27, %28 in 1 : vector<1x1x16x12xf32>, vector<1x16x16x12xf32>, vector<1x1x16x12xf32> -> vector<1x18x16x12xf32>
    %c0_15 = arith.constant 0 : index
    %c0_16 = arith.constant 0 : index
    %c0_17 = arith.constant 0 : index
    %c0_18 = arith.constant 0 : index
    %30 = vector.load %arg12[%c0_15, %c0_16, %c0_17, %c0_18] : memref<1x18x16x12xf32, #tpu.memory_space<vmem>>, vector<1x18x16x12xf32>
    tpu.vector_store %arg12[%c0_15, %c0_16, %c0_17, %c0_18], %29 {strides = array<i32>} : memref<1x18x16x12xf32, #tpu.memory_space<vmem>>, vector<1x18x16x12xf32>,
    %c0_19 = arith.constant 0 : index
    %c0_20 = arith.constant 0 : index
    %c0_21 = arith.constant 0 : index
    %c0_22 = arith.constant 0 : index
    %31 = vector.load %arg12[%c0_19, %c0_20, %c0_21, %c0_22] : memref<1x18x16x12xf32, #tpu.memory_space<vmem>>, vector<1x16x16x12xf32>
    %32 = vector.shape_cast %31 : vector<1x16x16x12xf32> to vector<256x12xf32>
    %c0_23 = arith.constant 0 : index
    %c0_24 = arith.constant 0 : index
    %c0_25 = arith.constant 0 : index
    %33 = vector.load %arg5[%c0_23, %c0_24, %c0_25] : memref<3x12x4xf32, #tpu.memory_space<vmem>>, vector<1x12x4xf32>
    %34 = vector.shape_cast %33 : vector<1x12x4xf32> to vector<12x4xf32>
    %cst_26 = arith.constant dense<0.000000e+00> : vector<256x4xf32>
    %35 = tpu.matmul %32, %34, %cst_26 {dimension_numbers = #tpu.dot_dimension_numbers<[1], [0], [0], [1], [0, 0, 1, 1], [], []>} : vector<256x12xf32>, vector<12x4xf32>, vector<256x4xf32> -> vector<256x4xf32>
    %c0_27 = arith.constant 0 : index
    %c0_28 = arith.constant 0 : index
    %36 = vector.load %arg6[%c0_27, %c0_28] : memref<1x4xf32, #tpu.memory_space<vmem>>, vector<1x4xf32>
    %37 = vector.broadcast %36 : vector<1x4xf32> to vector<256x4xf32>
    %38 = arith.addf %35, %37 : vector<256x4xf32>
    %c0_29 = arith.constant 0 : index
    %c1 = arith.constant 1 : index
    %c0_30 = arith.constant 0 : index
    %c0_31 = arith.constant 0 : index
    %39 = vector.load %arg12[%c0_29, %c1, %c0_30, %c0_31] : memref<1x18x16x12xf32, #tpu.memory_space<vmem>>, vector<1x16x16x12xf32>
    %40 = vector.shape_cast %39 : vector<1x16x16x12xf32> to vector<256x12xf32>
    %c1_32 = arith.constant 1 : index
    %c0_33 = arith.constant 0 : index
    %c0_34 = arith.constant 0 : index
    %41 = vector.load %arg5[%c1_32, %c0_33, %c0_34] : memref<3x12x4xf32, #tpu.memory_space<vmem>>, vector<1x12x4xf32>
    %42 = vector.shape_cast %41 : vector<1x12x4xf32> to vector<12x4xf32>
    %cst_35 = arith.constant dense<0.000000e+00> : vector<256x4xf32>
    %43 = tpu.matmul %40, %42, %cst_35 {dimension_numbers = #tpu.dot_dimension_numbers<[1], [0], [0], [1], [0, 0, 1, 1], [], []>} : vector<256x12xf32>, vector<12x4xf32>, vector<256x4xf32> -> vector<256x4xf32>
    %44 = arith.addf %38, %43 : vector<256x4xf32>
    %c0_36 = arith.constant 0 : index
    %c2 = arith.constant 2 : index
    %c0_37 = arith.constant 0 : index
    %c0_38 = arith.constant 0 : index
    %45 = vector.load %arg12[%c0_36, %c2, %c0_37, %c0_38] : memref<1x18x16x12xf32, #tpu.memory_space<vmem>>, vector<1x16x16x12xf32>
    %46 = vector.shape_cast %45 : vector<1x16x16x12xf32> to vector<256x12xf32>
    %c2_39 = arith.constant 2 : index
    %c0_40 = arith.constant 0 : index
    %c0_41 = arith.constant 0 : index
    %47 = vector.load %arg5[%c2_39, %c0_40, %c0_41] : memref<3x12x4xf32, #tpu.memory_space<vmem>>, vector<1x12x4xf32>
    %48 = vector.shape_cast %47 : vector<1x12x4xf32> to vector<12x4xf32>
    %cst_42 = arith.constant dense<0.000000e+00> : vector<256x4xf32>
    %49 = tpu.matmul %46, %48, %cst_42 {dimension_numbers = #tpu.dot_dimension_numbers<[1], [0], [0], [1], [0, 0, 1, 1], [], []>} : vector<256x12xf32>, vector<12x4xf32>, vector<256x4xf32> -> vector<256x4xf32>
    %50 = arith.addf %44, %49 : vector<256x4xf32>
    %cst_43 = arith.constant 0.000000e+00 : f32
    %51 = vector.broadcast %cst_43 : f32 to vector<256x4xf32>
    %52 = arith.cmpf ogt, %50, %51 : vector<256x4xf32>
    %cst_44 = arith.constant 0.00999999977 : f32
    %53 = vector.broadcast %cst_44 : f32 to vector<256x4xf32>
    %54 = arith.mulf %53, %50 : vector<256x4xf32>
    %55 = arith.select %52, %50, %54 : vector<256x4xi1>, vector<256x4xf32>
    %56 = tpu.concatenate %4, %55 in 1 : vector<256x8xf32>, vector<256x4xf32> -> vector<256x12xf32>
    %c0_45 = arith.constant 0 : index
    %c0_46 = arith.constant 0 : index
    %57 = vector.load %arg7[%c0_45, %c0_46] : memref<12x4xf32, #tpu.memory_space<vmem>>, vector<12x4xf32>
    %cst_47 = arith.constant dense<0.000000e+00> : vector<256x4xf32>
    %58 = tpu.matmul %56, %57, %cst_47 {dimension_numbers = #tpu.dot_dimension_numbers<[1], [0], [0], [1], [0, 0, 1, 1], [], []>} : vector<256x12xf32>, vector<12x4xf32>, vector<256x4xf32> -> vector<256x4xf32>
    %c0_48 = arith.constant 0 : index
    %c0_49 = arith.constant 0 : index
    %59 = vector.load %arg8[%c0_48, %c0_49] : memref<1x4xf32, #tpu.memory_space<vmem>>, vector<1x4xf32>
    %60 = vector.broadcast %59 : vector<1x4xf32> to vector<256x4xf32>
    %61 = arith.addf %58, %60 : vector<256x4xf32>
    %62 = vector.shape_cast %61 : vector<256x4xf32> to vector<16x16x4xf32>
    %63 = tpu.iota {dimensions = array<i32: 1>} : vector<1x16x1xi32>
    %c0_i32_50 = arith.constant 0 : i32
    %64 = vector.broadcast %c0_i32_50 : i32 to vector<1x16x1xi32>
    %65 = arith.cmpi sgt, %63, %64 : vector<1x16x1xi32>
    %c1_i32_51 = arith.constant 1 : i32
    %66 = tpu.dynamic_rotate %62 by %c1_i32_51 dim 1 : vector<16x16x4xf32>, i32 -> vector<16x16x4xf32>
    %cst_52 = arith.constant 0.000000e+00 : f32
    %67 = vector.shape_cast %65 : vector<1x16x1xi1> to vector<1x16x1xi1>
    %68 = vector.broadcast %67 : vector<1x16x1xi1> to vector<16x16x4xi1>
    %69 = vector.broadcast %cst_52 : f32 to vector<16x16x4xf32>
    %70 = arith.select %68, %66, %69 : vector<16x16x4xi1>, vector<16x16x4xf32>
    %c15_i32_53 = arith.constant 15 : i32
    %71 = vector.broadcast %c15_i32_53 : i32 to vector<1x16x1xi32>
    %72 = arith.cmpi slt, %63, %71 : vector<1x16x1xi32>
    %c15_i32_54 = arith.constant 15 : i32
    %73 = tpu.dynamic_rotate %62 by %c15_i32_54 dim 1 : vector<16x16x4xf32>, i32 -> vector<16x16x4xf32>
    %cst_55 = arith.constant 0.000000e+00 : f32
    %74 = vector.shape_cast %72 : vector<1x16x1xi1> to vector<1x16x1xi1>
    %75 = vector.broadcast %74 : vector<1x16x1xi1> to vector<16x16x4xi1>
    %76 = vector.broadcast %cst_55 : f32 to vector<16x16x4xf32>
    %77 = arith.select %75, %73, %76 : vector<16x16x4xi1>, vector<16x16x4xf32>
    %78 = tpu.concatenate %70, %62, %77 in 2 : vector<16x16x4xf32>, vector<16x16x4xf32>, vector<16x16x4xf32> -> vector<16x16x12xf32>
    %79 = vector.shape_cast %78 : vector<16x16x12xf32> to vector<1x16x16x12xf32>
    %cst_56 = arith.constant 0.000000e+00 : f32
    %80 = vector.broadcast %cst_56 : f32 to vector<1x1x16x12xf32>
    %81 = tpu.concatenate %80, %79, %80 in 1 : vector<1x1x16x12xf32>, vector<1x16x16x12xf32>, vector<1x1x16x12xf32> -> vector<1x18x16x12xf32>
    %c0_57 = arith.constant 0 : index
    %c0_58 = arith.constant 0 : index
    %c0_59 = arith.constant 0 : index
    %c0_60 = arith.constant 0 : index
    %82 = vector.load %arg13[%c0_57, %c0_58, %c0_59, %c0_60] : memref<1x18x16x12xf32, #tpu.memory_space<vmem>>, vector<1x18x16x12xf32>
    tpu.vector_store %arg13[%c0_57, %c0_58, %c0_59, %c0_60], %81 {strides = array<i32>} : memref<1x18x16x12xf32, #tpu.memory_space<vmem>>, vector<1x18x16x12xf32>,
    %c0_61 = arith.constant 0 : index
    %c0_62 = arith.constant 0 : index
    %c0_63 = arith.constant 0 : index
    %c0_64 = arith.constant 0 : index
    %83 = vector.load %arg13[%c0_61, %c0_62, %c0_63, %c0_64] : memref<1x18x16x12xf32, #tpu.memory_space<vmem>>, vector<1x16x16x12xf32>
    %84 = vector.shape_cast %83 : vector<1x16x16x12xf32> to vector<256x12xf32>
    %c0_65 = arith.constant 0 : index
    %c0_66 = arith.constant 0 : index
    %c0_67 = arith.constant 0 : index
    %85 = vector.load %arg9[%c0_65, %c0_66, %c0_67] : memref<3x12x4xf32, #tpu.memory_space<vmem>>, vector<1x12x4xf32>
    %86 = vector.shape_cast %85 : vector<1x12x4xf32> to vector<12x4xf32>
    %cst_68 = arith.constant dense<0.000000e+00> : vector<256x4xf32>
    %87 = tpu.matmul %84, %86, %cst_68 {dimension_numbers = #tpu.dot_dimension_numbers<[1], [0], [0], [1], [0, 0, 1, 1], [], []>} : vector<256x12xf32>, vector<12x4xf32>, vector<256x4xf32> -> vector<256x4xf32>
    %c0_69 = arith.constant 0 : index
    %c0_70 = arith.constant 0 : index
    %88 = vector.load %arg10[%c0_69, %c0_70] : memref<1x4xf32, #tpu.memory_space<vmem>>, vector<1x4xf32>
    %89 = vector.broadcast %88 : vector<1x4xf32> to vector<256x4xf32>
    %90 = arith.addf %87, %89 : vector<256x4xf32>
    %c0_71 = arith.constant 0 : index
    %c1_72 = arith.constant 1 : index
    %c0_73 = arith.constant 0 : index
    %c0_74 = arith.constant 0 : index
    %91 = vector.load %arg13[%c0_71, %c1_72, %c0_73, %c0_74] : memref<1x18x16x12xf32, #tpu.memory_space<vmem>>, vector<1x16x16x12xf32>
    %92 = vector.shape_cast %91 : vector<1x16x16x12xf32> to vector<256x12xf32>
    %c1_75 = arith.constant 1 : index
    %c0_76 = arith.constant 0 : index
    %c0_77 = arith.constant 0 : index
    %93 = vector.load %arg9[%c1_75, %c0_76, %c0_77] : memref<3x12x4xf32, #tpu.memory_space<vmem>>, vector<1x12x4xf32>
    %94 = vector.shape_cast %93 : vector<1x12x4xf32> to vector<12x4xf32>
    %cst_78 = arith.constant dense<0.000000e+00> : vector<256x4xf32>
    %95 = tpu.matmul %92, %94, %cst_78 {dimension_numbers = #tpu.dot_dimension_numbers<[1], [0], [0], [1], [0, 0, 1, 1], [], []>} : vector<256x12xf32>, vector<12x4xf32>, vector<256x4xf32> -> vector<256x4xf32>
    %96 = arith.addf %90, %95 : vector<256x4xf32>
    %c0_79 = arith.constant 0 : index
    %c2_80 = arith.constant 2 : index
    %c0_81 = arith.constant 0 : index
    %c0_82 = arith.constant 0 : index
    %97 = vector.load %arg13[%c0_79, %c2_80, %c0_81, %c0_82] : memref<1x18x16x12xf32, #tpu.memory_space<vmem>>, vector<1x16x16x12xf32>
    %98 = vector.shape_cast %97 : vector<1x16x16x12xf32> to vector<256x12xf32>
    %c2_83 = arith.constant 2 : index
    %c0_84 = arith.constant 0 : index
    %c0_85 = arith.constant 0 : index
    %99 = vector.load %arg9[%c2_83, %c0_84, %c0_85] : memref<3x12x4xf32, #tpu.memory_space<vmem>>, vector<1x12x4xf32>
    %100 = vector.shape_cast %99 : vector<1x12x4xf32> to vector<12x4xf32>
    %cst_86 = arith.constant dense<0.000000e+00> : vector<256x4xf32>
    %101 = tpu.matmul %98, %100, %cst_86 {dimension_numbers = #tpu.dot_dimension_numbers<[1], [0], [0], [1], [0, 0, 1, 1], [], []>} : vector<256x12xf32>, vector<12x4xf32>, vector<256x4xf32> -> vector<256x4xf32>
    %102 = arith.addf %96, %101 : vector<256x4xf32>
    %cst_87 = arith.constant 0.000000e+00 : f32
    %103 = vector.broadcast %cst_87 : f32 to vector<256x4xf32>
    %104 = arith.cmpf ogt, %102, %103 : vector<256x4xf32>
    %cst_88 = arith.constant 0.00999999977 : f32
    %105 = vector.broadcast %cst_88 : f32 to vector<256x4xf32>
    %106 = arith.mulf %105, %102 : vector<256x4xf32>
    %107 = arith.select %104, %102, %106 : vector<256x4xi1>, vector<256x4xf32>
    %108 = vector.shape_cast %107 : vector<256x4xf32> to vector<1x16x16x4xf32>
    %c0_89 = arith.constant 0 : index
    %c0_90 = arith.constant 0 : index
    %c0_91 = arith.constant 0 : index
    %c0_92 = arith.constant 0 : index
    %109 = vector.load %arg11[%c0_89, %c0_90, %c0_91, %c0_92] : memref<1x16x16x4xf32, #tpu.memory_space<vmem>>, vector<1x16x16x4xf32>
    tpu.vector_store %arg11[%c0_89, %c0_90, %c0_91, %c0_92], %108 {strides = array<i32>} : memref<1x16x16x4xf32, #tpu.memory_space<vmem>>, vector<1x16x16x4xf32>,
    return
  }
  func.func @transform_0(%arg0: i32) -> (i32, i32, i32, i32) {
    %c0_i32 = arith.constant 0 : i32
    %c0_i32_0 = arith.constant 0 : i32
    %c0_i32_1 = arith.constant 0 : i32
    %c0_i32_2 = arith.constant 0 : i32
    return %arg0, %c0_i32, %c0_i32_0, %c0_i32_1 : i32, i32, i32, i32
  }
  func.func @transform_1(%arg0: i32) -> (i32, i32, i32, i32) {
    %c0_i32 = arith.constant 0 : i32
    %c0_i32_0 = arith.constant 0 : i32
    %c0_i32_1 = arith.constant 0 : i32
    %c0_i32_2 = arith.constant 0 : i32
    return %arg0, %c0_i32, %c0_i32_0, %c0_i32_1 : i32, i32, i32, i32
  }
  func.func @transform_2(%arg0: i32) -> (i32, i32) {
    %c0_i32 = arith.constant 0 : i32
    %c0_i32_0 = arith.constant 0 : i32
    %c0_i32_1 = arith.constant 0 : i32
    return %c0_i32, %c0_i32_0 : i32, i32
  }
  func.func @transform_3(%arg0: i32) -> (i32, i32) {
    %c0_i32 = arith.constant 0 : i32
    %c0_i32_0 = arith.constant 0 : i32
    %c0_i32_1 = arith.constant 0 : i32
    return %c0_i32, %c0_i32_0 : i32, i32
  }
  func.func @transform_4(%arg0: i32) -> (i32, i32, i32) {
    %c0_i32 = arith.constant 0 : i32
    %c0_i32_0 = arith.constant 0 : i32
    %c0_i32_1 = arith.constant 0 : i32
    %c0_i32_2 = arith.constant 0 : i32
    return %c0_i32, %c0_i32_0, %c0_i32_1 : i32, i32, i32
  }
  func.func @transform_5(%arg0: i32) -> (i32, i32) {
    %c0_i32 = arith.constant 0 : i32
    %c0_i32_0 = arith.constant 0 : i32
    %c0_i32_1 = arith.constant 0 : i32
    return %c0_i32, %c0_i32_0 : i32, i32
  }
  func.func @transform_6(%arg0: i32) -> (i32, i32) {
    %c0_i32 = arith.constant 0 : i32
    %c0_i32_0 = arith.constant 0 : i32
    %c0_i32_1 = arith.constant 0 : i32
    return %c0_i32, %c0_i32_0 : i32, i32
  }
  func.func @transform_7(%arg0: i32) -> (i32, i32) {
    %c0_i32 = arith.constant 0 : i32
    %c0_i32_0 = arith.constant 0 : i32
    %c0_i32_1 = arith.constant 0 : i32
    return %c0_i32, %c0_i32_0 : i32, i32
  }
  func.func @transform_8(%arg0: i32) -> (i32, i32, i32) {
    %c0_i32 = arith.constant 0 : i32
    %c0_i32_0 = arith.constant 0 : i32
    %c0_i32_1 = arith.constant 0 : i32
    %c0_i32_2 = arith.constant 0 : i32
    return %c0_i32, %c0_i32_0, %c0_i32_1 : i32, i32, i32
  }
  func.func @transform_9(%arg0: i32) -> (i32, i32) {
    %c0_i32 = arith.constant 0 : i32
    %c0_i32_0 = arith.constant 0 : i32
    %c0_i32_1 = arith.constant 0 : i32
    return %c0_i32, %c0_i32_0 : i32, i32
  }
  func.func @transform_10(%arg0: i32) -> (i32, i32, i32, i32) {
    %c0_i32 = arith.constant 0 : i32
    %c0_i32_0 = arith.constant 0 : i32
    %c0_i32_1 = arith.constant 0 : i32
    %c0_i32_2 = arith.constant 0 : i32
    return %arg0, %c0_i32, %c0_i32_0, %c0_i32_1 : i32, i32, i32, i32
  }
}

</mosaic_0001>

<llo_original>
// kernel: tpu_custom_call.1
$region0: #{tpu_custom_call.1}
  #allocation0 [shape = 'u32[]', space=smem, size = 0x4, offset = 0x4, fixed_abs, tag = 'smem constant byte address 0x4 - core index']
  #allocation1 [shape = 'u32[144,128]{1,0:T(1,128)}', space=vmem, size = 0x12000, scoped, tag = 'internal scratch']
  #allocation2 [shape = 'f32[1,18,16,12]{3,2,1,0:T(8,128)}', space=vmem, size = 0x24000, scoped, tag = 'scratch operand']
  #allocation3 [shape = 'f32[1,18,16,12]{3,2,1,0:T(8,128)}', space=vmem, size = 0x24000, scoped, tag = 'scratch operand']
  %s0 = inlined_call_operand.hbm [shape: f32[2,16,16,4], index: 0, kind: input, shape index: {}]
  %s1 = inlined_call_operand.hbm [shape: f32[2,16,16,4], index: 1, kind: input, shape index: {}]
  %s2 = inlined_call_operand.hbm [shape: f32[8,4], index: 2, kind: input, shape index: {}]
  %s3 = inlined_call_operand.hbm [shape: f32[1,4], index: 3, kind: input, shape index: {}]
  %s4 = inlined_call_operand.hbm [shape: f32[3,12,4], index: 4, kind: input, shape index: {}]
  %s5 = inlined_call_operand.hbm [shape: f32[1,4], index: 5, kind: input, shape index: {}]
  %s6 = inlined_call_operand.hbm [shape: f32[12,4], index: 6, kind: input, shape index: {}]
  %s7 = inlined_call_operand.hbm [shape: f32[1,4], index: 7, kind: input, shape index: {}]
  %s8 = inlined_call_operand.hbm [shape: f32[3,12,4], index: 8, kind: input, shape index: {}]
  %s9 = inlined_call_operand.hbm [shape: f32[1,4], index: 9, kind: input, shape index: {}]
  %s10 = inlined_call_operand.hbm [shape: f32[2,16,16,4], index: 10, kind: output, shape index: {}]
  %s11 = sld [smem:[#allocation0]]
  $region113: #{tpu_custom_call.1} parent=0
    _
  %s13 = ssub.s32 1, %s11
  %s14 = scalar_select 0, %s13, %s11
  $region1: #{tpu_custom_call.1} parent=0
    #allocation4 [shape = 'u8[262144]{0}', space=vmem, size = 0x40000, scoped, tag = 'input window, operand 0']
    #allocation5 [shape = 's32[2]{0}', space=sflag, size = 0x8, scoped, tag = 'scoped memory for tpu_custom_call.1']
    #allocation6 [shape = 's32[2]{0}', space=sflag, size = 0x8, scoped, tag = 'scoped memory for tpu_custom_call.1']
    #allocation7 [shape = 'u8[262144]{0}', space=vmem, size = 0x40000, scoped, tag = 'input window, operand 1']
    #allocation8 [shape = 's32[2]{0}', space=sflag, size = 0x8, scoped, tag = 'scoped memory for tpu_custom_call.1']
    #allocation9 [shape = 'u8[4096]{0}', space=vmem, size = 0x1000, scoped, tag = 'input window, operand 2, single buffered']
    #allocation10 [shape = 'u8[512]{0}', space=vmem, size = 0x400, scoped, tag = 'input window, operand 3, single buffered']
    #allocation11 [shape = 's32[1]{0}', space=sflag, size = 0x4, scoped, tag = 'scoped memory for tpu_custom_call.1']
    #allocation12 [shape = 'u8[24576]{0}', space=vmem, size = 0x6000, scoped, tag = 'input window, operand 4, single buffered']
    #allocation13 [shape = 'u8[512]{0}', space=vmem, size = 0x400, scoped, tag = 'input window, operand 5, single buffered']
    #allocation14 [shape = 's32[1]{0}', space=sflag, size = 0x4, scoped, tag = 'scoped memory for tpu_custom_call.1']
    #allocation15 [shape = 'u8[8192]{0}', space=vmem, size = 0x2000, scoped, tag = 'input window, operand 6, single buffered']
    #allocation16 [shape = 'u8[512]{0}', space=vmem, size = 0x400, scoped, tag = 'input window, operand 7, single buffered']
    #allocation17 [shape = 's32[1]{0}', space=sflag, size = 0x4, scoped, tag = 'scoped memory for tpu_custom_call.1']
    #allocation18 [shape = 'u8[24576]{0}', space=vmem, size = 0x6000, scoped, tag = 'input window, operand 8, single buffered']
    #allocation19 [shape = 'u8[512]{0}', space=vmem, size = 0x400, scoped, tag = 'input window, operand 9, single buffered']
    #allocation20 [shape = 's32[1]{0}', space=sflag, size = 0x4, scoped, tag = 'scoped memory for tpu_custom_call.1']
    #allocation21 [shape = 'u8[262144]{0}', space=vmem, size = 0x40000, scoped, tag = 'output window, operand 0']
    %15 = vsyncpa [#allocation5], 0
    %s16 = scalar_lea.sflag [#allocation5], 1
    %17 = vsyncpa %s16, 0
    %18 = vsyncpa [#allocation8], 0
    %s19 = scalar_lea.sflag [#allocation8], 1
    %20 = vsyncpa %s19, 0
    %21 = vsyncpa [#allocation11], 0
    %22 = vsyncpa [#allocation14], 0
    %23 = vsyncpa [#allocation17], 0
    %24 = vsyncpa [#allocation20], 0
    %25 = vsyncpa [#allocation6], 0
    %s26 = scalar_lea.sflag [#allocation6], 1
    %27 = vsyncpa %s26, 0
    loop: start=0, step=1, limit=4
    $region2: #{tpu_custom_call.1} parent=1 // loop_pre_header
      _
    $region3: #{tpu_custom_call.1} parent=1 // loop_header
      %s29 = sphi 0, %s33
      %p30 = scmp.ge.s32.totalorder %s29, 4
      %s39 = sphi 0, %s41
      %s42 = sphi 0, %s39
      %s43 = sphi 0, %s42
      %s59 = sphi 0, %s43
      %s65 = sphi 0, %s67
      %s68 = sphi 0, %s65
      %s69 = sphi 0, %s68
      %s85 = sphi 0, %s69
      %s89 = sphi 0, %s89
      %s91 = sphi 0, %s89
      %s92 = sphi 0, %s91
      %s106 = sphi 0, %s92
      %s110 = sphi 0, %s110
      %s112 = sphi 0, %s110
      %s113 = sphi 0, %s112
      %s127 = sphi 0, %s113
      %s131 = sphi 0, %s131
      %s133 = sphi 0, %s131
      %s134 = sphi 0, %s133
      %s148 = sphi 0, %s134
      %s152 = sphi 0, %s152
      %s154 = sphi 0, %s152
      %s155 = sphi 0, %s154
      %s169 = sphi 0, %s155
      %s173 = sphi 0, %s173
      %s175 = sphi 0, %s173
      %s176 = sphi 0, %s175
      %s190 = sphi 0, %s176
      %s194 = sphi 0, %s194
      %s196 = sphi 0, %s194
      %s197 = sphi 0, %s196
      %s211 = sphi 0, %s197
      %s215 = sphi 0, %s215
      %s217 = sphi 0, %s215
      %s218 = sphi 0, %s217
      %s232 = sphi 0, %s218
      %s236 = sphi 0, %s236
      %s238 = sphi 0, %s236
      %s239 = sphi 0, %s238
      %s253 = sphi 0, %s239
      %s259 = sphi 0, %s261
      %s262 = sphi 0, %s259
      %s263 = sphi 0, %s262
      %s279 = sphi 0, %s263
    $region4: #{tpu_custom_call.1} parent=1 // loop_header_branch
      %32 = sbr.rel (%p30) target = $region8
    $region5: #{tpu_custom_call.1} parent=1 // loop_body
      %s34 = ssub.s32 %s29, 1
      %s35 = ssub.s32 %s29, 2
      %s36 = sadd.s32 %s29, 1
      %s37 = ssub.s32 %s29, %s36
      %p38 = scmp.eq.s32.totalorder %s37, 0
      %s40 = sadd.s32 %s39, 1
      %s41 = scalar_select %p38, %s39, %s40
      %p44 = pneg %p38
      %p45 = scmp.eq.s32.totalorder %s29, 1
      %p46 = por %p44, %p45
      %p47 = scmp.ne.s32.totalorder %s39, %s42
      %p48 = scmp.eq.s32.totalorder %s29, 0
      %p49 = por %p47, %p48
      %p50 = scmp.ne.s32.totalorder %s39, %s42
      %p51 = scmp.eq.s32.totalorder %s34, 1
      %p52 = por %p50, %p51
      %p53 = scmp.ne.s32.totalorder %s42, %s43
      %p54 = scmp.eq.s32.totalorder %s34, 0
      %p55 = por %p53, %p54
      %p56 = scmp.ne.s32.totalorder %s42, %s43
      %p57 = scmp.eq.s32.totalorder %s35, 1
      %p58 = por %p56, %p57
      %p60 = scmp.ne.s32.totalorder %s43, %s59
      %p61 = scmp.eq.s32.totalorder %s35, 0
      %p62 = por %p60, %p61
      %s63 = ssub.s32 %s29, %s36
      %p64 = scmp.eq.s32.totalorder %s63, 0
      %s66 = sadd.s32 %s65, 1
      %s67 = scalar_select %p64, %s65, %s66
      %p70 = pneg %p64
      %p71 = scmp.eq.s32.totalorder %s29, 1
      %p72 = por %p70, %p71
      %p73 = scmp.ne.s32.totalorder %s65, %s68
      %p74 = scmp.eq.s32.totalorder %s29, 0
      %p75 = por %p73, %p74
      %p76 = scmp.ne.s32.totalorder %s65, %s68
      %p77 = scmp.eq.s32.totalorder %s34, 1
      %p78 = por %p76, %p77
      %p79 = scmp.ne.s32.totalorder %s68, %s69
      %p80 = scmp.eq.s32.totalorder %s34, 0
      %p81 = por %p79, %p80
      %p82 = scmp.ne.s32.totalorder %s68, %s69
      %p83 = scmp.eq.s32.totalorder %s35, 1
      %p84 = por %p82, %p83
      %p86 = scmp.ne.s32.totalorder %s69, %s85
      %p87 = scmp.eq.s32.totalorder %s35, 0
      %p88 = por %p86, %p87
      %s90 = sadd.s32 %s89, 1
      %p93 = scmp.eq.s32.totalorder %s29, 1
      %p94 = scmp.ne.s32.totalorder %s89, %s91
      %p95 = scmp.eq.s32.totalorder %s29, 0
      %p96 = por %p94, %p95
      %p97 = scmp.ne.s32.totalorder %s89, %s91
      %p98 = scmp.eq.s32.totalorder %s34, 1
      %p99 = por %p97, %p98
      %p100 = scmp.ne.s32.totalorder %s91, %s92
      %p101 = scmp.eq.s32.totalorder %s34, 0
      %p102 = por %p100, %p101
      %p103 = scmp.ne.s32.totalorder %s91, %s92
      %p104 = scmp.eq.s32.totalorder %s35, 1
      %p105 = por %p103, %p104
      %p107 = scmp.ne.s32.totalorder %s92, %s106
      %p108 = scmp.eq.s32.totalorder %s35, 0
      %p109 = por %p107, %p108
      %s111 = sadd.s32 %s110, 1
      %p114 = scmp.eq.s32.totalorder %s29, 1
      %p115 = scmp.ne.s32.totalorder %s110, %s112
      %p116 = scmp.eq.s32.totalorder %s29, 0
      %p117 = por %p115, %p116
      %p118 = scmp.ne.s32.totalorder %s110, %s112
      %p119 = scmp.eq.s32.totalorder %s34, 1
      %p120 = por %p118, %p119
      %p121 = scmp.ne.s32.totalorder %s112, %s113
      %p122 = scmp.eq.s32.totalorder %s34, 0
      %p123 = por %p121, %p122
      %p124 = scmp.ne.s32.totalorder %s112, %s113
      %p125 = scmp.eq.s32.totalorder %s35, 1
      %p126 = por %p124, %p125
      %p128 = scmp.ne.s32.totalorder %s113, %s127
      %p129 = scmp.eq.s32.totalorder %s35, 0
      %p130 = por %p128, %p129
      %s132 = sadd.s32 %s131, 1
      %p135 = scmp.eq.s32.totalorder %s29, 1
      %p136 = scmp.ne.s32.totalorder %s131, %s133
      %p137 = scmp.eq.s32.totalorder %s29, 0
      %p138 = por %p136, %p137
      %p139 = scmp.ne.s32.totalorder %s131, %s133
      %p140 = scmp.eq.s32.totalorder %s34, 1
      %p141 = por %p139, %p140
      %p142 = scmp.ne.s32.totalorder %s133, %s134
      %p143 = scmp.eq.s32.totalorder %s34, 0
      %p144 = por %p142, %p143
      %p145 = scmp.ne.s32.totalorder %s133, %s134
      %p146 = scmp.eq.s32.totalorder %s35, 1
      %p147 = por %p145, %p146
      %p149 = scmp.ne.s32.totalorder %s134, %s148
      %p150 = scmp.eq.s32.totalorder %s35, 0
      %p151 = por %p149, %p150
      %s153 = sadd.s32 %s152, 1
      %p156 = scmp.eq.s32.totalorder %s29, 1
      %p157 = scmp.ne.s32.totalorder %s152, %s154
      %p158 = scmp.eq.s32.totalorder %s29, 0
      %p159 = por %p157, %p158
      %p160 = scmp.ne.s32.totalorder %s152, %s154
      %p161 = scmp.eq.s32.totalorder %s34, 1
      %p162 = por %p160, %p161
      %p163 = scmp.ne.s32.totalorder %s154, %s155
      %p164 = scmp.eq.s32.totalorder %s34, 0
      %p165 = por %p163, %p164
      %p166 = scmp.ne.s32.totalorder %s154, %s155
      %p167 = scmp.eq.s32.totalorder %s35, 1
      %p168 = por %p166, %p167
      %p170 = scmp.ne.s32.totalorder %s155, %s169
      %p171 = scmp.eq.s32.totalorder %s35, 0
      %p172 = por %p170, %p171
      %s174 = sadd.s32 %s173, 1
      %p177 = scmp.eq.s32.totalorder %s29, 1
      %p178 = scmp.ne.s32.totalorder %s173, %s175
      %p179 = scmp.eq.s32.totalorder %s29, 0
      %p180 = por %p178, %p179
      %p181 = scmp.ne.s32.totalorder %s173, %s175
      %p182 = scmp.eq.s32.totalorder %s34, 1
      %p183 = por %p181, %p182
      %p184 = scmp.ne.s32.totalorder %s175, %s176
      %p185 = scmp.eq.s32.totalorder %s34, 0
      %p186 = por %p184, %p185
      %p187 = scmp.ne.s32.totalorder %s175, %s176
      %p188 = scmp.eq.s32.totalorder %s35, 1
      %p189 = por %p187, %p188
      %p191 = scmp.ne.s32.totalorder %s176, %s190
      %p192 = scmp.eq.s32.totalorder %s35, 0
      %p193 = por %p191, %p192
      %s195 = sadd.s32 %s194, 1
      %p198 = scmp.eq.s32.totalorder %s29, 1
      %p199 = scmp.ne.s32.totalorder %s194, %s196
      %p200 = scmp.eq.s32.totalorder %s29, 0
      %p201 = por %p199, %p200
      %p202 = scmp.ne.s32.totalorder %s194, %s196
      %p203 = scmp.eq.s32.totalorder %s34, 1
      %p204 = por %p202, %p203
      %p205 = scmp.ne.s32.totalorder %s196, %s197
      %p206 = scmp.eq.s32.totalorder %s34, 0
      %p207 = por %p205, %p206
      %p208 = scmp.ne.s32.totalorder %s196, %s197
      %p209 = scmp.eq.s32.totalorder %s35, 1
      %p210 = por %p208, %p209
      %p212 = scmp.ne.s32.totalorder %s197, %s211
      %p213 = scmp.eq.s32.totalorder %s35, 0
      %p214 = por %p212, %p213
      %s216 = sadd.s32 %s215, 1
      %p219 = scmp.eq.s32.totalorder %s29, 1
      %p220 = scmp.ne.s32.totalorder %s215, %s217
      %p221 = scmp.eq.s32.totalorder %s29, 0
      %p222 = por %p220, %p221
      %p223 = scmp.ne.s32.totalorder %s215, %s217
      %p224 = scmp.eq.s32.totalorder %s34, 1
      %p225 = por %p223, %p224
      %p226 = scmp.ne.s32.totalorder %s217, %s218
      %p227 = scmp.eq.s32.totalorder %s34, 0
      %p228 = por %p226, %p227
      %p229 = scmp.ne.s32.totalorder %s217, %s218
      %p230 = scmp.eq.s32.totalorder %s35, 1
      %p231 = por %p229, %p230
      %p233 = scmp.ne.s32.totalorder %s218, %s232
      %p234 = scmp.eq.s32.totalorder %s35, 0
      %p235 = por %p233, %p234
      %s237 = sadd.s32 %s236, 1
      %p240 = scmp.eq.s32.totalorder %s29, 1
      %p241 = scmp.ne.s32.totalorder %s236, %s238
      %p242 = scmp.eq.s32.totalorder %s29, 0
      %p243 = por %p241, %p242
      %p244 = scmp.ne.s32.totalorder %s236, %s238
      %p245 = scmp.eq.s32.totalorder %s34, 1
      %p246 = por %p244, %p245
      %p247 = scmp.ne.s32.totalorder %s238, %s239
      %p248 = scmp.eq.s32.totalorder %s34, 0
      %p249 = por %p247, %p248
      %p250 = scmp.ne.s32.totalorder %s238, %s239
      %p251 = scmp.eq.s32.totalorder %s35, 1
      %p252 = por %p250, %p251
      %p254 = scmp.ne.s32.totalorder %s239, %s253
      %p255 = scmp.eq.s32.totalorder %s35, 0
      %p256 = por %p254, %p255
      %s257 = ssub.s32 %s29, %s36
      %p258 = scmp.eq.s32.totalorder %s257, 0
      %s260 = sadd.s32 %s259, 1
      %s261 = scalar_select %p258, %s259, %s260
      %p264 = pneg %p258
      %p265 = scmp.eq.s32.totalorder %s29, 1
      %p266 = por %p264, %p265
      %p267 = scmp.ne.s32.totalorder %s259, %s262
      %p268 = scmp.eq.s32.totalorder %s29, 0
      %p269 = por %p267, %p268
      %p270 = scmp.ne.s32.totalorder %s259, %s262
      %p271 = scmp.eq.s32.totalorder %s34, 1
      %p272 = por %p270, %p271
      %p273 = scmp.ne.s32.totalorder %s262, %s263
      %p274 = scmp.eq.s32.totalorder %s34, 0
      %p275 = por %p273, %p274
      %p276 = scmp.ne.s32.totalorder %s262, %s263
      %p277 = scmp.eq.s32.totalorder %s35, 1
      %p278 = por %p276, %p277
      %p280 = scmp.ne.s32.totalorder %s263, %s279
      %p281 = scmp.eq.s32.totalorder %s35, 0
      %p282 = por %p280, %p281
      %p283 = scmp.le.s32.totalorder 1, %s29
      %p284 = scmp.lt.s32.totalorder %s29, 3
      %p285 = pnand %p283, %p284
      %p286 = pneg %p285
      // Predicated region
      $region9: #{tpu_custom_call.1} parent=5 // pred_check
        _
      $region10: #{tpu_custom_call.1} parent=5 // pred_check_branch
        %288 = sbr.rel (%p285) target = $region12
      $region11: #{tpu_custom_call.1} parent=5 // pred_region
        %s289 = ssub.s32 %s29, 1
        // Predicated region
        $region13: #{tpu_custom_call.1} parent=11 // pred_check
          %p290 = pneg %p102
        $region14: #{tpu_custom_call.1} parent=11 // pred_check_branch
          %292 = sbr.rel (%p290) target = $region16
        $region15: #{tpu_custom_call.1} parent=11 // pred_region
          %s294 = ssub.s32 128, 128
          %295 = vsyncadd [#allocation8], %s294
          %s297 = sshll.u32 [#allocation9], 4
          %s298 = int_to_ptr.vmem [resolvable:$true] %s297
          %300 = dma.hbm_to_vmem [thread:$0]  %s2, 128, %s298, [#allocation8]
        $region16: #{tpu_custom_call.1} parent=11 // pred_fallthru
          _
        // Predicated region
        $region17: #{tpu_custom_call.1} parent=11 // pred_check
          %p301 = pneg %p123
        $region18: #{tpu_custom_call.1} parent=11 // pred_check_branch
          %303 = sbr.rel (%p301) target = $region20
        $region19: #{tpu_custom_call.1} parent=11 // pred_region
          %s305 = ssub.s32 16, 16
          %306 = vsyncadd [#allocation11], %s305
          %s308 = sshll.u32 [#allocation10], 4
          %s309 = int_to_ptr.vmem [resolvable:$true] %s308
          %311 = dma.hbm_to_vmem [thread:$0]  %s3, 16, %s309, [#allocation11]
        $region20: #{tpu_custom_call.1} parent=11 // pred_fallthru
          _
        // Predicated region
        $region21: #{tpu_custom_call.1} parent=11 // pred_check
          %p312 = pneg %p144
        $region22: #{tpu_custom_call.1} parent=11 // pred_check_branch
          %314 = sbr.rel (%p312) target = $region24
        $region23: #{tpu_custom_call.1} parent=11 // pred_region
          %s316 = ssub.s32 768, 768
          %317 = vsyncadd [#allocation11], %s316
          %s318 = sshll.u32 [#allocation12], 4
          %s319 = int_to_ptr.vmem [resolvable:$true] %s318
          %324 = dma.hbm_to_vmem [thread:$0]  %s4, 768, %s319, [#allocation11], 128, 128, 8
        $region24: #{tpu_custom_call.1} parent=11 // pred_fallthru
          _
        // Predicated region
        $region25: #{tpu_custom_call.1} parent=11 // pred_check
          %p325 = pneg %p165
        $region26: #{tpu_custom_call.1} parent=11 // pred_check_branch
          %327 = sbr.rel (%p325) target = $region28
        $region27: #{tpu_custom_call.1} parent=11 // pred_region
          %s329 = ssub.s32 16, 16
          %330 = vsyncadd [#allocation14], %s329
          %s332 = sshll.u32 [#allocation13], 4
          %s333 = int_to_ptr.vmem [resolvable:$true] %s332
          %335 = dma.hbm_to_vmem [thread:$0]  %s5, 16, %s333, [#allocation14]
        $region28: #{tpu_custom_call.1} parent=11 // pred_fallthru
          _
        // Predicated region
        $region29: #{tpu_custom_call.1} parent=11 // pred_check
          %p336 = pneg %p186
        $region30: #{tpu_custom_call.1} parent=11 // pred_check_branch
          %338 = sbr.rel (%p336) target = $region32
        $region31: #{tpu_custom_call.1} parent=11 // pred_region
          %s340 = ssub.s32 256, 256
          %341 = vsyncadd [#allocation14], %s340
          %s342 = sshll.u32 [#allocation15], 4
          %s343 = int_to_ptr.vmem [resolvable:$true] %s342
          %348 = dma.hbm_to_vmem [thread:$0]  %s6, 256, %s343, [#allocation14], 128, 128, 8
        $region32: #{tpu_custom_call.1} parent=11 // pred_fallthru
          _
        // Predicated region
        $region33: #{tpu_custom_call.1} parent=11 // pred_check
          %p349 = pneg %p207
        $region34: #{tpu_custom_call.1} parent=11 // pred_check_branch
          %351 = sbr.rel (%p349) target = $region36
        $region35: #{tpu_custom_call.1} parent=11 // pred_region
          %s353 = ssub.s32 16, 16
          %354 = vsyncadd [#allocation17], %s353
          %s356 = sshll.u32 [#allocation16], 4
          %s357 = int_to_ptr.vmem [resolvable:$true] %s356
          %359 = dma.hbm_to_vmem [thread:$0]  %s7, 16, %s357, [#allocation17]
        $region36: #{tpu_custom_call.1} parent=11 // pred_fallthru
          _
        // Predicated region
        $region37: #{tpu_custom_call.1} parent=11 // pred_check
          %p360 = pneg %p228
        $region38: #{tpu_custom_call.1} parent=11 // pred_check_branch
          %362 = sbr.rel (%p360) target = $region40
        $region39: #{tpu_custom_call.1} parent=11 // pred_region
          %s364 = ssub.s32 768, 768
          %365 = vsyncadd [#allocation17], %s364
          %s366 = sshll.u32 [#allocation18], 4
          %s367 = int_to_ptr.vmem [resolvable:$true] %s366
          %372 = dma.hbm_to_vmem [thread:$0]  %s8, 768, %s367, [#allocation17], 128, 128, 8
        $region40: #{tpu_custom_call.1} parent=11 // pred_fallthru
          _
        // Predicated region
        $region41: #{tpu_custom_call.1} parent=11 // pred_check
          %p373 = pneg %p249
        $region42: #{tpu_custom_call.1} parent=11 // pred_check_branch
          %375 = sbr.rel (%p373) target = $region44
        $region43: #{tpu_custom_call.1} parent=11 // pred_region
          %s377 = ssub.s32 16, 16
          %378 = vsyncadd [#allocation20], %s377
          %s380 = sshll.u32 [#allocation19], 4
          %s381 = int_to_ptr.vmem [resolvable:$true] %s380
          %383 = dma.hbm_to_vmem [thread:$0]  %s9, 16, %s381, [#allocation20]
        $region44: #{tpu_custom_call.1} parent=11 // pred_fallthru
          _
      $region12: #{tpu_custom_call.1} parent=5 // pred_fallthru
        _
      %p384 = scmp.lt.s32.totalorder %s29, 2
      // Predicated region
      $region45: #{tpu_custom_call.1} parent=5 // pred_check
        %p385 = pneg %p384
      $region46: #{tpu_custom_call.1} parent=5 // pred_check_branch
        %387 = sbr.rel (%p385) target = $region48
      $region47: #{tpu_custom_call.1} parent=5 // pred_region
        // Predicated region
        $region49: #{tpu_custom_call.1} parent=47 // pred_check
          %p388 = pneg %p49
        $region50: #{tpu_custom_call.1} parent=47 // pred_check_branch
          %390 = sbr.rel (%p388) target = $region52
        $region51: #{tpu_custom_call.1} parent=47 // pred_region
          %s391 = sand.u32 %s39, 1
          %s392 = scalar_lea.sflag [#allocation5], %s391
          %s393 = sand.u32 %s39, 1
          %s394 = smul.addr %s393, 256
          %s395 = scalar_lea.vmem [#allocation4], %s394
          %s397 = ssub.s32 4096, 4096
          %398 = vsyncadd %s392, %s397
          %s399 = smul.addr %s29, 32
          %s400 = smul.addr %s399, 128
          %s401 = scalar_lea.hbm %s0, %s400
          %s402 = sshll.u32 %s395, 4
          %s403 = int_to_ptr.vmem [resolvable:$true] %s402
          %408 = dma.hbm_to_vmem [thread:$0]  %s401, 4096, %s403, %s392, 128, 128, 8
        $region52: #{tpu_custom_call.1} parent=47 // pred_fallthru
          _
        // Predicated region
        $region53: #{tpu_custom_call.1} parent=47 // pred_check
          %p409 = pneg %p75
        $region54: #{tpu_custom_call.1} parent=47 // pred_check_branch
          %411 = sbr.rel (%p409) target = $region56
        $region55: #{tpu_custom_call.1} parent=47 // pred_region
          %s412 = sand.u32 %s29, 1
          %s413 = scalar_lea.sflag [#allocation8], %s412
          %s414 = sand.u32 %s65, 1
          %s415 = smul.addr %s414, 256
          %s416 = scalar_lea.vmem [#allocation7], %s415
          %s418 = ssub.s32 4096, 4096
          %419 = vsyncadd %s413, %s418
          %s420 = smul.addr %s29, 32
          %s421 = smul.addr %s420, 128
          %s422 = scalar_lea.hbm %s1, %s421
          %s423 = sshll.u32 %s416, 4
          %s424 = int_to_ptr.vmem [resolvable:$true] %s423
          %429 = dma.hbm_to_vmem [thread:$0]  %s422, 4096, %s424, %s413, 128, 128, 8
        $region56: #{tpu_custom_call.1} parent=47 // pred_fallthru
          _
      $region48: #{tpu_custom_call.1} parent=5 // pred_fallthru
        _
      %p430 = scmp.le.s32.totalorder 1, %s29
      %p431 = scmp.lt.s32.totalorder %s29, 3
      %p432 = pnand %p430, %p431
      %p433 = pneg %p432
      // Predicated region
      $region57: #{tpu_custom_call.1} parent=5 // pred_check
        _
      $region58: #{tpu_custom_call.1} parent=5 // pred_check_branch
        %435 = sbr.rel (%p432) target = $region60
      $region59: #{tpu_custom_call.1} parent=5 // pred_region
        %s436 = ssub.s32 %s29, 1
        %s437 = sand.u32 %s42, 1
        %s438 = scalar_lea.sflag [#allocation5], %s437
        %s439 = sand.u32 %s42, 1
        %s440 = smul.addr %s439, 256
        %s441 = scalar_lea.vmem [#allocation4], %s440
        // Predicated region
        $region61: #{tpu_custom_call.1} parent=59 // pred_check
          %p442 = pneg %p55
        $region62: #{tpu_custom_call.1} parent=59 // pred_check_branch
          %444 = sbr.rel (%p442) target = $region64
        $region63: #{tpu_custom_call.1} parent=59 // pred_region
          %445 = dma.done %s438, 4096
        $region64: #{tpu_custom_call.1} parent=59 // pred_fallthru
          _
        %s446 = sand.u32 %s34, 1
        %s447 = scalar_lea.sflag [#allocation8], %s446
        %s448 = sand.u32 %s68, 1
        %s449 = smul.addr %s448, 256
        %s450 = scalar_lea.vmem [#allocation7], %s449
        // Predicated region
        $region65: #{tpu_custom_call.1} parent=59 // pred_check
          %p451 = pneg %p81
        $region66: #{tpu_custom_call.1} parent=59 // pred_check_branch
          %453 = sbr.rel (%p451) target = $region68
        $region67: #{tpu_custom_call.1} parent=59 // pred_region
          %454 = dma.done %s447, 4096
        $region68: #{tpu_custom_call.1} parent=59 // pred_fallthru
          _
        // Predicated region
        $region69: #{tpu_custom_call.1} parent=59 // pred_check
          %p455 = pneg %p102
        $region70: #{tpu_custom_call.1} parent=59 // pred_check_branch
          %457 = sbr.rel (%p455) target = $region72
        $region71: #{tpu_custom_call.1} parent=59 // pred_region
          %458 = dma.done [#allocation8], 128
        $region72: #{tpu_custom_call.1} parent=59 // pred_fallthru
          _
        // Predicated region
        $region73: #{tpu_custom_call.1} parent=59 // pred_check
          %p459 = pneg %p123
        $region74: #{tpu_custom_call.1} parent=59 // pred_check_branch
          %461 = sbr.rel (%p459) target = $region76
        $region75: #{tpu_custom_call.1} parent=59 // pred_region
          %462 = dma.done [#allocation11], 16
        $region76: #{tpu_custom_call.1} parent=59 // pred_fallthru
          _
        // Predicated region
        $region77: #{tpu_custom_call.1} parent=59 // pred_check
          %p463 = pneg %p144
        $region78: #{tpu_custom_call.1} parent=59 // pred_check_branch
          %465 = sbr.rel (%p463) target = $region80
        $region79: #{tpu_custom_call.1} parent=59 // pred_region
          %466 = dma.done [#allocation11], 768
        $region80: #{tpu_custom_call.1} parent=59 // pred_fallthru
          _
        // Predicated region
        $region81: #{tpu_custom_call.1} parent=59 // pred_check
          %p467 = pneg %p165
        $region82: #{tpu_custom_call.1} parent=59 // pred_check_branch
          %469 = sbr.rel (%p467) target = $region84
        $region83: #{tpu_custom_call.1} parent=59 // pred_region
          %470 = dma.done [#allocation14], 16
        $region84: #{tpu_custom_call.1} parent=59 // pred_fallthru
          _
        // Predicated region
        $region85: #{tpu_custom_call.1} parent=59 // pred_check
          %p471 = pneg %p186
        $region86: #{tpu_custom_call.1} parent=59 // pred_check_branch
          %473 = sbr.rel (%p471) target = $region88
        $region87: #{tpu_custom_call.1} parent=59 // pred_region
          %474 = dma.done [#allocation14], 256
        $region88: #{tpu_custom_call.1} parent=59 // pred_fallthru
          _
        // Predicated region
        $region89: #{tpu_custom_call.1} parent=59 // pred_check
          %p475 = pneg %p207
        $region90: #{tpu_custom_call.1} parent=59 // pred_check_branch
          %477 = sbr.rel (%p475) target = $region92
        $region91: #{tpu_custom_call.1} parent=59 // pred_region
          %478 = dma.done [#allocation17], 16
        $region92: #{tpu_custom_call.1} parent=59 // pred_fallthru
          _
        // Predicated region
        $region93: #{tpu_custom_call.1} parent=59 // pred_check
          %p479 = pneg %p228
        $region94: #{tpu_custom_call.1} parent=59 // pred_check_branch
          %481 = sbr.rel (%p479) target = $region96
        $region95: #{tpu_custom_call.1} parent=59 // pred_region
          %482 = dma.done [#allocation17], 768
        $region96: #{tpu_custom_call.1} parent=59 // pred_fallthru
          _
        // Predicated region
        $region97: #{tpu_custom_call.1} parent=59 // pred_check
          %p483 = pneg %p249
        $region98: #{tpu_custom_call.1} parent=59 // pred_check_branch
          %485 = sbr.rel (%p483) target = $region100
        $region99: #{tpu_custom_call.1} parent=59 // pred_region
          %486 = dma.done [#allocation20], 16
        $region100: #{tpu_custom_call.1} parent=59 // pred_fallthru
          _
        %s487 = sand.u32 %s42, 1
        %s488 = scalar_lea.sflag [#allocation5], %s487
        %s489 = sand.u32 %s42, 1
        %s490 = smul.addr %s489, 256
        %s491 = scalar_lea.vmem [#allocation4], %s490
        %p492 = pneg %p55
        %p493 = pneg %p52
        %s494 = sand.u32 %s34, 1
        %s495 = scalar_lea.sflag [#allocation8], %s494
        %s496 = sand.u32 %s68, 1
        %s497 = smul.addr %s496, 256
        %s498 = scalar_lea.vmem [#allocation7], %s497
        %p499 = pneg %p81
        %p500 = pneg %p78
        %p501 = pneg %p102
        %p502 = pneg %p99
        %p503 = pneg %p123
        %p504 = pneg %p120
        %p505 = pneg %p144
        %p506 = pneg %p141
        %p507 = pneg %p165
        %p508 = pneg %p162
        %p509 = pneg %p186
        %p510 = pneg %p183
        %p511 = pneg %p207
        %p512 = pneg %p204
        %p513 = pneg %p228
        %p514 = pneg %p225
        %p515 = pneg %p249
        %p516 = pneg %p246
        %p517 = pneg %p275
        %p518 = pneg %p272
        %s519 = sand.u32 %s262, 1
        %s520 = scalar_lea.sflag [#allocation6], %s519
        %s521 = sand.u32 %s262, 1
        %s522 = smul.addr %s521, 256
        %s523 = scalar_lea.vmem [#allocation21], %s522
        %v524 = vld [vmem:[%s441] sm:$0xff]
        %v525 = vld [vmem:[%s441 + $0x8] sm:$0xff]
        %v526 = vld [vmem:[%s441 + $0x10] sm:$0xff]
        %v527 = vld [vmem:[%s441 + $0x18] sm:$0xff]
        %v528 = vld [vmem:[%s441 + $0x20] sm:$0xff]
        %v529 = vld [vmem:[%s441 + $0x28] sm:$0xff]
        %v530 = vld [vmem:[%s441 + $0x30] sm:$0xff]
        %v531 = vld [vmem:[%s441 + $0x38] sm:$0xff]
        %v532 = vld [vmem:[%s441 + $0x40] sm:$0xff]
        %v533 = vld [vmem:[%s441 + $0x48] sm:$0xff]
        %v534 = vld [vmem:[%s441 + $0x50] sm:$0xff]
        %v535 = vld [vmem:[%s441 + $0x58] sm:$0xff]
        %v536 = vld [vmem:[%s441 + $0x60] sm:$0xff]
        %v537 = vld [vmem:[%s441 + $0x68] sm:$0xff]
        %v538 = vld [vmem:[%s441 + $0x70] sm:$0xff]
        %v539 = vld [vmem:[%s441 + $0x78] sm:$0xff]
        %v540 = vld [vmem:[%s441 + $0x80] sm:$0xff]
        %v541 = vld [vmem:[%s441 + $0x88] sm:$0xff]
        %v542 = vld [vmem:[%s441 + $0x90] sm:$0xff]
        %v543 = vld [vmem:[%s441 + $0x98] sm:$0xff]
        %v544 = vld [vmem:[%s441 + $0xa0] sm:$0xff]
        %v545 = vld [vmem:[%s441 + $0xa8] sm:$0xff]
        %v546 = vld [vmem:[%s441 + $0xb0] sm:$0xff]
        %v547 = vld [vmem:[%s441 + $0xb8] sm:$0xff]
        %v548 = vld [vmem:[%s441 + $0xc0] sm:$0xff]
        %v549 = vld [vmem:[%s441 + $0xc8] sm:$0xff]
        %v550 = vld [vmem:[%s441 + $0xd0] sm:$0xff]
        %v551 = vld [vmem:[%s441 + $0xd8] sm:$0xff]
        %v552 = vld [vmem:[%s441 + $0xe0] sm:$0xff]
        %v553 = vld [vmem:[%s441 + $0xe8] sm:$0xff]
        %v554 = vld [vmem:[%s441 + $0xf0] sm:$0xff]
        %v555 = vld [vmem:[%s441 + $0xf8] sm:$0xff]
        %v556 = vld [vmem:[%s450] sm:$0xff]
        %v557 = vld [vmem:[%s450 + $0x8] sm:$0xff]
        %v558 = vld [vmem:[%s450 + $0x10] sm:$0xff]
        %v559 = vld [vmem:[%s450 + $0x18] sm:$0xff]
        %v560 = vld [vmem:[%s450 + $0x20] sm:$0xff]
        %v561 = vld [vmem:[%s450 + $0x28] sm:$0xff]
        %v562 = vld [vmem:[%s450 + $0x30] sm:$0xff]
        %v563 = vld [vmem:[%s450 + $0x38] sm:$0xff]
        %v564 = vld [vmem:[%s450 + $0x40] sm:$0xff]
        %v565 = vld [vmem:[%s450 + $0x48] sm:$0xff]
        %v566 = vld [vmem:[%s450 + $0x50] sm:$0xff]
        %v567 = vld [vmem:[%s450 + $0x58] sm:$0xff]
        %v568 = vld [vmem:[%s450 + $0x60] sm:$0xff]
        %v569 = vld [vmem:[%s450 + $0x68] sm:$0xff]
        %v570 = vld [vmem:[%s450 + $0x70] sm:$0xff]
        %v571 = vld [vmem:[%s450 + $0x78] sm:$0xff]
        %v572 = vld [vmem:[%s450 + $0x80] sm:$0xff]
        %v573 = vld [vmem:[%s450 + $0x88] sm:$0xff]
        %v574 = vld [vmem:[%s450 + $0x90] sm:$0xff]
        %v575 = vld [vmem:[%s450 + $0x98] sm:$0xff]
        %v576 = vld [vmem:[%s450 + $0xa0] sm:$0xff]
        %v577 = vld [vmem:[%s450 + $0xa8] sm:$0xff]
        %v578 = vld [vmem:[%s450 + $0xb0] sm:$0xff]
        %v579 = vld [vmem:[%s450 + $0xb8] sm:$0xff]
        %v580 = vld [vmem:[%s450 + $0xc0] sm:$0xff]
        %v581 = vld [vmem:[%s450 + $0xc8] sm:$0xff]
        %v582 = vld [vmem:[%s450 + $0xd0] sm:$0xff]
        %v583 = vld [vmem:[%s450 + $0xd8] sm:$0xff]
        %v584 = vld [vmem:[%s450 + $0xe0] sm:$0xff]
        %v585 = vld [vmem:[%s450 + $0xe8] sm:$0xff]
        %v586 = vld [vmem:[%s450 + $0xf0] sm:$0xff]
        %v587 = vld [vmem:[%s450 + $0xf8] sm:$0xff]
        %620 = vrot.lane.b32.xlu0 %v556, 4
        %v621 = vpop.permute.xlu0 %620
        %622 = vrot.lane.b32.xlu0 %v557, 4
        %v623 = vpop.permute.xlu0 %622
        %624 = vrot.lane.b32.xlu0 %v558, 4
        %v625 = vpop.permute.xlu0 %624
        %626 = vrot.lane.b32.xlu0 %v559, 4
        %v627 = vpop.permute.xlu0 %626
        %628 = vrot.lane.b32.xlu0 %v560, 4
        %v629 = vpop.permute.xlu0 %628
        %630 = vrot.lane.b32.xlu0 %v561, 4
        %v631 = vpop.permute.xlu0 %630
        %632 = vrot.lane.b32.xlu0 %v562, 4
        %v633 = vpop.permute.xlu0 %632
        %634 = vrot.lane.b32.xlu0 %v563, 4
        %v635 = vpop.permute.xlu0 %634
        %636 = vrot.lane.b32.xlu0 %v564, 4
        %v637 = vpop.permute.xlu0 %636
        %638 = vrot.lane.b32.xlu0 %v565, 4
        %v639 = vpop.permute.xlu0 %638
        %640 = vrot.lane.b32.xlu0 %v566, 4
        %v641 = vpop.permute.xlu0 %640
        %642 = vrot.lane.b32.xlu0 %v567, 4
        %v643 = vpop.permute.xlu0 %642
        %644 = vrot.lane.b32.xlu0 %v568, 4
        %v645 = vpop.permute.xlu0 %644
        %646 = vrot.lane.b32.xlu0 %v569, 4
        %v647 = vpop.permute.xlu0 %646
        %648 = vrot.lane.b32.xlu0 %v570, 4
        %v649 = vpop.permute.xlu0 %648
        %650 = vrot.lane.b32.xlu0 %v571, 4
        %v651 = vpop.permute.xlu0 %650
        %652 = vrot.lane.b32.xlu0 %v572, 4
        %v653 = vpop.permute.xlu0 %652
        %654 = vrot.lane.b32.xlu0 %v573, 4
        %v655 = vpop.permute.xlu0 %654
        %656 = vrot.lane.b32.xlu0 %v574, 4
        %v657 = vpop.permute.xlu0 %656
        %658 = vrot.lane.b32.xlu0 %v575, 4
        %v659 = vpop.permute.xlu0 %658
        %660 = vrot.lane.b32.xlu0 %v576, 4
        %v661 = vpop.permute.xlu0 %660
        %662 = vrot.lane.b32.xlu0 %v577, 4
        %v663 = vpop.permute.xlu0 %662
        %664 = vrot.lane.b32.xlu0 %v578, 4
        %v665 = vpop.permute.xlu0 %664
        %666 = vrot.lane.b32.xlu0 %v579, 4
        %v667 = vpop.permute.xlu0 %666
        %668 = vrot.lane.b32.xlu0 %v580, 4
        %v669 = vpop.permute.xlu0 %668
        %670 = vrot.lane.b32.xlu0 %v581, 4
        %v671 = vpop.permute.xlu0 %670
        %672 = vrot.lane.b32.xlu0 %v582, 4
        %v673 = vpop.permute.xlu0 %672
        %674 = vrot.lane.b32.xlu0 %v583, 4
        %v675 = vpop.permute.xlu0 %674
        %676 = vrot.lane.b32.xlu0 %v584, 4
        %v677 = vpop.permute.xlu0 %676
        %678 = vrot.lane.b32.xlu0 %v585, 4
        %v679 = vpop.permute.xlu0 %678
        %680 = vrot.lane.b32.xlu0 %v586, 4
        %v681 = vpop.permute.xlu0 %680
        %682 = vrot.lane.b32.xlu0 %v587, 4
        %v683 = vpop.permute.xlu0 %682
        %vm716 = vcmask 31744
        %v717 = vsel %vm716, %v524, %v621
        %v718 = vsel %vm716, %v525, %v623
        %v719 = vsel %vm716, %v526, %v625
        %v720 = vsel %vm716, %v527, %v627
        %v721 = vsel %vm716, %v528, %v629
        %v722 = vsel %vm716, %v529, %v631
        %v723 = vsel %vm716, %v530, %v633
        %v724 = vsel %vm716, %v531, %v635
        %v725 = vsel %vm716, %v532, %v637
        %v726 = vsel %vm716, %v533, %v639
        %v727 = vsel %vm716, %v534, %v641
        %v728 = vsel %vm716, %v535, %v643
        %v729 = vsel %vm716, %v536, %v645
        %v730 = vsel %vm716, %v537, %v647
        %v731 = vsel %vm716, %v538, %v649
        %v732 = vsel %vm716, %v539, %v651
        %v733 = vsel %vm716, %v540, %v653
        %v734 = vsel %vm716, %v541, %v655
        %v735 = vsel %vm716, %v542, %v657
        %v736 = vsel %vm716, %v543, %v659
        %v737 = vsel %vm716, %v544, %v661
        %v738 = vsel %vm716, %v545, %v663
        %v739 = vsel %vm716, %v546, %v665
        %v740 = vsel %vm716, %v547, %v667
        %v741 = vsel %vm716, %v548, %v669
        %v742 = vsel %vm716, %v549, %v671
        %v743 = vsel %vm716, %v550, %v673
        %v744 = vsel %vm716, %v551, %v675
        %v745 = vsel %vm716, %v552, %v677
        %v746 = vsel %vm716, %v553, %v679
        %v747 = vsel %vm716, %v554, %v681
        %v748 = vsel %vm716, %v555, %v683
        %v749 = vld [vmem:[#allocation9] sm:$0xff]
        %v750 = vld [vmem:[#allocation10] sm:$0x1]
        %v752 = vlaneseq
        %v753 = vshrl.u32 %v752, 7
        %v754 = vsub.s32 0, %v753
        %v755 = vrot.slane %v750, %v754
        %vm757 = vcmask 64512
        %v759 = vsel %vm757, %v717, 0
        %v762 = vsel %vm757, %v718, 0
        %v765 = vsel %vm757, %v719, 0
        %v768 = vsel %vm757, %v720, 0
        %v771 = vsel %vm757, %v721, 0
        %v774 = vsel %vm757, %v722, 0
        %v777 = vsel %vm757, %v723, 0
        %v780 = vsel %vm757, %v724, 0
        %v783 = vsel %vm757, %v725, 0
        %v786 = vsel %vm757, %v726, 0
        %v789 = vsel %vm757, %v727, 0
        %v792 = vsel %vm757, %v728, 0
        %v795 = vsel %vm757, %v729, 0
        %v798 = vsel %vm757, %v730, 0
        %v801 = vsel %vm757, %v731, 0
        %v804 = vsel %vm757, %v732, 0
        %v807 = vsel %vm757, %v733, 0
        %v810 = vsel %vm757, %v734, 0
        %v813 = vsel %vm757, %v735, 0
        %v816 = vsel %vm757, %v736, 0
        %v819 = vsel %vm757, %v737, 0
        %v822 = vsel %vm757, %v738, 0
        %v825 = vsel %vm757, %v739, 0
        %v828 = vsel %vm757, %v740, 0
        %v831 = vsel %vm757, %v741, 0
        %v834 = vsel %vm757, %v742, 0
        %v837 = vsel %vm757, %v743, 0
        %v840 = vsel %vm757, %v744, 0
        %v843 = vsel %vm757, %v745, 0
        %v846 = vsel %vm757, %v746, 0
        %v849 = vsel %vm757, %v747, 0
        %v852 = vsel %vm757, %v748, 0
        %854 = vmatprep.subr.mxu0 0.0
        %855 = vmatpush1.msra.mxu0 %v749
        %856 = vmatprep.subr.mxu0 0.0
        %857 = vmatpush1.msra.mxu0 0.0
        %858 = vmatprep.subr.mxu0 0.0
        %859 = vmatpush1.msra.mxu0 0.0
        %860 = vmatprep.subr.mxu0 0.0
        %861 = vmatpush1.msra.mxu0 0.0
        %862 = vmatprep.subr.mxu0 0.0
        %863 = vmatpush1.msra.mxu0 0.0
        %864 = vmatprep.subr.mxu0 0.0
        %865 = vmatpush1.msra.mxu0 0.0
        %866 = vmatprep.subr.mxu0 0.0
        %867 = vmatpush1.msra.mxu0 0.0
        %868 = vmatprep.subr.mxu0 0.0
        %869 = vmatpush1.msra.mxu0 0.0
        %870 = vmatprep.subr.mxu0 0.0
        %871 = vmatpush1.msra.mxu0 0.0
        %872 = vmatprep.subr.mxu0 0.0
        %873 = vmatpush1.msra.mxu0 0.0
        %874 = vmatprep.subr.mxu0 0.0
        %875 = vmatpush1.msra.mxu0 0.0
        %876 = vmatprep.subr.mxu0 0.0
        %877 = vmatpush1.msra.mxu0 0.0
        %878 = vmatprep.subr.mxu0 0.0
        %879 = vmatpush1.msra.mxu0 0.0
        %880 = vmatprep.subr.mxu0 0.0
        %881 = vmatpush1.msra.mxu0 0.0
        %882 = vmatprep.subr.mxu0 0.0
        %883 = vmatpush1.msra.mxu0 0.0
        %884 = vmatprep.subr.mxu0 0.0
        %885 = vmatpush1.msra.mxu0 0.0
        %886 = vmatprep.subr.mxu0 0.0
        %887 = vmatpush1.msra.mxu0 0.0
        %888 = vmatprep.subr.mxu0 0.0
        %889 = vmatpush1.msra.mxu0 0.0
        %890 = vmatprep.subr.mxu0 0.0
        %891 = vmatpush1.msra.mxu0 0.0
        %892 = vmatprep.subr.mxu0 0.0
        %893 = vmatpush1.msra.mxu0 0.0
        %894 = vmatprep.subr.mxu0 0.0
        %895 = vmatpush1.msra.mxu0 0.0
        %896 = vmatprep.subr.mxu0 0.0
        %897 = vmatpush1.msra.mxu0 0.0
        %898 = vmatprep.subr.mxu0 0.0
        %899 = vmatpush1.msra.mxu0 0.0
        %900 = vmatprep.subr.mxu0 0.0
        %901 = vmatpush1.msra.mxu0 0.0
        %902 = vmatprep.subr.mxu0 0.0
        %903 = vmatpush1.msra.mxu0 0.0
        %904 = vmatprep.subr.mxu0 0.0
        %905 = vmatpush1.msra.mxu0 0.0
        %906 = vmatprep.subr.mxu0 0.0
        %907 = vmatpush1.msra.mxu0 0.0
        %908 = vmatprep.subr.mxu0 0.0
        %909 = vmatpush1.msra.mxu0 0.0
        %910 = vmatprep.subr.mxu0 0.0
        %911 = vmatpush1.msra.mxu0 0.0
        %912 = vmatprep.subr.mxu0 0.0
        %913 = vmatpush1.msra.mxu0 0.0
        %914 = vmatprep.subr.mxu0 0.0
        %915 = vmatpush1.msra.mxu0 0.0
        %916 = vmatprep.subr.mxu0 0.0
        %917 = vmatpush1.msra.mxu0 0.0
        %918 = vmatprep.mubr.f32.mxu0 0.0
        %919 = vmatmul.mubr.f32.gmra.mrb[0].mxu0 %v759
        %v920 = vpop.f32.mrb[0].mxu0
        %v921 = vadd.f32 %v755, %v920
        %v922 = vpop.f32.mrb[0].mxu0
        %923 = vmatprep.mubr.f32.mxu0 0.0
        %924 = vmatmul.mubr.f32.gmra.mrb[0].mxu0 %v762
        %v925 = vpop.f32.mrb[0].mxu0
        %v926 = vadd.f32 %v755, %v925
        %v927 = vpop.f32.mrb[0].mxu0
        %928 = vmatprep.mubr.f32.mxu0 0.0
        %929 = vmatmul.mubr.f32.gmra.mrb[0].mxu0 %v765
        %v930 = vpop.f32.mrb[0].mxu0
        %v931 = vadd.f32 %v755, %v930
        %v932 = vpop.f32.mrb[0].mxu0
        %933 = vmatprep.mubr.f32.mxu0 0.0
        %934 = vmatmul.mubr.f32.gmra.mrb[0].mxu0 %v768
        %v935 = vpop.f32.mrb[0].mxu0
        %v936 = vadd.f32 %v755, %v935
        %v937 = vpop.f32.mrb[0].mxu0
        %938 = vmatprep.mubr.f32.mxu0 0.0
        %939 = vmatmul.mubr.f32.gmra.mrb[0].mxu0 %v771
        %v940 = vpop.f32.mrb[0].mxu0
        %v941 = vadd.f32 %v755, %v940
        %v942 = vpop.f32.mrb[0].mxu0
        %943 = vmatprep.mubr.f32.mxu0 0.0
        %944 = vmatmul.mubr.f32.gmra.mrb[0].mxu0 %v774
        %v945 = vpop.f32.mrb[0].mxu0
        %v946 = vadd.f32 %v755, %v945
        %v947 = vpop.f32.mrb[0].mxu0
        %948 = vmatprep.mubr.f32.mxu0 0.0
        %949 = vmatmul.mubr.f32.gmra.mrb[0].mxu0 %v777
        %v950 = vpop.f32.mrb[0].mxu0
        %v951 = vadd.f32 %v755, %v950
        %v952 = vpop.f32.mrb[0].mxu0
        %953 = vmatprep.mubr.f32.mxu0 0.0
        %954 = vmatmul.mubr.f32.gmra.mrb[0].mxu0 %v780
        %v955 = vpop.f32.mrb[0].mxu0
        %v956 = vadd.f32 %v755, %v955
        %v957 = vpop.f32.mrb[0].mxu0
        %958 = vmatprep.mubr.f32.mxu0 0.0
        %959 = vmatmul.mubr.f32.gmra.mrb[0].mxu0 %v783
        %v960 = vpop.f32.mrb[0].mxu0
        %v961 = vadd.f32 %v755, %v960
        %v962 = vpop.f32.mrb[0].mxu0
        %963 = vmatprep.mubr.f32.mxu0 0.0
        %964 = vmatmul.mubr.f32.gmra.mrb[0].mxu0 %v786
        %v965 = vpop.f32.mrb[0].mxu0
        %v966 = vadd.f32 %v755, %v965
        %v967 = vpop.f32.mrb[0].mxu0
        %968 = vmatprep.mubr.f32.mxu0 0.0
        %969 = vmatmul.mubr.f32.gmra.mrb[0].mxu0 %v789
        %v970 = vpop.f32.mrb[0].mxu0
        %v971 = vadd.f32 %v755, %v970
        %v972 = vpop.f32.mrb[0].mxu0
        %973 = vmatprep.mubr.f32.mxu0 0.0
        %974 = vmatmul.mubr.f32.gmra.mrb[0].mxu0 %v792
        %v975 = vpop.f32.mrb[0].mxu0
        %v976 = vadd.f32 %v755, %v975
        %v977 = vpop.f32.mrb[0].mxu0
        %978 = vmatprep.mubr.f32.mxu0 0.0
        %979 = vmatmul.mubr.f32.gmra.mrb[0].mxu0 %v795
        %v980 = vpop.f32.mrb[0].mxu0
        %v981 = vadd.f32 %v755, %v980
        %v982 = vpop.f32.mrb[0].mxu0
        %983 = vmatprep.mubr.f32.mxu0 0.0
        %984 = vmatmul.mubr.f32.gmra.mrb[0].mxu0 %v798
        %v985 = vpop.f32.mrb[0].mxu0
        %v986 = vadd.f32 %v755, %v985
        %v987 = vpop.f32.mrb[0].mxu0
        %988 = vmatprep.mubr.f32.mxu0 0.0
        %989 = vmatmul.mubr.f32.gmra.mrb[0].mxu0 %v801
        %v990 = vpop.f32.mrb[0].mxu0
        %v991 = vadd.f32 %v755, %v990
        %v992 = vpop.f32.mrb[0].mxu0
        %993 = vmatprep.mubr.f32.mxu0 0.0
        %994 = vmatmul.mubr.f32.gmra.mrb[0].mxu0 %v804
        %v995 = vpop.f32.mrb[0].mxu0
        %v996 = vadd.f32 %v755, %v995
        %v997 = vpop.f32.mrb[0].mxu0
        %998 = vmatprep.mubr.f32.mxu0 0.0
        %999 = vmatmul.mubr.f32.gmra.mrb[0].mxu0 %v807
        %v1000 = vpop.f32.mrb[0].mxu0
        %v1001 = vadd.f32 %v755, %v1000
        %v1002 = vpop.f32.mrb[0].mxu0
        %1003 = vmatprep.mubr.f32.mxu0 0.0
        %1004 = vmatmul.mubr.f32.gmra.mrb[0].mxu0 %v810
        %v1005 = vpop.f32.mrb[0].mxu0
        %v1006 = vadd.f32 %v755, %v1005
        %v1007 = vpop.f32.mrb[0].mxu0
        %1008 = vmatprep.mubr.f32.mxu0 0.0
        %1009 = vmatmul.mubr.f32.gmra.mrb[0].mxu0 %v813
        %v1010 = vpop.f32.mrb[0].mxu0
        %v1011 = vadd.f32 %v755, %v1010
        %v1012 = vpop.f32.mrb[0].mxu0
        %1013 = vmatprep.mubr.f32.mxu0 0.0
        %1014 = vmatmul.mubr.f32.gmra.mrb[0].mxu0 %v816
        %v1015 = vpop.f32.mrb[0].mxu0
        %v1016 = vadd.f32 %v755, %v1015
        %v1017 = vpop.f32.mrb[0].mxu0
        %1018 = vmatprep.mubr.f32.mxu0 0.0
        %1019 = vmatmul.mubr.f32.gmra.mrb[0].mxu0 %v819
        %v1020 = vpop.f32.mrb[0].mxu0
        %v1021 = vadd.f32 %v755, %v1020
        %v1022 = vpop.f32.mrb[0].mxu0
        %1023 = vmatprep.mubr.f32.mxu0 0.0
        %1024 = vmatmul.mubr.f32.gmra.mrb[0].mxu0 %v822
        %v1025 = vpop.f32.mrb[0].mxu0
        %v1026 = vadd.f32 %v755, %v1025
        %v1027 = vpop.f32.mrb[0].mxu0
        %1028 = vmatprep.mubr.f32.mxu0 0.0
        %1029 = vmatmul.mubr.f32.gmra.mrb[0].mxu0 %v825
        %v1030 = vpop.f32.mrb[0].mxu0
        %v1031 = vadd.f32 %v755, %v1030
        %v1032 = vpop.f32.mrb[0].mxu0
        %1033 = vmatprep.mubr.f32.mxu0 0.0
        %1034 = vmatmul.mubr.f32.gmra.mrb[0].mxu0 %v828
        %v1035 = vpop.f32.mrb[0].mxu0
        %v1036 = vadd.f32 %v755, %v1035
        %v1037 = vpop.f32.mrb[0].mxu0
        %1038 = vmatprep.mubr.f32.mxu0 0.0
        %1039 = vmatmul.mubr.f32.gmra.mrb[0].mxu0 %v831
        %v1040 = vpop.f32.mrb[0].mxu0
        %v1041 = vadd.f32 %v755, %v1040
        %v1042 = vpop.f32.mrb[0].mxu0
        %1043 = vmatprep.mubr.f32.mxu0 0.0
        %1044 = vmatmul.mubr.f32.gmra.mrb[0].mxu0 %v834
        %v1045 = vpop.f32.mrb[0].mxu0
        %v1046 = vadd.f32 %v755, %v1045
        %v1047 = vpop.f32.mrb[0].mxu0
        %1048 = vmatprep.mubr.f32.mxu0 0.0
        %1049 = vmatmul.mubr.f32.gmra.mrb[0].mxu0 %v837
        %v1050 = vpop.f32.mrb[0].mxu0
        %v1051 = vadd.f32 %v755, %v1050
        %v1052 = vpop.f32.mrb[0].mxu0
        %1053 = vmatprep.mubr.f32.mxu0 0.0
        %1054 = vmatmul.mubr.f32.gmra.mrb[0].mxu0 %v840
        %v1055 = vpop.f32.mrb[0].mxu0
        %v1056 = vadd.f32 %v755, %v1055
        %v1057 = vpop.f32.mrb[0].mxu0
        %1058 = vmatprep.mubr.f32.mxu0 0.0
        %1059 = vmatmul.mubr.f32.gmra.mrb[0].mxu0 %v843
        %v1060 = vpop.f32.mrb[0].mxu0
        %v1061 = vadd.f32 %v755, %v1060
        %v1062 = vpop.f32.mrb[0].mxu0
        %1063 = vmatprep.mubr.f32.mxu0 0.0
        %1064 = vmatmul.mubr.f32.gmra.mrb[0].mxu0 %v846
        %v1065 = vpop.f32.mrb[0].mxu0
        %v1066 = vadd.f32 %v755, %v1065
        %v1067 = vpop.f32.mrb[0].mxu0
        %1068 = vmatprep.mubr.f32.mxu0 0.0
        %1069 = vmatmul.mubr.f32.gmra.mrb[0].mxu0 %v849
        %v1070 = vpop.f32.mrb[0].mxu0
        %v1071 = vadd.f32 %v755, %v1070
        %v1072 = vpop.f32.mrb[0].mxu0
        %1073 = vmatprep.mubr.f32.mxu0 0.0
        %1074 = vmatmul.mubr.f32.gmra.mrb[0].mxu0 %v852
        %v1075 = vpop.f32.mrb[0].mxu0
        %v1076 = vadd.f32 %v755, %v1075
        %v1077 = vpop.f32.mrb[0].mxu0
        %1078 = vdwg.mxu0
        %v1079 = vlaneseq
        %v1080 = vshrl.u32 %v1079, 7
        %v1081 = vadd.s32 %v1080, 8
        %vm1082 = vcmp.gt.s32.totalorder %v1080, 0
        %vm1083 = vcmp.gt.s32.totalorder %v1081, 0
        %v1084 = vrot.slane %v921, 7
        %v1085 = vrot.slane %v931, 7
        %v1086 = vrot.slane %v941, 7
        %v1087 = vrot.slane %v951, 7
        %v1088 = vrot.slane %v961, 7
        %v1089 = vrot.slane %v971, 7
        %v1090 = vrot.slane %v981, 7
        %v1091 = vrot.slane %v991, 7
        %v1092 = vrot.slane %v1001, 7
        %v1093 = vrot.slane %v1011, 7
        %v1094 = vrot.slane %v1021, 7
        %v1095 = vrot.slane %v1031, 7
        %v1096 = vrot.slane %v1041, 7
        %v1097 = vrot.slane %v1051, 7
        %v1098 = vrot.slane %v1061, 7
        %v1099 = vrot.slane %v1071, 7
        %v1100 = vrot.slane %v926, 7
        %v1101 = vrot.slane %v936, 7
        %v1102 = vrot.slane %v946, 7
        %v1103 = vrot.slane %v956, 7
        %v1104 = vrot.slane %v966, 7
        %v1105 = vrot.slane %v976, 7
        %v1106 = vrot.slane %v986, 7
        %v1107 = vrot.slane %v996, 7
        %v1108 = vrot.slane %v1006, 7
        %v1109 = vrot.slane %v1016, 7
        %v1110 = vrot.slane %v1026, 7
        %v1111 = vrot.slane %v1036, 7
        %v1112 = vrot.slane %v1046, 7
        %v1113 = vrot.slane %v1056, 7
        %v1114 = vrot.slane %v1066, 7
        %v1115 = vrot.slane %v1076, 7
        %vm1116 = vcmp.lt.s32.totalorder %v1080, 1
        %v1117 = vsel %vm1116, %v1084, %v1100
        %v1118 = vsel %vm1116, %v1085, %v1101
        %v1119 = vsel %vm1116, %v1086, %v1102
        %v1120 = vsel %vm1116, %v1087, %v1103
        %v1121 = vsel %vm1116, %v1088, %v1104
        %v1122 = vsel %vm1116, %v1089, %v1105
        %v1123 = vsel %vm1116, %v1090, %v1106
        %v1124 = vsel %vm1116, %v1091, %v1107
        %v1125 = vsel %vm1116, %v1092, %v1108
        %v1126 = vsel %vm1116, %v1093, %v1109
        %v1127 = vsel %vm1116, %v1094, %v1110
        %v1128 = vsel %vm1116, %v1095, %v1111
        %v1129 = vsel %vm1116, %v1096, %v1112
        %v1130 = vsel %vm1116, %v1097, %v1113
        %v1131 = vsel %vm1116, %v1098, %v1114
        %v1132 = vsel %vm1116, %v1099, %v1115
        %v1133 = vsel %vm1116, %v1100, %v1084
        %v1134 = vsel %vm1116, %v1101, %v1085
        %v1135 = vsel %vm1116, %v1102, %v1086
        %v1136 = vsel %vm1116, %v1103, %v1087
        %v1137 = vsel %vm1116, %v1104, %v1088
        %v1138 = vsel %vm1116, %v1105, %v1089
        %v1139 = vsel %vm1116, %v1106, %v1090
        %v1140 = vsel %vm1116, %v1107, %v1091
        %v1141 = vsel %vm1116, %v1108, %v1092
        %v1142 = vsel %vm1116, %v1109, %v1093
        %v1143 = vsel %vm1116, %v1110, %v1094
        %v1144 = vsel %vm1116, %v1111, %v1095
        %v1145 = vsel %vm1116, %v1112, %v1096
        %v1146 = vsel %vm1116, %v1113, %v1097
        %v1147 = vsel %vm1116, %v1114, %v1098
        %v1148 = vsel %vm1116, %v1115, %v1099
        %v1149 = vsel %vm1082, 1, 0
        %v1150 = vsel %vm1083, 1, 0
        %vm1151 = vcmp.eq.s32.totalorder %v1149, 1
        %vm1152 = vcmp.eq.s32.totalorder %v1150, 1
        %v1153 = vsel %vm1151, %v1133, 0.0
        %v1154 = vsel %vm1152, %v1117, 0.0
        %v1155 = vsel %vm1151, %v1134, 0.0
        %v1156 = vsel %vm1152, %v1118, 0.0
        %v1157 = vsel %vm1151, %v1135, 0.0
        %v1158 = vsel %vm1152, %v1119, 0.0
        %v1159 = vsel %vm1151, %v1136, 0.0
        %v1160 = vsel %vm1152, %v1120, 0.0
        %v1161 = vsel %vm1151, %v1137, 0.0
        %v1162 = vsel %vm1152, %v1121, 0.0
        %v1163 = vsel %vm1151, %v1138, 0.0
        %v1164 = vsel %vm1152, %v1122, 0.0
        %v1165 = vsel %vm1151, %v1139, 0.0
        %v1166 = vsel %vm1152, %v1123, 0.0
        %v1167 = vsel %vm1151, %v1140, 0.0
        %v1168 = vsel %vm1152, %v1124, 0.0
        %v1169 = vsel %vm1151, %v1141, 0.0
        %v1170 = vsel %vm1152, %v1125, 0.0
        %v1171 = vsel %vm1151, %v1142, 0.0
        %v1172 = vsel %vm1152, %v1126, 0.0
        %v1173 = vsel %vm1151, %v1143, 0.0
        %v1174 = vsel %vm1152, %v1127, 0.0
        %v1175 = vsel %vm1151, %v1144, 0.0
        %v1176 = vsel %vm1152, %v1128, 0.0
        %v1177 = vsel %vm1151, %v1145, 0.0
        %v1178 = vsel %vm1152, %v1129, 0.0
        %v1179 = vsel %vm1151, %v1146, 0.0
        %v1180 = vsel %vm1152, %v1130, 0.0
        %v1181 = vsel %vm1151, %v1147, 0.0
        %v1182 = vsel %vm1152, %v1131, 0.0
        %v1183 = vsel %vm1151, %v1148, 0.0
        %v1184 = vsel %vm1152, %v1132, 0.0
        %vm1185 = vcmp.lt.s32.totalorder %v1080, 15
        %vm1186 = vcmp.lt.s32.totalorder %v1081, 15
        %v1187 = vrot.slane %v921, 1
        %v1188 = vrot.slane %v931, 1
        %v1189 = vrot.slane %v941, 1
        %v1190 = vrot.slane %v951, 1
        %v1191 = vrot.slane %v961, 1
        %v1192 = vrot.slane %v971, 1
        %v1193 = vrot.slane %v981, 1
        %v1194 = vrot.slane %v991, 1
        %v1195 = vrot.slane %v1001, 1
        %v1196 = vrot.slane %v1011, 1
        %v1197 = vrot.slane %v1021, 1
        %v1198 = vrot.slane %v1031, 1
        %v1199 = vrot.slane %v1041, 1
        %v1200 = vrot.slane %v1051, 1
        %v1201 = vrot.slane %v1061, 1
        %v1202 = vrot.slane %v1071, 1
        %v1203 = vrot.slane %v926, 1
        %v1204 = vrot.slane %v936, 1
        %v1205 = vrot.slane %v946, 1
        %v1206 = vrot.slane %v956, 1
        %v1207 = vrot.slane %v966, 1
        %v1208 = vrot.slane %v976, 1
        %v1209 = vrot.slane %v986, 1
        %v1210 = vrot.slane %v996, 1
        %v1211 = vrot.slane %v1006, 1
        %v1212 = vrot.slane %v1016, 1
        %v1213 = vrot.slane %v1026, 1
        %v1214 = vrot.slane %v1036, 1
        %v1215 = vrot.slane %v1046, 1
        %v1216 = vrot.slane %v1056, 1
        %v1217 = vrot.slane %v1066, 1
        %v1218 = vrot.slane %v1076, 1
        %vm1219 = vcmp.lt.s32.totalorder %v1080, 7
        %v1220 = vsel %vm1219, %v1187, %v1203
        %v1221 = vsel %vm1219, %v1188, %v1204
        %v1222 = vsel %vm1219, %v1189, %v1205
        %v1223 = vsel %vm1219, %v1190, %v1206
        %v1224 = vsel %vm1219, %v1191, %v1207
        %v1225 = vsel %vm1219, %v1192, %v1208
        %v1226 = vsel %vm1219, %v1193, %v1209
        %v1227 = vsel %vm1219, %v1194, %v1210
        %v1228 = vsel %vm1219, %v1195, %v1211
        %v1229 = vsel %vm1219, %v1196, %v1212
        %v1230 = vsel %vm1219, %v1197, %v1213
        %v1231 = vsel %vm1219, %v1198, %v1214
        %v1232 = vsel %vm1219, %v1199, %v1215
        %v1233 = vsel %vm1219, %v1200, %v1216
        %v1234 = vsel %vm1219, %v1201, %v1217
        %v1235 = vsel %vm1219, %v1202, %v1218
        %v1236 = vsel %vm1219, %v1203, %v1187
        %v1237 = vsel %vm1219, %v1204, %v1188
        %v1238 = vsel %vm1219, %v1205, %v1189
        %v1239 = vsel %vm1219, %v1206, %v1190
        %v1240 = vsel %vm1219, %v1207, %v1191
        %v1241 = vsel %vm1219, %v1208, %v1192
        %v1242 = vsel %vm1219, %v1209, %v1193
        %v1243 = vsel %vm1219, %v1210, %v1194
        %v1244 = vsel %vm1219, %v1211, %v1195
        %v1245 = vsel %vm1219, %v1212, %v1196
        %v1246 = vsel %vm1219, %v1213, %v1197
        %v1247 = vsel %vm1219, %v1214, %v1198
        %v1248 = vsel %vm1219, %v1215, %v1199
        %v1249 = vsel %vm1219, %v1216, %v1200
        %v1250 = vsel %vm1219, %v1217, %v1201
        %v1251 = vsel %vm1219, %v1218, %v1202
        %v1252 = vsel %vm1185, 1, 0
        %v1253 = vsel %vm1186, 1, 0
        %vm1254 = vcmp.eq.s32.totalorder %v1252, 1
        %vm1255 = vcmp.eq.s32.totalorder %v1253, 1
        %v1256 = vsel %vm1254, %v1220, 0.0
        %v1257 = vsel %vm1255, %v1236, 0.0
        %v1258 = vsel %vm1254, %v1221, 0.0
        %v1259 = vsel %vm1255, %v1237, 0.0
        %v1260 = vsel %vm1254, %v1222, 0.0
        %v1261 = vsel %vm1255, %v1238, 0.0
        %v1262 = vsel %vm1254, %v1223, 0.0
        %v1263 = vsel %vm1255, %v1239, 0.0
        %v1264 = vsel %vm1254, %v1224, 0.0
        %v1265 = vsel %vm1255, %v1240, 0.0
        %v1266 = vsel %vm1254, %v1225, 0.0
        %v1267 = vsel %vm1255, %v1241, 0.0
        %v1268 = vsel %vm1254, %v1226, 0.0
        %v1269 = vsel %vm1255, %v1242, 0.0
        %v1270 = vsel %vm1254, %v1227, 0.0
        %v1271 = vsel %vm1255, %v1243, 0.0
        %v1272 = vsel %vm1254, %v1228, 0.0
        %v1273 = vsel %vm1255, %v1244, 0.0
        %v1274 = vsel %vm1254, %v1229, 0.0
        %v1275 = vsel %vm1255, %v1245, 0.0
        %v1276 = vsel %vm1254, %v1230, 0.0
        %v1277 = vsel %vm1255, %v1246, 0.0
        %v1278 = vsel %vm1254, %v1231, 0.0
        %v1279 = vsel %vm1255, %v1247, 0.0
        %v1280 = vsel %vm1254, %v1232, 0.0
        %v1281 = vsel %vm1255, %v1248, 0.0
        %v1282 = vsel %vm1254, %v1233, 0.0
        %v1283 = vsel %vm1255, %v1249, 0.0
        %v1284 = vsel %vm1254, %v1234, 0.0
        %v1285 = vsel %vm1255, %v1250, 0.0
        %v1286 = vsel %vm1254, %v1235, 0.0
        %v1287 = vsel %vm1255, %v1251, 0.0
        %1320 = vrot.lane.b32.xlu0 %v921, 4
        %v1321 = vpop.permute.xlu0 %1320
        %1322 = vrot.lane.b32.xlu0 %v926, 4
        %v1323 = vpop.permute.xlu0 %1322
        %1324 = vrot.lane.b32.xlu0 %v931, 4
        %v1325 = vpop.permute.xlu0 %1324
        %1326 = vrot.lane.b32.xlu0 %v936, 4
        %v1327 = vpop.permute.xlu0 %1326
        %1328 = vrot.lane.b32.xlu0 %v941, 4
        %v1329 = vpop.permute.xlu0 %1328
        %1330 = vrot.lane.b32.xlu0 %v946, 4
        %v1331 = vpop.permute.xlu0 %1330
        %1332 = vrot.lane.b32.xlu0 %v951, 4
        %v1333 = vpop.permute.xlu0 %1332
        %1334 = vrot.lane.b32.xlu0 %v956, 4
        %v1335 = vpop.permute.xlu0 %1334
        %1336 = vrot.lane.b32.xlu0 %v961, 4
        %v1337 = vpop.permute.xlu0 %1336
        %1338 = vrot.lane.b32.xlu0 %v966, 4
        %v1339 = vpop.permute.xlu0 %1338
        %1340 = vrot.lane.b32.xlu0 %v971, 4
        %v1341 = vpop.permute.xlu0 %1340
        %1342 = vrot.lane.b32.xlu0 %v976, 4
        %v1343 = vpop.permute.xlu0 %1342
        %1344 = vrot.lane.b32.xlu0 %v981, 4
        %v1345 = vpop.permute.xlu0 %1344
        %1346 = vrot.lane.b32.xlu0 %v986, 4
        %v1347 = vpop.permute.xlu0 %1346
        %1348 = vrot.lane.b32.xlu0 %v991, 4
        %v1349 = vpop.permute.xlu0 %1348
        %1350 = vrot.lane.b32.xlu0 %v996, 4
        %v1351 = vpop.permute.xlu0 %1350
        %1352 = vrot.lane.b32.xlu0 %v1001, 4
        %v1353 = vpop.permute.xlu0 %1352
        %1354 = vrot.lane.b32.xlu0 %v1006, 4
        %v1355 = vpop.permute.xlu0 %1354
        %1356 = vrot.lane.b32.xlu0 %v1011, 4
        %v1357 = vpop.permute.xlu0 %1356
        %1358 = vrot.lane.b32.xlu0 %v1016, 4
        %v1359 = vpop.permute.xlu0 %1358
        %1360 = vrot.lane.b32.xlu0 %v1021, 4
        %v1361 = vpop.permute.xlu0 %1360
        %1362 = vrot.lane.b32.xlu0 %v1026, 4
        %v1363 = vpop.permute.xlu0 %1362
        %1364 = vrot.lane.b32.xlu0 %v1031, 4
        %v1365 = vpop.permute.xlu0 %1364
        %1366 = vrot.lane.b32.xlu0 %v1036, 4
        %v1367 = vpop.permute.xlu0 %1366
        %1368 = vrot.lane.b32.xlu0 %v1041, 4
        %v1369 = vpop.permute.xlu0 %1368
        %1370 = vrot.lane.b32.xlu0 %v1046, 4
        %v1371 = vpop.permute.xlu0 %1370
        %1372 = vrot.lane.b32.xlu0 %v1051, 4
        %v1373 = vpop.permute.xlu0 %1372
        %1374 = vrot.lane.b32.xlu0 %v1056, 4
        %v1375 = vpop.permute.xlu0 %1374
        %1376 = vrot.lane.b32.xlu0 %v1061, 4
        %v1377 = vpop.permute.xlu0 %1376
        %1378 = vrot.lane.b32.xlu0 %v1066, 4
        %v1379 = vpop.permute.xlu0 %1378
        %1380 = vrot.lane.b32.xlu0 %v1071, 4
        %v1381 = vpop.permute.xlu0 %1380
        %1382 = vrot.lane.b32.xlu0 %v1076, 4
        %v1383 = vpop.permute.xlu0 %1382
        %1448 = vrot.lane.b32.xlu0 %v1256, 8
        %v1449 = vpop.permute.xlu0 %1448
        %1450 = vrot.lane.b32.xlu0 %v1257, 8
        %v1451 = vpop.permute.xlu0 %1450
        %1452 = vrot.lane.b32.xlu0 %v1258, 8
        %v1453 = vpop.permute.xlu0 %1452
        %1454 = vrot.lane.b32.xlu0 %v1259, 8
        %v1455 = vpop.permute.xlu0 %1454
        %1456 = vrot.lane.b32.xlu0 %v1260, 8
        %v1457 = vpop.permute.xlu0 %1456
        %1458 = vrot.lane.b32.xlu0 %v1261, 8
        %v1459 = vpop.permute.xlu0 %1458
        %1460 = vrot.lane.b32.xlu0 %v1262, 8
        %v1461 = vpop.permute.xlu0 %1460
        %1462 = vrot.lane.b32.xlu0 %v1263, 8
        %v1463 = vpop.permute.xlu0 %1462
        %1464 = vrot.lane.b32.xlu0 %v1264, 8
        %v1465 = vpop.permute.xlu0 %1464
        %1466 = vrot.lane.b32.xlu0 %v1265, 8
        %v1467 = vpop.permute.xlu0 %1466
        %1468 = vrot.lane.b32.xlu0 %v1266, 8
        %v1469 = vpop.permute.xlu0 %1468
        %1470 = vrot.lane.b32.xlu0 %v1267, 8
        %v1471 = vpop.permute.xlu0 %1470
        %1472 = vrot.lane.b32.xlu0 %v1268, 8
        %v1473 = vpop.permute.xlu0 %1472
        %1474 = vrot.lane.b32.xlu0 %v1269, 8
        %v1475 = vpop.permute.xlu0 %1474
        %1476 = vrot.lane.b32.xlu0 %v1270, 8
        %v1477 = vpop.permute.xlu0 %1476
        %1478 = vrot.lane.b32.xlu0 %v1271, 8
        %v1479 = vpop.permute.xlu0 %1478
        %1480 = vrot.lane.b32.xlu0 %v1272, 8
        %v1481 = vpop.permute.xlu0 %1480
        %1482 = vrot.lane.b32.xlu0 %v1273, 8
        %v1483 = vpop.permute.xlu0 %1482
        %1484 = vrot.lane.b32.xlu0 %v1274, 8
        %v1485 = vpop.permute.xlu0 %1484
        %1486 = vrot.lane.b32.xlu0 %v1275, 8
        %v1487 = vpop.permute.xlu0 %1486
        %1488 = vrot.lane.b32.xlu0 %v1276, 8
        %v1489 = vpop.permute.xlu0 %1488
        %1490 = vrot.lane.b32.xlu0 %v1277, 8
        %v1491 = vpop.permute.xlu0 %1490
        %1492 = vrot.lane.b32.xlu0 %v1278, 8
        %v1493 = vpop.permute.xlu0 %1492
        %1494 = vrot.lane.b32.xlu0 %v1279, 8
        %v1495 = vpop.permute.xlu0 %1494
        %1496 = vrot.lane.b32.xlu0 %v1280, 8
        %v1497 = vpop.permute.xlu0 %1496
        %1498 = vrot.lane.b32.xlu0 %v1281, 8
        %v1499 = vpop.permute.xlu0 %1498
        %1500 = vrot.lane.b32.xlu0 %v1282, 8
        %v1501 = vpop.permute.xlu0 %1500
        %1502 = vrot.lane.b32.xlu0 %v1283, 8
        %v1503 = vpop.permute.xlu0 %1502
        %1504 = vrot.lane.b32.xlu0 %v1284, 8
        %v1505 = vpop.permute.xlu0 %1504
        %1506 = vrot.lane.b32.xlu0 %v1285, 8
        %v1507 = vpop.permute.xlu0 %1506
        %1508 = vrot.lane.b32.xlu0 %v1286, 8
        %v1509 = vpop.permute.xlu0 %1508
        %1510 = vrot.lane.b32.xlu0 %v1287, 8
        %v1511 = vpop.permute.xlu0 %1510
        %v1544 = vsel %vm716, %v1153, %v1321
        %v1545 = vsel %vm716, %v1154, %v1323
        %v1546 = vsel %vm716, %v1155, %v1325
        %v1547 = vsel %vm716, %v1156, %v1327
        %v1548 = vsel %vm716, %v1157, %v1329
        %v1549 = vsel %vm716, %v1158, %v1331
        %v1550 = vsel %vm716, %v1159, %v1333
        %v1551 = vsel %vm716, %v1160, %v1335
        %v1552 = vsel %vm716, %v1161, %v1337
        %v1553 = vsel %vm716, %v1162, %v1339
        %v1554 = vsel %vm716, %v1163, %v1341
        %v1555 = vsel %vm716, %v1164, %v1343
        %v1556 = vsel %vm716, %v1165, %v1345
        %v1557 = vsel %vm716, %v1166, %v1347
        %v1558 = vsel %vm716, %v1167, %v1349
        %v1559 = vsel %vm716, %v1168, %v1351
        %v1560 = vsel %vm716, %v1169, %v1353
        %v1561 = vsel %vm716, %v1170, %v1355
        %v1562 = vsel %vm716, %v1171, %v1357
        %v1563 = vsel %vm716, %v1172, %v1359
        %v1564 = vsel %vm716, %v1173, %v1361
        %v1565 = vsel %vm716, %v1174, %v1363
        %v1566 = vsel %vm716, %v1175, %v1365
        %v1567 = vsel %vm716, %v1176, %v1367
        %v1568 = vsel %vm716, %v1177, %v1369
        %v1569 = vsel %vm716, %v1178, %v1371
        %v1570 = vsel %vm716, %v1179, %v1373
        %v1571 = vsel %vm716, %v1180, %v1375
        %v1572 = vsel %vm716, %v1181, %v1377
        %v1573 = vsel %vm716, %v1182, %v1379
        %v1574 = vsel %vm716, %v1183, %v1381
        %v1575 = vsel %vm716, %v1184, %v1383
        %v1576 = vsel %vm757, %v1544, %v1449
        %v1577 = vsel %vm757, %v1545, %v1451
        %v1578 = vsel %vm757, %v1546, %v1453
        %v1579 = vsel %vm757, %v1547, %v1455
        %v1580 = vsel %vm757, %v1548, %v1457
        %v1581 = vsel %vm757, %v1549, %v1459
        %v1582 = vsel %vm757, %v1550, %v1461
        %v1583 = vsel %vm757, %v1551, %v1463
        %v1584 = vsel %vm757, %v1552, %v1465
        %v1585 = vsel %vm757, %v1553, %v1467
        %v1586 = vsel %vm757, %v1554, %v1469
        %v1587 = vsel %vm757, %v1555, %v1471
        %v1588 = vsel %vm757, %v1556, %v1473
        %v1589 = vsel %vm757, %v1557, %v1475
        %v1590 = vsel %vm757, %v1558, %v1477
        %v1591 = vsel %vm757, %v1559, %v1479
        %v1592 = vsel %vm757, %v1560, %v1481
        %v1593 = vsel %vm757, %v1561, %v1483
        %v1594 = vsel %vm757, %v1562, %v1485
        %v1595 = vsel %vm757, %v1563, %v1487
        %v1596 = vsel %vm757, %v1564, %v1489
        %v1597 = vsel %vm757, %v1565, %v1491
        %v1598 = vsel %vm757, %v1566, %v1493
        %v1599 = vsel %vm757, %v1567, %v1495
        %v1600 = vsel %vm757, %v1568, %v1497
        %v1601 = vsel %vm757, %v1569, %v1499
        %v1602 = vsel %vm757, %v1570, %v1501
        %v1603 = vsel %vm757, %v1571, %v1503
        %v1604 = vsel %vm757, %v1572, %v1505
        %v1605 = vsel %vm757, %v1573, %v1507
        %v1606 = vsel %vm757, %v1574, %v1509
        %v1607 = vsel %vm757, %v1575, %v1511
        %vm1608 = vcmask 97280
        %1609 = vst.msk [vmem:[#allocation2] sm:$0xff] %vm1608, 0.0
        %1610 = vst.msk [vmem:[#allocation2 + $0x8] sm:$0xff] %vm1608, 0.0
        %1611 = vst.msk [vmem:[#allocation2 + $0x10] sm:$0xff] %vm1608, %v1576
        %1612 = vst.msk [vmem:[#allocation2 + $0x18] sm:$0xff] %vm1608, %v1577
        %1613 = vst.msk [vmem:[#allocation2 + $0x20] sm:$0xff] %vm1608, %v1578
        %1614 = vst.msk [vmem:[#allocation2 + $0x28] sm:$0xff] %vm1608, %v1579
        %1615 = vst.msk [vmem:[#allocation2 + $0x30] sm:$0xff] %vm1608, %v1580
        %1616 = vst.msk [vmem:[#allocation2 + $0x38] sm:$0xff] %vm1608, %v1581
        %1617 = vst.msk [vmem:[#allocation2 + $0x40] sm:$0xff] %vm1608, %v1582
        %1618 = vst.msk [vmem:[#allocation2 + $0x48] sm:$0xff] %vm1608, %v1583
        %1619 = vst.msk [vmem:[#allocation2 + $0x50] sm:$0xff] %vm1608, %v1584
        %1620 = vst.msk [vmem:[#allocation2 + $0x58] sm:$0xff] %vm1608, %v1585
        %1621 = vst.msk [vmem:[#allocation2 + $0x60] sm:$0xff] %vm1608, %v1586
        %1622 = vst.msk [vmem:[#allocation2 + $0x68] sm:$0xff] %vm1608, %v1587
        %1623 = vst.msk [vmem:[#allocation2 + $0x70] sm:$0xff] %vm1608, %v1588
        %1624 = vst.msk [vmem:[#allocation2 + $0x78] sm:$0xff] %vm1608, %v1589
        %1625 = vst.msk [vmem:[#allocation2 + $0x80] sm:$0xff] %vm1608, %v1590
        %1626 = vst.msk [vmem:[#allocation2 + $0x88] sm:$0xff] %vm1608, %v1591
        %1627 = vst.msk [vmem:[#allocation2 + $0x90] sm:$0xff] %vm1608, %v1592
        %1628 = vst.msk [vmem:[#allocation2 + $0x98] sm:$0xff] %vm1608, %v1593
        %1629 = vst.msk [vmem:[#allocation2 + $0xa0] sm:$0xff] %vm1608, %v1594
        %1630 = vst.msk [vmem:[#allocation2 + $0xa8] sm:$0xff] %vm1608, %v1595
        %1631 = vst.msk [vmem:[#allocation2 + $0xb0] sm:$0xff] %vm1608, %v1596
        %1632 = vst.msk [vmem:[#allocation2 + $0xb8] sm:$0xff] %vm1608, %v1597
        %1633 = vst.msk [vmem:[#allocation2 + $0xc0] sm:$0xff] %vm1608, %v1598
        %1634 = vst.msk [vmem:[#allocation2 + $0xc8] sm:$0xff] %vm1608, %v1599
        %1635 = vst.msk [vmem:[#allocation2 + $0xd0] sm:$0xff] %vm1608, %v1600
        %1636 = vst.msk [vmem:[#allocation2 + $0xd8] sm:$0xff] %vm1608, %v1601
        %1637 = vst.msk [vmem:[#allocation2 + $0xe0] sm:$0xff] %vm1608, %v1602
        %1638 = vst.msk [vmem:[#allocation2 + $0xe8] sm:$0xff] %vm1608, %v1603
        %1639 = vst.msk [vmem:[#allocation2 + $0xf0] sm:$0xff] %vm1608, %v1604
        %1640 = vst.msk [vmem:[#allocation2 + $0xf8] sm:$0xff] %vm1608, %v1605
        %1641 = vst.msk [vmem:[#allocation2 + $0x100] sm:$0xff] %vm1608, %v1606
        %1642 = vst.msk [vmem:[#allocation2 + $0x108] sm:$0xff] %vm1608, %v1607
        %1643 = vst.msk [vmem:[#allocation2 + $0x110] sm:$0xff] %vm1608, 0.0
        %1644 = vst.msk [vmem:[#allocation2 + $0x118] sm:$0xff] %vm1608, 0.0
        %v1645 = vld [vmem:[#allocation2] sm:$0xff]
        %v1646 = vld [vmem:[#allocation2 + $0x8] sm:$0xff]
        %v1647 = vld [vmem:[#allocation2 + $0x10] sm:$0xff]
        %v1648 = vld [vmem:[#allocation2 + $0x18] sm:$0xff]
        %v1649 = vld [vmem:[#allocation2 + $0x20] sm:$0xff]
        %v1650 = vld [vmem:[#allocation2 + $0x28] sm:$0xff]
        %v1651 = vld [vmem:[#allocation2 + $0x30] sm:$0xff]
        %v1652 = vld [vmem:[#allocation2 + $0x38] sm:$0xff]
        %v1653 = vld [vmem:[#allocation2 + $0x40] sm:$0xff]
        %v1654 = vld [vmem:[#allocation2 + $0x48] sm:$0xff]
        %v1655 = vld [vmem:[#allocation2 + $0x50] sm:$0xff]
        %v1656 = vld [vmem:[#allocation2 + $0x58] sm:$0xff]
        %v1657 = vld [vmem:[#allocation2 + $0x60] sm:$0xff]
        %v1658 = vld [vmem:[#allocation2 + $0x68] sm:$0xff]
        %v1659 = vld [vmem:[#allocation2 + $0x70] sm:$0xff]
        %v1660 = vld [vmem:[#allocation2 + $0x78] sm:$0xff]
        %v1661 = vld [vmem:[#allocation2 + $0x80] sm:$0xff]
        %v1662 = vld [vmem:[#allocation2 + $0x88] sm:$0xff]
        %v1663 = vld [vmem:[#allocation2 + $0x90] sm:$0xff]
        %v1664 = vld [vmem:[#allocation2 + $0x98] sm:$0xff]
        %v1665 = vld [vmem:[#allocation2 + $0xa0] sm:$0xff]
        %v1666 = vld [vmem:[#allocation2 + $0xa8] sm:$0xff]
        %v1667 = vld [vmem:[#allocation2 + $0xb0] sm:$0xff]
        %v1668 = vld [vmem:[#allocation2 + $0xb8] sm:$0xff]
        %v1669 = vld [vmem:[#allocation2 + $0xc0] sm:$0xff]
        %v1670 = vld [vmem:[#allocation2 + $0xc8] sm:$0xff]
        %v1671 = vld [vmem:[#allocation2 + $0xd0] sm:$0xff]
        %v1672 = vld [vmem:[#allocation2 + $0xd8] sm:$0xff]
        %v1673 = vld [vmem:[#allocation2 + $0xe0] sm:$0xff]
        %v1674 = vld [vmem:[#allocation2 + $0xe8] sm:$0xff]
        %v1675 = vld [vmem:[#allocation2 + $0xf0] sm:$0xff]
        %v1676 = vld [vmem:[#allocation2 + $0xf8] sm:$0xff]
        %v1677 = vld [vmem:[#allocation12] sm:$0xff]
        %v1678 = vld [vmem:[#allocation12 + $0x8] sm:$0xf]
        %v1679 = vld [vmem:[#allocation13] sm:$0x1]
        %v1681 = vlaneseq
        %v1682 = vshrl.u32 %v1681, 7
        %v1683 = vsub.s32 0, %v1682
        %v1684 = vrot.slane %v1679, %v1683
        %v1687 = vsel %vm1608, %v1645, 0
        %v1690 = vsel %vm1608, %v1646, 0
        %v1693 = vsel %vm1608, %v1647, 0
        %v1696 = vsel %vm1608, %v1648, 0
        %v1699 = vsel %vm1608, %v1649, 0
        %v1702 = vsel %vm1608, %v1650, 0
        %v1705 = vsel %vm1608, %v1651, 0
        %v1708 = vsel %vm1608, %v1652, 0
        %v1711 = vsel %vm1608, %v1653, 0
        %v1714 = vsel %vm1608, %v1654, 0
        %v1717 = vsel %vm1608, %v1655, 0
        %v1720 = vsel %vm1608, %v1656, 0
        %v1723 = vsel %vm1608, %v1657, 0
        %v1726 = vsel %vm1608, %v1658, 0
        %v1729 = vsel %vm1608, %v1659, 0
        %v1732 = vsel %vm1608, %v1660, 0
        %v1735 = vsel %vm1608, %v1661, 0
        %v1738 = vsel %vm1608, %v1662, 0
        %v1741 = vsel %vm1608, %v1663, 0
        %v1744 = vsel %vm1608, %v1664, 0
        %v1747 = vsel %vm1608, %v1665, 0
        %v1750 = vsel %vm1608, %v1666, 0
        %v1753 = vsel %vm1608, %v1667, 0
        %v1756 = vsel %vm1608, %v1668, 0
        %v1759 = vsel %vm1608, %v1669, 0
        %v1762 = vsel %vm1608, %v1670, 0
        %v1765 = vsel %vm1608, %v1671, 0
        %v1768 = vsel %vm1608, %v1672, 0
        %v1771 = vsel %vm1608, %v1673, 0
        %v1774 = vsel %vm1608, %v1674, 0
        %v1777 = vsel %vm1608, %v1675, 0
        %v1780 = vsel %vm1608, %v1676, 0
        %vm1782 = vcmask 1043456
        %v1784 = vsel %vm1782, %v1678, 0
        %1786 = vmatprep.subr.mxu0 0.0
        %1787 = vmatpush1.msra.mxu0 %v1677
        %1788 = vmatprep.subr.mxu0 0.0
        %1789 = vmatpush1.msra.mxu0 %v1784
        %1790 = vmatprep.subr.mxu0 0.0
        %1791 = vmatpush1.msra.mxu0 0.0
        %1792 = vmatprep.subr.mxu0 0.0
        %1793 = vmatpush1.msra.mxu0 0.0
        %1794 = vmatprep.subr.mxu0 0.0
        %1795 = vmatpush1.msra.mxu0 0.0
        %1796 = vmatprep.subr.mxu0 0.0
        %1797 = vmatpush1.msra.mxu0 0.0
        %1798 = vmatprep.subr.mxu0 0.0
        %1799 = vmatpush1.msra.mxu0 0.0
        %1800 = vmatprep.subr.mxu0 0.0
        %1801 = vmatpush1.msra.mxu0 0.0
        %1802 = vmatprep.subr.mxu0 0.0
        %1803 = vmatpush1.msra.mxu0 0.0
        %1804 = vmatprep.subr.mxu0 0.0
        %1805 = vmatpush1.msra.mxu0 0.0
        %1806 = vmatprep.subr.mxu0 0.0
        %1807 = vmatpush1.msra.mxu0 0.0
        %1808 = vmatprep.subr.mxu0 0.0
        %1809 = vmatpush1.msra.mxu0 0.0
        %1810 = vmatprep.subr.mxu0 0.0
        %1811 = vmatpush1.msra.mxu0 0.0
        %1812 = vmatprep.subr.mxu0 0.0
        %1813 = vmatpush1.msra.mxu0 0.0
        %1814 = vmatprep.subr.mxu0 0.0
        %1815 = vmatpush1.msra.mxu0 0.0
        %1816 = vmatprep.subr.mxu0 0.0
        %1817 = vmatpush1.msra.mxu0 0.0
        %1818 = vmatprep.subr.mxu0 0.0
        %1819 = vmatpush1.msra.mxu0 0.0
        %1820 = vmatprep.subr.mxu0 0.0
        %1821 = vmatpush1.msra.mxu0 0.0
        %1822 = vmatprep.subr.mxu0 0.0
        %1823 = vmatpush1.msra.mxu0 0.0
        %1824 = vmatprep.subr.mxu0 0.0
        %1825 = vmatpush1.msra.mxu0 0.0
        %1826 = vmatprep.subr.mxu0 0.0
        %1827 = vmatpush1.msra.mxu0 0.0
        %1828 = vmatprep.subr.mxu0 0.0
        %1829 = vmatpush1.msra.mxu0 0.0
        %1830 = vmatprep.subr.mxu0 0.0
        %1831 = vmatpush1.msra.mxu0 0.0
        %1832 = vmatprep.subr.mxu0 0.0
        %1833 = vmatpush1.msra.mxu0 0.0
        %1834 = vmatprep.subr.mxu0 0.0
        %1835 = vmatpush1.msra.mxu0 0.0
        %1836 = vmatprep.subr.mxu0 0.0
        %1837 = vmatpush1.msra.mxu0 0.0
        %1838 = vmatprep.subr.mxu0 0.0
        %1839 = vmatpush1.msra.mxu0 0.0
        %1840 = vmatprep.subr.mxu0 0.0
        %1841 = vmatpush1.msra.mxu0 0.0
        %1842 = vmatprep.subr.mxu0 0.0
        %1843 = vmatpush1.msra.mxu0 0.0
        %1844 = vmatprep.subr.mxu0 0.0
        %1845 = vmatpush1.msra.mxu0 0.0
        %1846 = vmatprep.subr.mxu0 0.0
        %1847 = vmatpush1.msra.mxu0 0.0
        %1848 = vmatprep.subr.mxu0 0.0
        %1849 = vmatpush1.msra.mxu0 0.0
        %1850 = vmatprep.mubr.f32.mxu0 0.0
        %1851 = vmatmul.mubr.f32.gmra.mrb[0].mxu0 %v1687
        %v1852 = vpop.f32.mrb[0].mxu0
        %v1853 = vadd.f32 %v1684, %v1852
        %v1854 = vpop.f32.mrb[0].mxu0
        %1855 = vmatprep.mubr.f32.mxu0 0.0
        %1856 = vmatmul.mubr.f32.gmra.mrb[0].mxu0 %v1690
        %v1857 = vpop.f32.mrb[0].mxu0
        %v1858 = vadd.f32 %v1684, %v1857
        %v1859 = vpop.f32.mrb[0].mxu0
        %1860 = vmatprep.mubr.f32.mxu0 0.0
        %1861 = vmatmul.mubr.f32.gmra.mrb[0].mxu0 %v1693
        %v1862 = vpop.f32.mrb[0].mxu0
        %v1863 = vadd.f32 %v1684, %v1862
        %v1864 = vpop.f32.mrb[0].mxu0
        %1865 = vmatprep.mubr.f32.mxu0 0.0
        %1866 = vmatmul.mubr.f32.gmra.mrb[0].mxu0 %v1696
        %v1867 = vpop.f32.mrb[0].mxu0
        %v1868 = vadd.f32 %v1684, %v1867
        %v1869 = vpop.f32.mrb[0].mxu0
        %1870 = vmatprep.mubr.f32.mxu0 0.0
        %1871 = vmatmul.mubr.f32.gmra.mrb[0].mxu0 %v1699
        %v1872 = vpop.f32.mrb[0].mxu0
        %v1873 = vadd.f32 %v1684, %v1872
        %v1874 = vpop.f32.mrb[0].mxu0
        %1875 = vmatprep.mubr.f32.mxu0 0.0
        %1876 = vmatmul.mubr.f32.gmra.mrb[0].mxu0 %v1702
        %v1877 = vpop.f32.mrb[0].mxu0
        %v1878 = vadd.f32 %v1684, %v1877
        %v1879 = vpop.f32.mrb[0].mxu0
        %1880 = vmatprep.mubr.f32.mxu0 0.0
        %1881 = vmatmul.mubr.f32.gmra.mrb[0].mxu0 %v1705
        %v1882 = vpop.f32.mrb[0].mxu0
        %v1883 = vadd.f32 %v1684, %v1882
        %v1884 = vpop.f32.mrb[0].mxu0
        %1885 = vmatprep.mubr.f32.mxu0 0.0
        %1886 = vmatmul.mubr.f32.gmra.mrb[0].mxu0 %v1708
        %v1887 = vpop.f32.mrb[0].mxu0
        %v1888 = vadd.f32 %v1684, %v1887
        %v1889 = vpop.f32.mrb[0].mxu0
        %1890 = vmatprep.mubr.f32.mxu0 0.0
        %1891 = vmatmul.mubr.f32.gmra.mrb[0].mxu0 %v1711
        %v1892 = vpop.f32.mrb[0].mxu0
        %v1893 = vadd.f32 %v1684, %v1892
        %v1894 = vpop.f32.mrb[0].mxu0
        %1895 = vmatprep.mubr.f32.mxu0 0.0
        %1896 = vmatmul.mubr.f32.gmra.mrb[0].mxu0 %v1714
        %v1897 = vpop.f32.mrb[0].mxu0
        %v1898 = vadd.f32 %v1684, %v1897
        %v1899 = vpop.f32.mrb[0].mxu0
        %1900 = vmatprep.mubr.f32.mxu0 0.0
        %1901 = vmatmul.mubr.f32.gmra.mrb[0].mxu0 %v1717
        %v1902 = vpop.f32.mrb[0].mxu0
        %v1903 = vadd.f32 %v1684, %v1902
        %v1904 = vpop.f32.mrb[0].mxu0
        %1905 = vmatprep.mubr.f32.mxu0 0.0
        %1906 = vmatmul.mubr.f32.gmra.mrb[0].mxu0 %v1720
        %v1907 = vpop.f32.mrb[0].mxu0
        %v1908 = vadd.f32 %v1684, %v1907
        %v1909 = vpop.f32.mrb[0].mxu0
        %1910 = vmatprep.mubr.f32.mxu0 0.0
        %1911 = vmatmul.mubr.f32.gmra.mrb[0].mxu0 %v1723
        %v1912 = vpop.f32.mrb[0].mxu0
        %v1913 = vadd.f32 %v1684, %v1912
        %v1914 = vpop.f32.mrb[0].mxu0
        %1915 = vmatprep.mubr.f32.mxu0 0.0
        %1916 = vmatmul.mubr.f32.gmra.mrb[0].mxu0 %v1726
        %v1917 = vpop.f32.mrb[0].mxu0
        %v1918 = vadd.f32 %v1684, %v1917
        %v1919 = vpop.f32.mrb[0].mxu0
        %1920 = vmatprep.mubr.f32.mxu0 0.0
        %1921 = vmatmul.mubr.f32.gmra.mrb[0].mxu0 %v1729
        %v1922 = vpop.f32.mrb[0].mxu0
        %v1923 = vadd.f32 %v1684, %v1922
        %v1924 = vpop.f32.mrb[0].mxu0
        %1925 = vmatprep.mubr.f32.mxu0 0.0
        %1926 = vmatmul.mubr.f32.gmra.mrb[0].mxu0 %v1732
        %v1927 = vpop.f32.mrb[0].mxu0
        %v1928 = vadd.f32 %v1684, %v1927
        %v1929 = vpop.f32.mrb[0].mxu0
        %1930 = vmatprep.mubr.f32.mxu0 0.0
        %1931 = vmatmul.mubr.f32.gmra.mrb[0].mxu0 %v1735
        %v1932 = vpop.f32.mrb[0].mxu0
        %v1933 = vadd.f32 %v1684, %v1932
        %v1934 = vpop.f32.mrb[0].mxu0
        %1935 = vmatprep.mubr.f32.mxu0 0.0
        %1936 = vmatmul.mubr.f32.gmra.mrb[0].mxu0 %v1738
        %v1937 = vpop.f32.mrb[0].mxu0
        %v1938 = vadd.f32 %v1684, %v1937
        %v1939 = vpop.f32.mrb[0].mxu0
        %1940 = vmatprep.mubr.f32.mxu0 0.0
        %1941 = vmatmul.mubr.f32.gmra.mrb[0].mxu0 %v1741
        %v1942 = vpop.f32.mrb[0].mxu0
        %v1943 = vadd.f32 %v1684, %v1942
        %v1944 = vpop.f32.mrb[0].mxu0
        %1945 = vmatprep.mubr.f32.mxu0 0.0
        %1946 = vmatmul.mubr.f32.gmra.mrb[0].mxu0 %v1744
        %v1947 = vpop.f32.mrb[0].mxu0
        %v1948 = vadd.f32 %v1684, %v1947
        %v1949 = vpop.f32.mrb[0].mxu0
        %1950 = vmatprep.mubr.f32.mxu0 0.0
        %1951 = vmatmul.mubr.f32.gmra.mrb[0].mxu0 %v1747
        %v1952 = vpop.f32.mrb[0].mxu0
        %v1953 = vadd.f32 %v1684, %v1952
        %v1954 = vpop.f32.mrb[0].mxu0
        %1955 = vmatprep.mubr.f32.mxu0 0.0
        %1956 = vmatmul.mubr.f32.gmra.mrb[0].mxu0 %v1750
        %v1957 = vpop.f32.mrb[0].mxu0
        %v1958 = vadd.f32 %v1684, %v1957
        %v1959 = vpop.f32.mrb[0].mxu0
        %1960 = vmatprep.mubr.f32.mxu0 0.0
        %1961 = vmatmul.mubr.f32.gmra.mrb[0].mxu0 %v1753
        %v1962 = vpop.f32.mrb[0].mxu0
        %v1963 = vadd.f32 %v1684, %v1962
        %v1964 = vpop.f32.mrb[0].mxu0
        %1965 = vmatprep.mubr.f32.mxu0 0.0
        %1966 = vmatmul.mubr.f32.gmra.mrb[0].mxu0 %v1756
        %v1967 = vpop.f32.mrb[0].mxu0
        %v1968 = vadd.f32 %v1684, %v1967
        %v1969 = vpop.f32.mrb[0].mxu0
        %1970 = vmatprep.mubr.f32.mxu0 0.0
        %1971 = vmatmul.mubr.f32.gmra.mrb[0].mxu0 %v1759
        %v1972 = vpop.f32.mrb[0].mxu0
        %v1973 = vadd.f32 %v1684, %v1972
        %v1974 = vpop.f32.mrb[0].mxu0
        %1975 = vmatprep.mubr.f32.mxu0 0.0
        %1976 = vmatmul.mubr.f32.gmra.mrb[0].mxu0 %v1762
        %v1977 = vpop.f32.mrb[0].mxu0
        %v1978 = vadd.f32 %v1684, %v1977
        %v1979 = vpop.f32.mrb[0].mxu0
        %1980 = vmatprep.mubr.f32.mxu0 0.0
        %1981 = vmatmul.mubr.f32.gmra.mrb[0].mxu0 %v1765
        %v1982 = vpop.f32.mrb[0].mxu0
        %v1983 = vadd.f32 %v1684, %v1982
        %v1984 = vpop.f32.mrb[0].mxu0
        %1985 = vmatprep.mubr.f32.mxu0 0.0
        %1986 = vmatmul.mubr.f32.gmra.mrb[0].mxu0 %v1768
        %v1987 = vpop.f32.mrb[0].mxu0
        %v1988 = vadd.f32 %v1684, %v1987
        %v1989 = vpop.f32.mrb[0].mxu0
        %1990 = vmatprep.mubr.f32.mxu0 0.0
        %1991 = vmatmul.mubr.f32.gmra.mrb[0].mxu0 %v1771
        %v1992 = vpop.f32.mrb[0].mxu0
        %v1993 = vadd.f32 %v1684, %v1992
        %v1994 = vpop.f32.mrb[0].mxu0
        %1995 = vmatprep.mubr.f32.mxu0 0.0
        %1996 = vmatmul.mubr.f32.gmra.mrb[0].mxu0 %v1774
        %v1997 = vpop.f32.mrb[0].mxu0
        %v1998 = vadd.f32 %v1684, %v1997
        %v1999 = vpop.f32.mrb[0].mxu0
        %2000 = vmatprep.mubr.f32.mxu0 0.0
        %2001 = vmatmul.mubr.f32.gmra.mrb[0].mxu0 %v1777
        %v2002 = vpop.f32.mrb[0].mxu0
        %v2003 = vadd.f32 %v1684, %v2002
        %v2004 = vpop.f32.mrb[0].mxu0
        %2005 = vmatprep.mubr.f32.mxu0 0.0
        %2006 = vmatmul.mubr.f32.gmra.mrb[0].mxu0 %v1780
        %v2007 = vpop.f32.mrb[0].mxu0
        %v2008 = vadd.f32 %v1684, %v2007
        %v2009 = vpop.f32.mrb[0].mxu0
        %2010 = vdwg.mxu0
        %s2011 = scalar_lea.vmem [#allocation2], 16
        %v2012 = vld [vmem:[%s2011] sm:$0xff]
        %v2013 = vld [vmem:[%s2011 + $0x8] sm:$0xff]
        %v2014 = vld [vmem:[%s2011 + $0x10] sm:$0xff]
        %v2015 = vld [vmem:[%s2011 + $0x18] sm:$0xff]
        %v2016 = vld [vmem:[%s2011 + $0x20] sm:$0xff]
        %v2017 = vld [vmem:[%s2011 + $0x28] sm:$0xff]
        %v2018 = vld [vmem:[%s2011 + $0x30] sm:$0xff]
        %v2019 = vld [vmem:[%s2011 + $0x38] sm:$0xff]
        %v2020 = vld [vmem:[%s2011 + $0x40] sm:$0xff]
        %v2021 = vld [vmem:[%s2011 + $0x48] sm:$0xff]
        %v2022 = vld [vmem:[%s2011 + $0x50] sm:$0xff]
        %v2023 = vld [vmem:[%s2011 + $0x58] sm:$0xff]
        %v2024 = vld [vmem:[%s2011 + $0x60] sm:$0xff]
        %v2025 = vld [vmem:[%s2011 + $0x68] sm:$0xff]
        %v2026 = vld [vmem:[%s2011 + $0x70] sm:$0xff]
        %v2027 = vld [vmem:[%s2011 + $0x78] sm:$0xff]
        %v2028 = vld [vmem:[%s2011 + $0x80] sm:$0xff]
        %v2029 = vld [vmem:[%s2011 + $0x88] sm:$0xff]
        %v2030 = vld [vmem:[%s2011 + $0x90] sm:$0xff]
        %v2031 = vld [vmem:[%s2011 + $0x98] sm:$0xff]
        %v2032 = vld [vmem:[%s2011 + $0xa0] sm:$0xff]
        %v2033 = vld [vmem:[%s2011 + $0xa8] sm:$0xff]
        %v2034 = vld [vmem:[%s2011 + $0xb0] sm:$0xff]
        %v2035 = vld [vmem:[%s2011 + $0xb8] sm:$0xff]
        %v2036 = vld [vmem:[%s2011 + $0xc0] sm:$0xff]
        %v2037 = vld [vmem:[%s2011 + $0xc8] sm:$0xff]
        %v2038 = vld [vmem:[%s2011 + $0xd0] sm:$0xff]
        %v2039 = vld [vmem:[%s2011 + $0xd8] sm:$0xff]
        %v2040 = vld [vmem:[%s2011 + $0xe0] sm:$0xff]
        %v2041 = vld [vmem:[%s2011 + $0xe8] sm:$0xff]
        %v2042 = vld [vmem:[%s2011 + $0xf0] sm:$0xff]
        %v2043 = vld [vmem:[%s2011 + $0xf8] sm:$0xff]
        %s2044 = scalar_lea.vmem [#allocation12], 16
        %v2045 = vld [vmem:[%s2044] sm:$0xff]
        %v2046 = vld [vmem:[%s2044 + $0x8] sm:$0xf]
        %v2048 = vsel %vm1608, %v2012, 0
        %v2051 = vsel %vm1608, %v2013, 0
        %v2054 = vsel %vm1608, %v2014, 0
        %v2057 = vsel %vm1608, %v2015, 0
        %v2060 = vsel %vm1608, %v2016, 0
        %v2063 = vsel %vm1608, %v2017, 0
        %v2066 = vsel %vm1608, %v2018, 0
        %v2069 = vsel %vm1608, %v2019, 0
        %v2072 = vsel %vm1608, %v2020, 0
        %v2075 = vsel %vm1608, %v2021, 0
        %v2078 = vsel %vm1608, %v2022, 0
        %v2081 = vsel %vm1608, %v2023, 0
        %v2084 = vsel %vm1608, %v2024, 0
        %v2087 = vsel %vm1608, %v2025, 0
        %v2090 = vsel %vm1608, %v2026, 0
        %v2093 = vsel %vm1608, %v2027, 0
        %v2096 = vsel %vm1608, %v2028, 0
        %v2099 = vsel %vm1608, %v2029, 0
        %v2102 = vsel %vm1608, %v2030, 0
        %v2105 = vsel %vm1608, %v2031, 0
        %v2108 = vsel %vm1608, %v2032, 0
        %v2111 = vsel %vm1608, %v2033, 0
        %v2114 = vsel %vm1608, %v2034, 0
        %v2117 = vsel %vm1608, %v2035, 0
        %v2120 = vsel %vm1608, %v2036, 0
        %v2123 = vsel %vm1608, %v2037, 0
        %v2126 = vsel %vm1608, %v2038, 0
        %v2129 = vsel %vm1608, %v2039, 0
        %v2132 = vsel %vm1608, %v2040, 0
        %v2135 = vsel %vm1608, %v2041, 0
        %v2138 = vsel %vm1608, %v2042, 0
        %v2141 = vsel %vm1608, %v2043, 0
        %v2144 = vsel %vm1782, %v2046, 0
        %2146 = vmatprep.subr.mxu0 0.0
        %2147 = vmatpush1.msra.mxu0 %v2045
        %2148 = vmatprep.subr.mxu0 0.0
        %2149 = vmatpush1.msra.mxu0 %v2144
        %2150 = vmatprep.subr.mxu0 0.0
        %2151 = vmatpush1.msra.mxu0 0.0
        %2152 = vmatprep.subr.mxu0 0.0
        %2153 = vmatpush1.msra.mxu0 0.0
        %2154 = vmatprep.subr.mxu0 0.0
        %2155 = vmatpush1.msra.mxu0 0.0
        %2156 = vmatprep.subr.mxu0 0.0
        %2157 = vmatpush1.msra.mxu0 0.0
        %2158 = vmatprep.subr.mxu0 0.0
        %2159 = vmatpush1.msra.mxu0 0.0
        %2160 = vmatprep.subr.mxu0 0.0
        %2161 = vmatpush1.msra.mxu0 0.0
        %2162 = vmatprep.subr.mxu0 0.0
        %2163 = vmatpush1.msra.mxu0 0.0
        %2164 = vmatprep.subr.mxu0 0.0
        %2165 = vmatpush1.msra.mxu0 0.0
        %2166 = vmatprep.subr.mxu0 0.0
        %2167 = vmatpush1.msra.mxu0 0.0
        %2168 = vmatprep.subr.mxu0 0.0
        %2169 = vmatpush1.msra.mxu0 0.0
        %2170 = vmatprep.subr.mxu0 0.0
        %2171 = vmatpush1.msra.mxu0 0.0
        %2172 = vmatprep.subr.mxu0 0.0
        %2173 = vmatpush1.msra.mxu0 0.0
        %2174 = vmatprep.subr.mxu0 0.0
        %2175 = vmatpush1.msra.mxu0 0.0
        %2176 = vmatprep.subr.mxu0 0.0
        %2177 = vmatpush1.msra.mxu0 0.0
        %2178 = vmatprep.subr.mxu0 0.0
        %2179 = vmatpush1.msra.mxu0 0.0
        %2180 = vmatprep.subr.mxu0 0.0
        %2181 = vmatpush1.msra.mxu0 0.0
        %2182 = vmatprep.subr.mxu0 0.0
        %2183 = vmatpush1.msra.mxu0 0.0
        %2184 = vmatprep.subr.mxu0 0.0
        %2185 = vmatpush1.msra.mxu0 0.0
        %2186 = vmatprep.subr.mxu0 0.0
        %2187 = vmatpush1.msra.mxu0 0.0
        %2188 = vmatprep.subr.mxu0 0.0
        %2189 = vmatpush1.msra.mxu0 0.0
        %2190 = vmatprep.subr.mxu0 0.0
        %2191 = vmatpush1.msra.mxu0 0.0
        %2192 = vmatprep.subr.mxu0 0.0
        %2193 = vmatpush1.msra.mxu0 0.0
        %2194 = vmatprep.subr.mxu0 0.0
        %2195 = vmatpush1.msra.mxu0 0.0
        %2196 = vmatprep.subr.mxu0 0.0
        %2197 = vmatpush1.msra.mxu0 0.0
        %2198 = vmatprep.subr.mxu0 0.0
        %2199 = vmatpush1.msra.mxu0 0.0
        %2200 = vmatprep.subr.mxu0 0.0
        %2201 = vmatpush1.msra.mxu0 0.0
        %2202 = vmatprep.subr.mxu0 0.0
        %2203 = vmatpush1.msra.mxu0 0.0
        %2204 = vmatprep.subr.mxu0 0.0
        %2205 = vmatpush1.msra.mxu0 0.0
        %2206 = vmatprep.subr.mxu0 0.0
        %2207 = vmatpush1.msra.mxu0 0.0
        %2208 = vmatprep.subr.mxu0 0.0
        %2209 = vmatpush1.msra.mxu0 0.0
        %2210 = vmatprep.mubr.f32.mxu0 0.0
        %2211 = vmatmul.mubr.f32.gmra.mrb[0].mxu0 %v2048
        %v2212 = vpop.f32.mrb[0].mxu0
        %v2213 = vadd.f32 0.0, %v2212
        %v2214 = vpop.f32.mrb[0].mxu0
        %2215 = vmatprep.mubr.f32.mxu0 0.0
        %2216 = vmatmul.mubr.f32.gmra.mrb[0].mxu0 %v2051
        %v2217 = vpop.f32.mrb[0].mxu0
        %v2218 = vadd.f32 0.0, %v2217
        %v2219 = vpop.f32.mrb[0].mxu0
        %2220 = vmatprep.mubr.f32.mxu0 0.0
        %2221 = vmatmul.mubr.f32.gmra.mrb[0].mxu0 %v2054
        %v2222 = vpop.f32.mrb[0].mxu0
        %v2223 = vadd.f32 0.0, %v2222
        %v2224 = vpop.f32.mrb[0].mxu0
        %2225 = vmatprep.mubr.f32.mxu0 0.0
        %2226 = vmatmul.mubr.f32.gmra.mrb[0].mxu0 %v2057
        %v2227 = vpop.f32.mrb[0].mxu0
        %v2228 = vadd.f32 0.0, %v2227
        %v2229 = vpop.f32.mrb[0].mxu0
        %2230 = vmatprep.mubr.f32.mxu0 0.0
        %2231 = vmatmul.mubr.f32.gmra.mrb[0].mxu0 %v2060
        %v2232 = vpop.f32.mrb[0].mxu0
        %v2233 = vadd.f32 0.0, %v2232
        %v2234 = vpop.f32.mrb[0].mxu0
        %2235 = vmatprep.mubr.f32.mxu0 0.0
        %2236 = vmatmul.mubr.f32.gmra.mrb[0].mxu0 %v2063
        %v2237 = vpop.f32.mrb[0].mxu0
        %v2238 = vadd.f32 0.0, %v2237
        %v2239 = vpop.f32.mrb[0].mxu0
        %2240 = vmatprep.mubr.f32.mxu0 0.0
        %2241 = vmatmul.mubr.f32.gmra.mrb[0].mxu0 %v2066
        %v2242 = vpop.f32.mrb[0].mxu0
        %v2243 = vadd.f32 0.0, %v2242
        %v2244 = vpop.f32.mrb[0].mxu0
        %2245 = vmatprep.mubr.f32.mxu0 0.0
        %2246 = vmatmul.mubr.f32.gmra.mrb[0].mxu0 %v2069
        %v2247 = vpop.f32.mrb[0].mxu0
        %v2248 = vadd.f32 0.0, %v2247
        %v2249 = vpop.f32.mrb[0].mxu0
        %2250 = vmatprep.mubr.f32.mxu0 0.0
        %2251 = vmatmul.mubr.f32.gmra.mrb[0].mxu0 %v2072
        %v2252 = vpop.f32.mrb[0].mxu0
        %v2253 = vadd.f32 0.0, %v2252
        %v2254 = vpop.f32.mrb[0].mxu0
        %2255 = vmatprep.mubr.f32.mxu0 0.0
        %2256 = vmatmul.mubr.f32.gmra.mrb[0].mxu0 %v2075
        %v2257 = vpop.f32.mrb[0].mxu0
        %v2258 = vadd.f32 0.0, %v2257
        %v2259 = vpop.f32.mrb[0].mxu0
        %2260 = vmatprep.mubr.f32.mxu0 0.0
        %2261 = vmatmul.mubr.f32.gmra.mrb[0].mxu0 %v2078
        %v2262 = vpop.f32.mrb[0].mxu0
        %v2263 = vadd.f32 0.0, %v2262
        %v2264 = vpop.f32.mrb[0].mxu0
        %2265 = vmatprep.mubr.f32.mxu0 0.0
        %2266 = vmatmul.mubr.f32.gmra.mrb[0].mxu0 %v2081
        %v2267 = vpop.f32.mrb[0].mxu0
        %v2268 = vadd.f32 0.0, %v2267
        %v2269 = vpop.f32.mrb[0].mxu0
        %2270 = vmatprep.mubr.f32.mxu0 0.0
        %2271 = vmatmul.mubr.f32.gmra.mrb[0].mxu0 %v2084
        %v2272 = vpop.f32.mrb[0].mxu0
        %v2273 = vadd.f32 0.0, %v2272
        %v2274 = vpop.f32.mrb[0].mxu0
        %2275 = vmatprep.mubr.f32.mxu0 0.0
        %2276 = vmatmul.mubr.f32.gmra.mrb[0].mxu0 %v2087
        %v2277 = vpop.f32.mrb[0].mxu0
        %v2278 = vadd.f32 0.0, %v2277
        %v2279 = vpop.f32.mrb[0].mxu0
        %2280 = vmatprep.mubr.f32.mxu0 0.0
        %2281 = vmatmul.mubr.f32.gmra.mrb[0].mxu0 %v2090
        %v2282 = vpop.f32.mrb[0].mxu0
        %v2283 = vadd.f32 0.0, %v2282
        %v2284 = vpop.f32.mrb[0].mxu0
        %2285 = vmatprep.mubr.f32.mxu0 0.0
        %2286 = vmatmul.mubr.f32.gmra.mrb[0].mxu0 %v2093
        %v2287 = vpop.f32.mrb[0].mxu0
        %v2288 = vadd.f32 0.0, %v2287
        %v2289 = vpop.f32.mrb[0].mxu0
        %2290 = vmatprep.mubr.f32.mxu0 0.0
        %2291 = vmatmul.mubr.f32.gmra.mrb[0].mxu0 %v2096
        %v2292 = vpop.f32.mrb[0].mxu0
        %v2293 = vadd.f32 0.0, %v2292
        %v2294 = vpop.f32.mrb[0].mxu0
        %2295 = vmatprep.mubr.f32.mxu0 0.0
        %2296 = vmatmul.mubr.f32.gmra.mrb[0].mxu0 %v2099
        %v2297 = vpop.f32.mrb[0].mxu0
        %v2298 = vadd.f32 0.0, %v2297
        %v2299 = vpop.f32.mrb[0].mxu0
        %2300 = vmatprep.mubr.f32.mxu0 0.0
        %2301 = vmatmul.mubr.f32.gmra.mrb[0].mxu0 %v2102
        %v2302 = vpop.f32.mrb[0].mxu0
        %v2303 = vadd.f32 0.0, %v2302
        %v2304 = vpop.f32.mrb[0].mxu0
        %2305 = vmatprep.mubr.f32.mxu0 0.0
        %2306 = vmatmul.mubr.f32.gmra.mrb[0].mxu0 %v2105
        %v2307 = vpop.f32.mrb[0].mxu0
        %v2308 = vadd.f32 0.0, %v2307
        %v2309 = vpop.f32.mrb[0].mxu0
        %2310 = vmatprep.mubr.f32.mxu0 0.0
        %2311 = vmatmul.mubr.f32.gmra.mrb[0].mxu0 %v2108
        %v2312 = vpop.f32.mrb[0].mxu0
        %v2313 = vadd.f32 0.0, %v2312
        %v2314 = vpop.f32.mrb[0].mxu0
        %2315 = vmatprep.mubr.f32.mxu0 0.0
        %2316 = vmatmul.mubr.f32.gmra.mrb[0].mxu0 %v2111
        %v2317 = vpop.f32.mrb[0].mxu0
        %v2318 = vadd.f32 0.0, %v2317
        %v2319 = vpop.f32.mrb[0].mxu0
        %2320 = vmatprep.mubr.f32.mxu0 0.0
        %2321 = vmatmul.mubr.f32.gmra.mrb[0].mxu0 %v2114
        %v2322 = vpop.f32.mrb[0].mxu0
        %v2323 = vadd.f32 0.0, %v2322
        %v2324 = vpop.f32.mrb[0].mxu0
        %2325 = vmatprep.mubr.f32.mxu0 0.0
        %2326 = vmatmul.mubr.f32.gmra.mrb[0].mxu0 %v2117
        %v2327 = vpop.f32.mrb[0].mxu0
        %v2328 = vadd.f32 0.0, %v2327
        %v2329 = vpop.f32.mrb[0].mxu0
        %2330 = vmatprep.mubr.f32.mxu0 0.0
        %2331 = vmatmul.mubr.f32.gmra.mrb[0].mxu0 %v2120
        %v2332 = vpop.f32.mrb[0].mxu0
        %v2333 = vadd.f32 0.0, %v2332
        %v2334 = vpop.f32.mrb[0].mxu0
        %2335 = vmatprep.mubr.f32.mxu0 0.0
        %2336 = vmatmul.mubr.f32.gmra.mrb[0].mxu0 %v2123
        %v2337 = vpop.f32.mrb[0].mxu0
        %v2338 = vadd.f32 0.0, %v2337
        %v2339 = vpop.f32.mrb[0].mxu0
        %2340 = vmatprep.mubr.f32.mxu0 0.0
        %2341 = vmatmul.mubr.f32.gmra.mrb[0].mxu0 %v2126
        %v2342 = vpop.f32.mrb[0].mxu0
        %v2343 = vadd.f32 0.0, %v2342
        %v2344 = vpop.f32.mrb[0].mxu0
        %2345 = vmatprep.mubr.f32.mxu0 0.0
        %2346 = vmatmul.mubr.f32.gmra.mrb[0].mxu0 %v2129
        %v2347 = vpop.f32.mrb[0].mxu0
        %v2348 = vadd.f32 0.0, %v2347
        %v2349 = vpop.f32.mrb[0].mxu0
        %2350 = vmatprep.mubr.f32.mxu0 0.0
        %2351 = vmatmul.mubr.f32.gmra.mrb[0].mxu0 %v2132
        %v2352 = vpop.f32.mrb[0].mxu0
        %v2353 = vadd.f32 0.0, %v2352
        %v2354 = vpop.f32.mrb[0].mxu0
        %2355 = vmatprep.mubr.f32.mxu0 0.0
        %2356 = vmatmul.mubr.f32.gmra.mrb[0].mxu0 %v2135
        %v2357 = vpop.f32.mrb[0].mxu0
        %v2358 = vadd.f32 0.0, %v2357
        %v2359 = vpop.f32.mrb[0].mxu0
        %2360 = vmatprep.mubr.f32.mxu0 0.0
        %2361 = vmatmul.mubr.f32.gmra.mrb[0].mxu0 %v2138
        %v2362 = vpop.f32.mrb[0].mxu0
        %v2363 = vadd.f32 0.0, %v2362
        %v2364 = vpop.f32.mrb[0].mxu0
        %2365 = vmatprep.mubr.f32.mxu0 0.0
        %2366 = vmatmul.mubr.f32.gmra.mrb[0].mxu0 %v2141
        %v2367 = vpop.f32.mrb[0].mxu0
        %v2368 = vadd.f32 0.0, %v2367
        %v2369 = vpop.f32.mrb[0].mxu0
        %2370 = vdwg.mxu0
        %v2371 = vadd.f32 %v1853, %v2213
        %v2372 = vadd.f32 %v1858, %v2218
        %v2373 = vadd.f32 %v1863, %v2223
        %v2374 = vadd.f32 %v1868, %v2228
        %v2375 = vadd.f32 %v1873, %v2233
        %v2376 = vadd.f32 %v1878, %v2238
        %v2377 = vadd.f32 %v1883, %v2243
        %v2378 = vadd.f32 %v1888, %v2248
        %v2379 = vadd.f32 %v1893, %v2253
        %v2380 = vadd.f32 %v1898, %v2258
        %v2381 = vadd.f32 %v1903, %v2263
        %v2382 = vadd.f32 %v1908, %v2268
        %v2383 = vadd.f32 %v1913, %v2273
        %v2384 = vadd.f32 %v1918, %v2278
        %v2385 = vadd.f32 %v1923, %v2283
        %v2386 = vadd.f32 %v1928, %v2288
        %v2387 = vadd.f32 %v1933, %v2293
        %v2388 = vadd.f32 %v1938, %v2298
        %v2389 = vadd.f32 %v1943, %v2303
        %v2390 = vadd.f32 %v1948, %v2308
        %v2391 = vadd.f32 %v1953, %v2313
        %v2392 = vadd.f32 %v1958, %v2318
        %v2393 = vadd.f32 %v1963, %v2323
        %v2394 = vadd.f32 %v1968, %v2328
        %v2395 = vadd.f32 %v1973, %v2333
        %v2396 = vadd.f32 %v1978, %v2338
        %v2397 = vadd.f32 %v1983, %v2343
        %v2398 = vadd.f32 %v1988, %v2348
        %v2399 = vadd.f32 %v1993, %v2353
        %v2400 = vadd.f32 %v1998, %v2358
        %v2401 = vadd.f32 %v2003, %v2363
        %v2402 = vadd.f32 %v2008, %v2368
        %s2403 = scalar_lea.vmem [#allocation2], 32
        %v2404 = vld [vmem:[%s2403] sm:$0xff]
        %v2405 = vld [vmem:[%s2403 + $0x8] sm:$0xff]
        %v2406 = vld [vmem:[%s2403 + $0x10] sm:$0xff]
        %v2407 = vld [vmem:[%s2403 + $0x18] sm:$0xff]
        %v2408 = vld [vmem:[%s2403 + $0x20] sm:$0xff]
        %v2409 = vld [vmem:[%s2403 + $0x28] sm:$0xff]
        %v2410 = vld [vmem:[%s2403 + $0x30] sm:$0xff]
        %v2411 = vld [vmem:[%s2403 + $0x38] sm:$0xff]
        %v2412 = vld [vmem:[%s2403 + $0x40] sm:$0xff]
        %v2413 = vld [vmem:[%s2403 + $0x48] sm:$0xff]
        %v2414 = vld [vmem:[%s2403 + $0x50] sm:$0xff]
        %v2415 = vld [vmem:[%s2403 + $0x58] sm:$0xff]
        %v2416 = vld [vmem:[%s2403 + $0x60] sm:$0xff]
        %v2417 = vld [vmem:[%s2403 + $0x68] sm:$0xff]
        %v2418 = vld [vmem:[%s2403 + $0x70] sm:$0xff]
        %v2419 = vld [vmem:[%s2403 + $0x78] sm:$0xff]
        %v2420 = vld [vmem:[%s2403 + $0x80] sm:$0xff]
        %v2421 = vld [vmem:[%s2403 + $0x88] sm:$0xff]
        %v2422 = vld [vmem:[%s2403 + $0x90] sm:$0xff]
        %v2423 = vld [vmem:[%s2403 + $0x98] sm:$0xff]
        %v2424 = vld [vmem:[%s2403 + $0xa0] sm:$0xff]
        %v2425 = vld [vmem:[%s2403 + $0xa8] sm:$0xff]
        %v2426 = vld [vmem:[%s2403 + $0xb0] sm:$0xff]
        %v2427 = vld [vmem:[%s2403 + $0xb8] sm:$0xff]
        %v2428 = vld [vmem:[%s2403 + $0xc0] sm:$0xff]
        %v2429 = vld [vmem:[%s2403 + $0xc8] sm:$0xff]
        %v2430 = vld [vmem:[%s2403 + $0xd0] sm:$0xff]
        %v2431 = vld [vmem:[%s2403 + $0xd8] sm:$0xff]
        %v2432 = vld [vmem:[%s2403 + $0xe0] sm:$0xff]
        %v2433 = vld [vmem:[%s2403 + $0xe8] sm:$0xff]
        %v2434 = vld [vmem:[%s2403 + $0xf0] sm:$0xff]
        %v2435 = vld [vmem:[%s2403 + $0xf8] sm:$0xff]
        %s2436 = scalar_lea.vmem [#allocation12], 32
        %v2437 = vld [vmem:[%s2436] sm:$0xff]
        %v2438 = vld [vmem:[%s2436 + $0x8] sm:$0xf]
        %v2440 = vsel %vm1608, %v2404, 0
        %v2443 = vsel %vm1608, %v2405, 0
        %v2446 = vsel %vm1608, %v2406, 0
        %v2449 = vsel %vm1608, %v2407, 0
        %v2452 = vsel %vm1608, %v2408, 0
        %v2455 = vsel %vm1608, %v2409, 0
        %v2458 = vsel %vm1608, %v2410, 0
        %v2461 = vsel %vm1608, %v2411, 0
        %v2464 = vsel %vm1608, %v2412, 0
        %v2467 = vsel %vm1608, %v2413, 0
        %v2470 = vsel %vm1608, %v2414, 0
        %v2473 = vsel %vm1608, %v2415, 0
        %v2476 = vsel %vm1608, %v2416, 0
        %v2479 = vsel %vm1608, %v2417, 0
        %v2482 = vsel %vm1608, %v2418, 0
        %v2485 = vsel %vm1608, %v2419, 0
        %v2488 = vsel %vm1608, %v2420, 0
        %v2491 = vsel %vm1608, %v2421, 0
        %v2494 = vsel %vm1608, %v2422, 0
        %v2497 = vsel %vm1608, %v2423, 0
        %v2500 = vsel %vm1608, %v2424, 0
        %v2503 = vsel %vm1608, %v2425, 0
        %v2506 = vsel %vm1608, %v2426, 0
        %v2509 = vsel %vm1608, %v2427, 0
        %v2512 = vsel %vm1608, %v2428, 0
        %v2515 = vsel %vm1608, %v2429, 0
        %v2518 = vsel %vm1608, %v2430, 0
        %v2521 = vsel %vm1608, %v2431, 0
        %v2524 = vsel %vm1608, %v2432, 0
        %v2527 = vsel %vm1608, %v2433, 0
        %v2530 = vsel %vm1608, %v2434, 0
        %v2533 = vsel %vm1608, %v2435, 0
        %v2536 = vsel %vm1782, %v2438, 0
        %2538 = vmatprep.subr.mxu0 0.0
        %2539 = vmatpush1.msra.mxu0 %v2437
        %2540 = vmatprep.subr.mxu0 0.0
        %2541 = vmatpush1.msra.mxu0 %v2536
        %2542 = vmatprep.subr.mxu0 0.0
        %2543 = vmatpush1.msra.mxu0 0.0
        %2544 = vmatprep.subr.mxu0 0.0
        %2545 = vmatpush1.msra.mxu0 0.0
        %2546 = vmatprep.subr.mxu0 0.0
        %2547 = vmatpush1.msra.mxu0 0.0
        %2548 = vmatprep.subr.mxu0 0.0
        %2549 = vmatpush1.msra.mxu0 0.0
        %2550 = vmatprep.subr.mxu0 0.0
        %2551 = vmatpush1.msra.mxu0 0.0
        %2552 = vmatprep.subr.mxu0 0.0
        %2553 = vmatpush1.msra.mxu0 0.0
        %2554 = vmatprep.subr.mxu0 0.0
        %2555 = vmatpush1.msra.mxu0 0.0
        %2556 = vmatprep.subr.mxu0 0.0
        %2557 = vmatpush1.msra.mxu0 0.0
        %2558 = vmatprep.subr.mxu0 0.0
        %2559 = vmatpush1.msra.mxu0 0.0
        %2560 = vmatprep.subr.mxu0 0.0
        %2561 = vmatpush1.msra.mxu0 0.0
        %2562 = vmatprep.subr.mxu0 0.0
        %2563 = vmatpush1.msra.mxu0 0.0
        %2564 = vmatprep.subr.mxu0 0.0
        %2565 = vmatpush1.msra.mxu0 0.0
        %2566 = vmatprep.subr.mxu0 0.0
        %2567 = vmatpush1.msra.mxu0 0.0
        %2568 = vmatprep.subr.mxu0 0.0
        %2569 = vmatpush1.msra.mxu0 0.0
        %2570 = vmatprep.subr.mxu0 0.0
        %2571 = vmatpush1.msra.mxu0 0.0
        %2572 = vmatprep.subr.mxu0 0.0
        %2573 = vmatpush1.msra.mxu0 0.0
        %2574 = vmatprep.subr.mxu0 0.0
        %2575 = vmatpush1.msra.mxu0 0.0
        %2576 = vmatprep.subr.mxu0 0.0
        %2577 = vmatpush1.msra.mxu0 0.0
        %2578 = vmatprep.subr.mxu0 0.0
        %2579 = vmatpush1.msra.mxu0 0.0
        %2580 = vmatprep.subr.mxu0 0.0
        %2581 = vmatpush1.msra.mxu0 0.0
        %2582 = vmatprep.subr.mxu0 0.0
        %2583 = vmatpush1.msra.mxu0 0.0
        %2584 = vmatprep.subr.mxu0 0.0
        %2585 = vmatpush1.msra.mxu0 0.0
        %2586 = vmatprep.subr.mxu0 0.0
        %2587 = vmatpush1.msra.mxu0 0.0
        %2588 = vmatprep.subr.mxu0 0.0
        %2589 = vmatpush1.msra.mxu0 0.0
        %2590 = vmatprep.subr.mxu0 0.0
        %2591 = vmatpush1.msra.mxu0 0.0
        %2592 = vmatprep.subr.mxu0 0.0
        %2593 = vmatpush1.msra.mxu0 0.0
        %2594 = vmatprep.subr.mxu0 0.0
        %2595 = vmatpush1.msra.mxu0 0.0
        %2596 = vmatprep.subr.mxu0 0.0
        %2597 = vmatpush1.msra.mxu0 0.0
        %2598 = vmatprep.subr.mxu0 0.0
        %2599 = vmatpush1.msra.mxu0 0.0
        %2600 = vmatprep.subr.mxu0 0.0
        %2601 = vmatpush1.msra.mxu0 0.0
        %2602 = vmatprep.mubr.f32.mxu0 0.0
        %2603 = vmatmul.mubr.f32.gmra.mrb[0].mxu0 %v2440
        %v2604 = vpop.f32.mrb[0].mxu0
        %v2605 = vadd.f32 0.0, %v2604
        %v2606 = vpop.f32.mrb[0].mxu0
        %2607 = vmatprep.mubr.f32.mxu0 0.0
        %2608 = vmatmul.mubr.f32.gmra.mrb[0].mxu0 %v2443
        %v2609 = vpop.f32.mrb[0].mxu0
        %v2610 = vadd.f32 0.0, %v2609
        %v2611 = vpop.f32.mrb[0].mxu0
        %2612 = vmatprep.mubr.f32.mxu0 0.0
        %2613 = vmatmul.mubr.f32.gmra.mrb[0].mxu0 %v2446
        %v2614 = vpop.f32.mrb[0].mxu0
        %v2615 = vadd.f32 0.0, %v2614
        %v2616 = vpop.f32.mrb[0].mxu0
        %2617 = vmatprep.mubr.f32.mxu0 0.0
        %2618 = vmatmul.mubr.f32.gmra.mrb[0].mxu0 %v2449
        %v2619 = vpop.f32.mrb[0].mxu0
        %v2620 = vadd.f32 0.0, %v2619
        %v2621 = vpop.f32.mrb[0].mxu0
        %2622 = vmatprep.mubr.f32.mxu0 0.0
        %2623 = vmatmul.mubr.f32.gmra.mrb[0].mxu0 %v2452
        %v2624 = vpop.f32.mrb[0].mxu0
        %v2625 = vadd.f32 0.0, %v2624
        %v2626 = vpop.f32.mrb[0].mxu0
        %2627 = vmatprep.mubr.f32.mxu0 0.0
        %2628 = vmatmul.mubr.f32.gmra.mrb[0].mxu0 %v2455
        %v2629 = vpop.f32.mrb[0].mxu0
        %v2630 = vadd.f32 0.0, %v2629
        %v2631 = vpop.f32.mrb[0].mxu0
        %2632 = vmatprep.mubr.f32.mxu0 0.0
        %2633 = vmatmul.mubr.f32.gmra.mrb[0].mxu0 %v2458
        %v2634 = vpop.f32.mrb[0].mxu0
        %v2635 = vadd.f32 0.0, %v2634
        %v2636 = vpop.f32.mrb[0].mxu0
        %2637 = vmatprep.mubr.f32.mxu0 0.0
        %2638 = vmatmul.mubr.f32.gmra.mrb[0].mxu0 %v2461
        %v2639 = vpop.f32.mrb[0].mxu0
        %v2640 = vadd.f32 0.0, %v2639
        %v2641 = vpop.f32.mrb[0].mxu0
        %2642 = vmatprep.mubr.f32.mxu0 0.0
        %2643 = vmatmul.mubr.f32.gmra.mrb[0].mxu0 %v2464
        %v2644 = vpop.f32.mrb[0].mxu0
        %v2645 = vadd.f32 0.0, %v2644
        %v2646 = vpop.f32.mrb[0].mxu0
        %2647 = vmatprep.mubr.f32.mxu0 0.0
        %2648 = vmatmul.mubr.f32.gmra.mrb[0].mxu0 %v2467
        %v2649 = vpop.f32.mrb[0].mxu0
        %v2650 = vadd.f32 0.0, %v2649
        %v2651 = vpop.f32.mrb[0].mxu0
        %2652 = vmatprep.mubr.f32.mxu0 0.0
        %2653 = vmatmul.mubr.f32.gmra.mrb[0].mxu0 %v2470
        %v2654 = vpop.f32.mrb[0].mxu0
        %v2655 = vadd.f32 0.0, %v2654
        %v2656 = vpop.f32.mrb[0].mxu0
        %2657 = vmatprep.mubr.f32.mxu0 0.0
        %2658 = vmatmul.mubr.f32.gmra.mrb[0].mxu0 %v2473
        %v2659 = vpop.f32.mrb[0].mxu0
        %v2660 = vadd.f32 0.0, %v2659
        %v2661 = vpop.f32.mrb[0].mxu0
        %2662 = vmatprep.mubr.f32.mxu0 0.0
        %2663 = vmatmul.mubr.f32.gmra.mrb[0].mxu0 %v2476
        %v2664 = vpop.f32.mrb[0].mxu0
        %v2665 = vadd.f32 0.0, %v2664
        %v2666 = vpop.f32.mrb[0].mxu0
        %2667 = vmatprep.mubr.f32.mxu0 0.0
        %2668 = vmatmul.mubr.f32.gmra.mrb[0].mxu0 %v2479
        %v2669 = vpop.f32.mrb[0].mxu0
        %v2670 = vadd.f32 0.0, %v2669
        %v2671 = vpop.f32.mrb[0].mxu0
        %2672 = vmatprep.mubr.f32.mxu0 0.0
        %2673 = vmatmul.mubr.f32.gmra.mrb[0].mxu0 %v2482
        %v2674 = vpop.f32.mrb[0].mxu0
        %v2675 = vadd.f32 0.0, %v2674
        %v2676 = vpop.f32.mrb[0].mxu0
        %2677 = vmatprep.mubr.f32.mxu0 0.0
        %2678 = vmatmul.mubr.f32.gmra.mrb[0].mxu0 %v2485
        %v2679 = vpop.f32.mrb[0].mxu0
        %v2680 = vadd.f32 0.0, %v2679
        %v2681 = vpop.f32.mrb[0].mxu0
        %2682 = vmatprep.mubr.f32.mxu0 0.0
        %2683 = vmatmul.mubr.f32.gmra.mrb[0].mxu0 %v2488
        %v2684 = vpop.f32.mrb[0].mxu0
        %v2685 = vadd.f32 0.0, %v2684
        %v2686 = vpop.f32.mrb[0].mxu0
        %2687 = vmatprep.mubr.f32.mxu0 0.0
        %2688 = vmatmul.mubr.f32.gmra.mrb[0].mxu0 %v2491
        %v2689 = vpop.f32.mrb[0].mxu0
        %v2690 = vadd.f32 0.0, %v2689
        %v2691 = vpop.f32.mrb[0].mxu0
        %2692 = vmatprep.mubr.f32.mxu0 0.0
        %2693 = vmatmul.mubr.f32.gmra.mrb[0].mxu0 %v2494
        %v2694 = vpop.f32.mrb[0].mxu0
        %v2695 = vadd.f32 0.0, %v2694
        %v2696 = vpop.f32.mrb[0].mxu0
        %2697 = vmatprep.mubr.f32.mxu0 0.0
        %2698 = vmatmul.mubr.f32.gmra.mrb[0].mxu0 %v2497
        %v2699 = vpop.f32.mrb[0].mxu0
        %v2700 = vadd.f32 0.0, %v2699
        %v2701 = vpop.f32.mrb[0].mxu0
        %2702 = vmatprep.mubr.f32.mxu0 0.0
        %2703 = vmatmul.mubr.f32.gmra.mrb[0].mxu0 %v2500
        %v2704 = vpop.f32.mrb[0].mxu0
        %v2705 = vadd.f32 0.0, %v2704
        %v2706 = vpop.f32.mrb[0].mxu0
        %2707 = vmatprep.mubr.f32.mxu0 0.0
        %2708 = vmatmul.mubr.f32.gmra.mrb[0].mxu0 %v2503
        %v2709 = vpop.f32.mrb[0].mxu0
        %v2710 = vadd.f32 0.0, %v2709
        %v2711 = vpop.f32.mrb[0].mxu0
        %2712 = vmatprep.mubr.f32.mxu0 0.0
        %2713 = vmatmul.mubr.f32.gmra.mrb[0].mxu0 %v2506
        %v2714 = vpop.f32.mrb[0].mxu0
        %v2715 = vadd.f32 0.0, %v2714
        %v2716 = vpop.f32.mrb[0].mxu0
        %2717 = vmatprep.mubr.f32.mxu0 0.0
        %2718 = vmatmul.mubr.f32.gmra.mrb[0].mxu0 %v2509
        %v2719 = vpop.f32.mrb[0].mxu0
        %v2720 = vadd.f32 0.0, %v2719
        %v2721 = vpop.f32.mrb[0].mxu0
        %2722 = vmatprep.mubr.f32.mxu0 0.0
        %2723 = vmatmul.mubr.f32.gmra.mrb[0].mxu0 %v2512
        %v2724 = vpop.f32.mrb[0].mxu0
        %v2725 = vadd.f32 0.0, %v2724
        %v2726 = vpop.f32.mrb[0].mxu0
        %2727 = vmatprep.mubr.f32.mxu0 0.0
        %2728 = vmatmul.mubr.f32.gmra.mrb[0].mxu0 %v2515
        %v2729 = vpop.f32.mrb[0].mxu0
        %v2730 = vadd.f32 0.0, %v2729
        %v2731 = vpop.f32.mrb[0].mxu0
        %2732 = vmatprep.mubr.f32.mxu0 0.0
        %2733 = vmatmul.mubr.f32.gmra.mrb[0].mxu0 %v2518
        %v2734 = vpop.f32.mrb[0].mxu0
        %v2735 = vadd.f32 0.0, %v2734
        %v2736 = vpop.f32.mrb[0].mxu0
        %2737 = vmatprep.mubr.f32.mxu0 0.0
        %2738 = vmatmul.mubr.f32.gmra.mrb[0].mxu0 %v2521
        %v2739 = vpop.f32.mrb[0].mxu0
        %v2740 = vadd.f32 0.0, %v2739
        %v2741 = vpop.f32.mrb[0].mxu0
        %2742 = vmatprep.mubr.f32.mxu0 0.0
        %2743 = vmatmul.mubr.f32.gmra.mrb[0].mxu0 %v2524
        %v2744 = vpop.f32.mrb[0].mxu0
        %v2745 = vadd.f32 0.0, %v2744
        %v2746 = vpop.f32.mrb[0].mxu0
        %2747 = vmatprep.mubr.f32.mxu0 0.0
        %2748 = vmatmul.mubr.f32.gmra.mrb[0].mxu0 %v2527
        %v2749 = vpop.f32.mrb[0].mxu0
        %v2750 = vadd.f32 0.0, %v2749
        %v2751 = vpop.f32.mrb[0].mxu0
        %2752 = vmatprep.mubr.f32.mxu0 0.0
        %2753 = vmatmul.mubr.f32.gmra.mrb[0].mxu0 %v2530
        %v2754 = vpop.f32.mrb[0].mxu0
        %v2755 = vadd.f32 0.0, %v2754
        %v2756 = vpop.f32.mrb[0].mxu0
        %2757 = vmatprep.mubr.f32.mxu0 0.0
        %2758 = vmatmul.mubr.f32.gmra.mrb[0].mxu0 %v2533
        %v2759 = vpop.f32.mrb[0].mxu0
        %v2760 = vadd.f32 0.0, %v2759
        %v2761 = vpop.f32.mrb[0].mxu0
        %2762 = vdwg.mxu0
        %v2763 = vadd.f32 %v2371, %v2605
        %v2764 = vadd.f32 %v2372, %v2610
        %v2765 = vadd.f32 %v2373, %v2615
        %v2766 = vadd.f32 %v2374, %v2620
        %v2767 = vadd.f32 %v2375, %v2625
        %v2768 = vadd.f32 %v2376, %v2630
        %v2769 = vadd.f32 %v2377, %v2635
        %v2770 = vadd.f32 %v2378, %v2640
        %v2771 = vadd.f32 %v2379, %v2645
        %v2772 = vadd.f32 %v2380, %v2650
        %v2773 = vadd.f32 %v2381, %v2655
        %v2774 = vadd.f32 %v2382, %v2660
        %v2775 = vadd.f32 %v2383, %v2665
        %v2776 = vadd.f32 %v2384, %v2670
        %v2777 = vadd.f32 %v2385, %v2675
        %v2778 = vadd.f32 %v2386, %v2680
        %v2779 = vadd.f32 %v2387, %v2685
        %v2780 = vadd.f32 %v2388, %v2690
        %v2781 = vadd.f32 %v2389, %v2695
        %v2782 = vadd.f32 %v2390, %v2700
        %v2783 = vadd.f32 %v2391, %v2705
        %v2784 = vadd.f32 %v2392, %v2710
        %v2785 = vadd.f32 %v2393, %v2715
        %v2786 = vadd.f32 %v2394, %v2720
        %v2787 = vadd.f32 %v2395, %v2725
        %v2788 = vadd.f32 %v2396, %v2730
        %v2789 = vadd.f32 %v2397, %v2735
        %v2790 = vadd.f32 %v2398, %v2740
        %v2791 = vadd.f32 %v2399, %v2745
        %v2792 = vadd.f32 %v2400, %v2750
        %v2793 = vadd.f32 %v2401, %v2755
        %v2794 = vadd.f32 %v2402, %v2760
        %vm2795 = vcmp.gt.f32.partialorder %v2763, 0.0
        %vm2796 = vcmp.gt.f32.partialorder %v2764, 0.0
        %vm2797 = vcmp.gt.f32.partialorder %v2765, 0.0
        %vm2798 = vcmp.gt.f32.partialorder %v2766, 0.0
        %vm2799 = vcmp.gt.f32.partialorder %v2767, 0.0
        %vm2800 = vcmp.gt.f32.partialorder %v2768, 0.0
        %vm2801 = vcmp.gt.f32.partialorder %v2769, 0.0
        %vm2802 = vcmp.gt.f32.partialorder %v2770, 0.0
        %vm2803 = vcmp.gt.f32.partialorder %v2771, 0.0
        %vm2804 = vcmp.gt.f32.partialorder %v2772, 0.0
        %vm2805 = vcmp.gt.f32.partialorder %v2773, 0.0
        %vm2806 = vcmp.gt.f32.partialorder %v2774, 0.0
        %vm2807 = vcmp.gt.f32.partialorder %v2775, 0.0
        %vm2808 = vcmp.gt.f32.partialorder %v2776, 0.0
        %vm2809 = vcmp.gt.f32.partialorder %v2777, 0.0
        %vm2810 = vcmp.gt.f32.partialorder %v2778, 0.0
        %vm2811 = vcmp.gt.f32.partialorder %v2779, 0.0
        %vm2812 = vcmp.gt.f32.partialorder %v2780, 0.0
        %vm2813 = vcmp.gt.f32.partialorder %v2781, 0.0
        %vm2814 = vcmp.gt.f32.partialorder %v2782, 0.0
        %vm2815 = vcmp.gt.f32.partialorder %v2783, 0.0
        %vm2816 = vcmp.gt.f32.partialorder %v2784, 0.0
        %vm2817 = vcmp.gt.f32.partialorder %v2785, 0.0
        %vm2818 = vcmp.gt.f32.partialorder %v2786, 0.0
        %vm2819 = vcmp.gt.f32.partialorder %v2787, 0.0
        %vm2820 = vcmp.gt.f32.partialorder %v2788, 0.0
        %vm2821 = vcmp.gt.f32.partialorder %v2789, 0.0
        %vm2822 = vcmp.gt.f32.partialorder %v2790, 0.0
        %vm2823 = vcmp.gt.f32.partialorder %v2791, 0.0
        %vm2824 = vcmp.gt.f32.partialorder %v2792, 0.0
        %vm2825 = vcmp.gt.f32.partialorder %v2793, 0.0
        %vm2826 = vcmp.gt.f32.partialorder %v2794, 0.0
        %v2827 = vmul.f32 %v2763, 0.01
        %v2828 = vmul.f32 %v2764, 0.01
        %v2829 = vmul.f32 %v2765, 0.01
        %v2830 = vmul.f32 %v2766, 0.01
        %v2831 = vmul.f32 %v2767, 0.01
        %v2832 = vmul.f32 %v2768, 0.01
        %v2833 = vmul.f32 %v2769, 0.01
        %v2834 = vmul.f32 %v2770, 0.01
        %v2835 = vmul.f32 %v2771, 0.01
        %v2836 = vmul.f32 %v2772, 0.01
        %v2837 = vmul.f32 %v2773, 0.01
        %v2838 = vmul.f32 %v2774, 0.01
        %v2839 = vmul.f32 %v2775, 0.01
        %v2840 = vmul.f32 %v2776, 0.01
        %v2841 = vmul.f32 %v2777, 0.01
        %v2842 = vmul.f32 %v2778, 0.01
        %v2843 = vmul.f32 %v2779, 0.01
        %v2844 = vmul.f32 %v2780, 0.01
        %v2845 = vmul.f32 %v2781, 0.01
        %v2846 = vmul.f32 %v2782, 0.01
        %v2847 = vmul.f32 %v2783, 0.01
        %v2848 = vmul.f32 %v2784, 0.01
        %v2849 = vmul.f32 %v2785, 0.01
        %v2850 = vmul.f32 %v2786, 0.01
        %v2851 = vmul.f32 %v2787, 0.01
        %v2852 = vmul.f32 %v2788, 0.01
        %v2853 = vmul.f32 %v2789, 0.01
        %v2854 = vmul.f32 %v2790, 0.01
        %v2855 = vmul.f32 %v2791, 0.01
        %v2856 = vmul.f32 %v2792, 0.01
        %v2857 = vmul.f32 %v2793, 0.01
        %v2858 = vmul.f32 %v2794, 0.01
        %v2859 = vsel %vm2795, %v2763, %v2827
        %v2860 = vsel %vm2796, %v2764, %v2828
        %v2861 = vsel %vm2797, %v2765, %v2829
        %v2862 = vsel %vm2798, %v2766, %v2830
        %v2863 = vsel %vm2799, %v2767, %v2831
        %v2864 = vsel %vm2800, %v2768, %v2832
        %v2865 = vsel %vm2801, %v2769, %v2833
        %v2866 = vsel %vm2802, %v2770, %v2834
        %v2867 = vsel %vm2803, %v2771, %v2835
        %v2868 = vsel %vm2804, %v2772, %v2836
        %v2869 = vsel %vm2805, %v2773, %v2837
        %v2870 = vsel %vm2806, %v2774, %v2838
        %v2871 = vsel %vm2807, %v2775, %v2839
        %v2872 = vsel %vm2808, %v2776, %v2840
        %v2873 = vsel %vm2809, %v2777, %v2841
        %v2874 = vsel %vm2810, %v2778, %v2842
        %v2875 = vsel %vm2811, %v2779, %v2843
        %v2876 = vsel %vm2812, %v2780, %v2844
        %v2877 = vsel %vm2813, %v2781, %v2845
        %v2878 = vsel %vm2814, %v2782, %v2846
        %v2879 = vsel %vm2815, %v2783, %v2847
        %v2880 = vsel %vm2816, %v2784, %v2848
        %v2881 = vsel %vm2817, %v2785, %v2849
        %v2882 = vsel %vm2818, %v2786, %v2850
        %v2883 = vsel %vm2819, %v2787, %v2851
        %v2884 = vsel %vm2820, %v2788, %v2852
        %v2885 = vsel %vm2821, %v2789, %v2853
        %v2886 = vsel %vm2822, %v2790, %v2854
        %v2887 = vsel %vm2823, %v2791, %v2855
        %v2888 = vsel %vm2824, %v2792, %v2856
        %v2889 = vsel %vm2825, %v2793, %v2857
        %v2890 = vsel %vm2826, %v2794, %v2858
        %2923 = vrot.lane.b32.xlu0 %v2859, 8
        %v2924 = vpop.permute.xlu0 %2923
        %2925 = vrot.lane.b32.xlu0 %v2860, 8
        %v2926 = vpop.permute.xlu0 %2925
        %2927 = vrot.lane.b32.xlu0 %v2861, 8
        %v2928 = vpop.permute.xlu0 %2927
        %2929 = vrot.lane.b32.xlu0 %v2862, 8
        %v2930 = vpop.permute.xlu0 %2929
        %2931 = vrot.lane.b32.xlu0 %v2863, 8
        %v2932 = vpop.permute.xlu0 %2931
        %2933 = vrot.lane.b32.xlu0 %v2864, 8
        %v2934 = vpop.permute.xlu0 %2933
        %2935 = vrot.lane.b32.xlu0 %v2865, 8
        %v2936 = vpop.permute.xlu0 %2935
        %2937 = vrot.lane.b32.xlu0 %v2866, 8
        %v2938 = vpop.permute.xlu0 %2937
        %2939 = vrot.lane.b32.xlu0 %v2867, 8
        %v2940 = vpop.permute.xlu0 %2939
        %2941 = vrot.lane.b32.xlu0 %v2868, 8
        %v2942 = vpop.permute.xlu0 %2941
        %2943 = vrot.lane.b32.xlu0 %v2869, 8
        %v2944 = vpop.permute.xlu0 %2943
        %2945 = vrot.lane.b32.xlu0 %v2870, 8
        %v2946 = vpop.permute.xlu0 %2945
        %2947 = vrot.lane.b32.xlu0 %v2871, 8
        %v2948 = vpop.permute.xlu0 %2947
        %2949 = vrot.lane.b32.xlu0 %v2872, 8
        %v2950 = vpop.permute.xlu0 %2949
        %2951 = vrot.lane.b32.xlu0 %v2873, 8
        %v2952 = vpop.permute.xlu0 %2951
        %2953 = vrot.lane.b32.xlu0 %v2874, 8
        %v2954 = vpop.permute.xlu0 %2953
        %2955 = vrot.lane.b32.xlu0 %v2875, 8
        %v2956 = vpop.permute.xlu0 %2955
        %2957 = vrot.lane.b32.xlu0 %v2876, 8
        %v2958 = vpop.permute.xlu0 %2957
        %2959 = vrot.lane.b32.xlu0 %v2877, 8
        %v2960 = vpop.permute.xlu0 %2959
        %2961 = vrot.lane.b32.xlu0 %v2878, 8
        %v2962 = vpop.permute.xlu0 %2961
        %2963 = vrot.lane.b32.xlu0 %v2879, 8
        %v2964 = vpop.permute.xlu0 %2963
        %2965 = vrot.lane.b32.xlu0 %v2880, 8
        %v2966 = vpop.permute.xlu0 %2965
        %2967 = vrot.lane.b32.xlu0 %v2881, 8
        %v2968 = vpop.permute.xlu0 %2967
        %2969 = vrot.lane.b32.xlu0 %v2882, 8
        %v2970 = vpop.permute.xlu0 %2969
        %2971 = vrot.lane.b32.xlu0 %v2883, 8
        %v2972 = vpop.permute.xlu0 %2971
        %2973 = vrot.lane.b32.xlu0 %v2884, 8
        %v2974 = vpop.permute.xlu0 %2973
        %2975 = vrot.lane.b32.xlu0 %v2885, 8
        %v2976 = vpop.permute.xlu0 %2975
        %2977 = vrot.lane.b32.xlu0 %v2886, 8
        %v2978 = vpop.permute.xlu0 %2977
        %2979 = vrot.lane.b32.xlu0 %v2887, 8
        %v2980 = vpop.permute.xlu0 %2979
        %2981 = vrot.lane.b32.xlu0 %v2888, 8
        %v2982 = vpop.permute.xlu0 %2981
        %2983 = vrot.lane.b32.xlu0 %v2889, 8
        %v2984 = vpop.permute.xlu0 %2983
        %2985 = vrot.lane.b32.xlu0 %v2890, 8
        %v2986 = vpop.permute.xlu0 %2985
        %v3019 = vsel %vm757, %v717, %v2924
        %v3020 = vsel %vm757, %v718, %v2926
        %v3021 = vsel %vm757, %v719, %v2928
        %v3022 = vsel %vm757, %v720, %v2930
        %v3023 = vsel %vm757, %v721, %v2932
        %v3024 = vsel %vm757, %v722, %v2934
        %v3025 = vsel %vm757, %v723, %v2936
        %v3026 = vsel %vm757, %v724, %v2938
        %v3027 = vsel %vm757, %v725, %v2940
        %v3028 = vsel %vm757, %v726, %v2942
        %v3029 = vsel %vm757, %v727, %v2944
        %v3030 = vsel %vm757, %v728, %v2946
        %v3031 = vsel %vm757, %v729, %v2948
        %v3032 = vsel %vm757, %v730, %v2950
        %v3033 = vsel %vm757, %v731, %v2952
        %v3034 = vsel %vm757, %v732, %v2954
        %v3035 = vsel %vm757, %v733, %v2956
        %v3036 = vsel %vm757, %v734, %v2958
        %v3037 = vsel %vm757, %v735, %v2960
        %v3038 = vsel %vm757, %v736, %v2962
        %v3039 = vsel %vm757, %v737, %v2964
        %v3040 = vsel %vm757, %v738, %v2966
        %v3041 = vsel %vm757, %v739, %v2968
        %v3042 = vsel %vm757, %v740, %v2970
        %v3043 = vsel %vm757, %v741, %v2972
        %v3044 = vsel %vm757, %v742, %v2974
        %v3045 = vsel %vm757, %v743, %v2976
        %v3046 = vsel %vm757, %v744, %v2978
        %v3047 = vsel %vm757, %v745, %v2980
        %v3048 = vsel %vm757, %v746, %v2982
        %v3049 = vsel %vm757, %v747, %v2984
        %v3050 = vsel %vm757, %v748, %v2986
        %v3051 = vld [vmem:[#allocation15] sm:$0xff]
        %v3052 = vld [vmem:[#allocation15 + $0x8] sm:$0xf]
        %v3053 = vld [vmem:[#allocation16] sm:$0x1]
        %v3055 = vlaneseq
        %v3056 = vshrl.u32 %v3055, 7
        %v3057 = vsub.s32 0, %v3056
        %v3058 = vrot.slane %v3053, %v3057
        %v3061 = vsel %vm1608, %v3019, 0
        %v3064 = vsel %vm1608, %v3020, 0
        %v3067 = vsel %vm1608, %v3021, 0
        %v3070 = vsel %vm1608, %v3022, 0
        %v3073 = vsel %vm1608, %v3023, 0
        %v3076 = vsel %vm1608, %v3024, 0
        %v3079 = vsel %vm1608, %v3025, 0
        %v3082 = vsel %vm1608, %v3026, 0
        %v3085 = vsel %vm1608, %v3027, 0
        %v3088 = vsel %vm1608, %v3028, 0
        %v3091 = vsel %vm1608, %v3029, 0
        %v3094 = vsel %vm1608, %v3030, 0
        %v3097 = vsel %vm1608, %v3031, 0
        %v3100 = vsel %vm1608, %v3032, 0
        %v3103 = vsel %vm1608, %v3033, 0
        %v3106 = vsel %vm1608, %v3034, 0
        %v3109 = vsel %vm1608, %v3035, 0
        %v3112 = vsel %vm1608, %v3036, 0
        %v3115 = vsel %vm1608, %v3037, 0
        %v3118 = vsel %vm1608, %v3038, 0
        %v3121 = vsel %vm1608, %v3039, 0
        %v3124 = vsel %vm1608, %v3040, 0
        %v3127 = vsel %vm1608, %v3041, 0
        %v3130 = vsel %vm1608, %v3042, 0
        %v3133 = vsel %vm1608, %v3043, 0
        %v3136 = vsel %vm1608, %v3044, 0
        %v3139 = vsel %vm1608, %v3045, 0
        %v3142 = vsel %vm1608, %v3046, 0
        %v3145 = vsel %vm1608, %v3047, 0
        %v3148 = vsel %vm1608, %v3048, 0
        %v3151 = vsel %vm1608, %v3049, 0
        %v3154 = vsel %vm1608, %v3050, 0
        %v3157 = vsel %vm1782, %v3052, 0
        %3159 = vmatprep.subr.mxu0 0.0
        %3160 = vmatpush1.msra.mxu0 %v3051
        %3161 = vmatprep.subr.mxu0 0.0
        %3162 = vmatpush1.msra.mxu0 %v3157
        %3163 = vmatprep.subr.mxu0 0.0
        %3164 = vmatpush1.msra.mxu0 0.0
        %3165 = vmatprep.subr.mxu0 0.0
        %3166 = vmatpush1.msra.mxu0 0.0
        %3167 = vmatprep.subr.mxu0 0.0
        %3168 = vmatpush1.msra.mxu0 0.0
        %3169 = vmatprep.subr.mxu0 0.0
        %3170 = vmatpush1.msra.mxu0 0.0
        %3171 = vmatprep.subr.mxu0 0.0
        %3172 = vmatpush1.msra.mxu0 0.0
        %3173 = vmatprep.subr.mxu0 0.0
        %3174 = vmatpush1.msra.mxu0 0.0
        %3175 = vmatprep.subr.mxu0 0.0
        %3176 = vmatpush1.msra.mxu0 0.0
        %3177 = vmatprep.subr.mxu0 0.0
        %3178 = vmatpush1.msra.mxu0 0.0
        %3179 = vmatprep.subr.mxu0 0.0
        %3180 = vmatpush1.msra.mxu0 0.0
        %3181 = vmatprep.subr.mxu0 0.0
        %3182 = vmatpush1.msra.mxu0 0.0
        %3183 = vmatprep.subr.mxu0 0.0
        %3184 = vmatpush1.msra.mxu0 0.0
        %3185 = vmatprep.subr.mxu0 0.0
        %3186 = vmatpush1.msra.mxu0 0.0
        %3187 = vmatprep.subr.mxu0 0.0
        %3188 = vmatpush1.msra.mxu0 0.0
        %3189 = vmatprep.subr.mxu0 0.0
        %3190 = vmatpush1.msra.mxu0 0.0
        %3191 = vmatprep.subr.mxu0 0.0
        %3192 = vmatpush1.msra.mxu0 0.0
        %3193 = vmatprep.subr.mxu0 0.0
        %3194 = vmatpush1.msra.mxu0 0.0
        %3195 = vmatprep.subr.mxu0 0.0
        %3196 = vmatpush1.msra.mxu0 0.0
        %3197 = vmatprep.subr.mxu0 0.0
        %3198 = vmatpush1.msra.mxu0 0.0
        %3199 = vmatprep.subr.mxu0 0.0
        %3200 = vmatpush1.msra.mxu0 0.0
        %3201 = vmatprep.subr.mxu0 0.0
        %3202 = vmatpush1.msra.mxu0 0.0
        %3203 = vmatprep.subr.mxu0 0.0
        %3204 = vmatpush1.msra.mxu0 0.0
        %3205 = vmatprep.subr.mxu0 0.0
        %3206 = vmatpush1.msra.mxu0 0.0
        %3207 = vmatprep.subr.mxu0 0.0
        %3208 = vmatpush1.msra.mxu0 0.0
        %3209 = vmatprep.subr.mxu0 0.0
        %3210 = vmatpush1.msra.mxu0 0.0
        %3211 = vmatprep.subr.mxu0 0.0
        %3212 = vmatpush1.msra.mxu0 0.0
        %3213 = vmatprep.subr.mxu0 0.0
        %3214 = vmatpush1.msra.mxu0 0.0
        %3215 = vmatprep.subr.mxu0 0.0
        %3216 = vmatpush1.msra.mxu0 0.0
        %3217 = vmatprep.subr.mxu0 0.0
        %3218 = vmatpush1.msra.mxu0 0.0
        %3219 = vmatprep.subr.mxu0 0.0
        %3220 = vmatpush1.msra.mxu0 0.0
        %3221 = vmatprep.subr.mxu0 0.0
        %3222 = vmatpush1.msra.mxu0 0.0
        %3223 = vmatprep.mubr.f32.mxu0 0.0
        %3224 = vmatmul.mubr.f32.gmra.mrb[0].mxu0 %v3061
        %v3225 = vpop.f32.mrb[0].mxu0
        %v3226 = vadd.f32 %v3058, %v3225
        %v3227 = vpop.f32.mrb[0].mxu0
        %3228 = vmatprep.mubr.f32.mxu0 0.0
        %3229 = vmatmul.mubr.f32.gmra.mrb[0].mxu0 %v3064
        %v3230 = vpop.f32.mrb[0].mxu0
        %v3231 = vadd.f32 %v3058, %v3230
        %v3232 = vpop.f32.mrb[0].mxu0
        %3233 = vmatprep.mubr.f32.mxu0 0.0
        %3234 = vmatmul.mubr.f32.gmra.mrb[0].mxu0 %v3067
        %v3235 = vpop.f32.mrb[0].mxu0
        %v3236 = vadd.f32 %v3058, %v3235
        %v3237 = vpop.f32.mrb[0].mxu0
        %3238 = vmatprep.mubr.f32.mxu0 0.0
        %3239 = vmatmul.mubr.f32.gmra.mrb[0].mxu0 %v3070
        %v3240 = vpop.f32.mrb[0].mxu0
        %v3241 = vadd.f32 %v3058, %v3240
        %v3242 = vpop.f32.mrb[0].mxu0
        %3243 = vmatprep.mubr.f32.mxu0 0.0
        %3244 = vmatmul.mubr.f32.gmra.mrb[0].mxu0 %v3073
        %v3245 = vpop.f32.mrb[0].mxu0
        %v3246 = vadd.f32 %v3058, %v3245
        %v3247 = vpop.f32.mrb[0].mxu0
        %3248 = vmatprep.mubr.f32.mxu0 0.0
        %3249 = vmatmul.mubr.f32.gmra.mrb[0].mxu0 %v3076
        %v3250 = vpop.f32.mrb[0].mxu0
        %v3251 = vadd.f32 %v3058, %v3250
        %v3252 = vpop.f32.mrb[0].mxu0
        %3253 = vmatprep.mubr.f32.mxu0 0.0
        %3254 = vmatmul.mubr.f32.gmra.mrb[0].mxu0 %v3079
        %v3255 = vpop.f32.mrb[0].mxu0
        %v3256 = vadd.f32 %v3058, %v3255
        %v3257 = vpop.f32.mrb[0].mxu0
        %3258 = vmatprep.mubr.f32.mxu0 0.0
        %3259 = vmatmul.mubr.f32.gmra.mrb[0].mxu0 %v3082
        %v3260 = vpop.f32.mrb[0].mxu0
        %v3261 = vadd.f32 %v3058, %v3260
        %v3262 = vpop.f32.mrb[0].mxu0
        %3263 = vmatprep.mubr.f32.mxu0 0.0
        %3264 = vmatmul.mubr.f32.gmra.mrb[0].mxu0 %v3085
        %v3265 = vpop.f32.mrb[0].mxu0
        %v3266 = vadd.f32 %v3058, %v3265
        %v3267 = vpop.f32.mrb[0].mxu0
        %3268 = vmatprep.mubr.f32.mxu0 0.0
        %3269 = vmatmul.mubr.f32.gmra.mrb[0].mxu0 %v3088
        %v3270 = vpop.f32.mrb[0].mxu0
        %v3271 = vadd.f32 %v3058, %v3270
        %v3272 = vpop.f32.mrb[0].mxu0
        %3273 = vmatprep.mubr.f32.mxu0 0.0
        %3274 = vmatmul.mubr.f32.gmra.mrb[0].mxu0 %v3091
        %v3275 = vpop.f32.mrb[0].mxu0
        %v3276 = vadd.f32 %v3058, %v3275
        %v3277 = vpop.f32.mrb[0].mxu0
        %3278 = vmatprep.mubr.f32.mxu0 0.0
        %3279 = vmatmul.mubr.f32.gmra.mrb[0].mxu0 %v3094
        %v3280 = vpop.f32.mrb[0].mxu0
        %v3281 = vadd.f32 %v3058, %v3280
        %v3282 = vpop.f32.mrb[0].mxu0
        %3283 = vmatprep.mubr.f32.mxu0 0.0
        %3284 = vmatmul.mubr.f32.gmra.mrb[0].mxu0 %v3097
        %v3285 = vpop.f32.mrb[0].mxu0
        %v3286 = vadd.f32 %v3058, %v3285
        %v3287 = vpop.f32.mrb[0].mxu0
        %3288 = vmatprep.mubr.f32.mxu0 0.0
        %3289 = vmatmul.mubr.f32.gmra.mrb[0].mxu0 %v3100
        %v3290 = vpop.f32.mrb[0].mxu0
        %v3291 = vadd.f32 %v3058, %v3290
        %v3292 = vpop.f32.mrb[0].mxu0
        %3293 = vmatprep.mubr.f32.mxu0 0.0
        %3294 = vmatmul.mubr.f32.gmra.mrb[0].mxu0 %v3103
        %v3295 = vpop.f32.mrb[0].mxu0
        %v3296 = vadd.f32 %v3058, %v3295
        %v3297 = vpop.f32.mrb[0].mxu0
        %3298 = vmatprep.mubr.f32.mxu0 0.0
        %3299 = vmatmul.mubr.f32.gmra.mrb[0].mxu0 %v3106
        %v3300 = vpop.f32.mrb[0].mxu0
        %v3301 = vadd.f32 %v3058, %v3300
        %v3302 = vpop.f32.mrb[0].mxu0
        %3303 = vmatprep.mubr.f32.mxu0 0.0
        %3304 = vmatmul.mubr.f32.gmra.mrb[0].mxu0 %v3109
        %v3305 = vpop.f32.mrb[0].mxu0
        %v3306 = vadd.f32 %v3058, %v3305
        %v3307 = vpop.f32.mrb[0].mxu0
        %3308 = vmatprep.mubr.f32.mxu0 0.0
        %3309 = vmatmul.mubr.f32.gmra.mrb[0].mxu0 %v3112
        %v3310 = vpop.f32.mrb[0].mxu0
        %v3311 = vadd.f32 %v3058, %v3310
        %v3312 = vpop.f32.mrb[0].mxu0
        %3313 = vmatprep.mubr.f32.mxu0 0.0
        %3314 = vmatmul.mubr.f32.gmra.mrb[0].mxu0 %v3115
        %v3315 = vpop.f32.mrb[0].mxu0
        %v3316 = vadd.f32 %v3058, %v3315
        %v3317 = vpop.f32.mrb[0].mxu0
        %3318 = vmatprep.mubr.f32.mxu0 0.0
        %3319 = vmatmul.mubr.f32.gmra.mrb[0].mxu0 %v3118
        %v3320 = vpop.f32.mrb[0].mxu0
        %v3321 = vadd.f32 %v3058, %v3320
        %v3322 = vpop.f32.mrb[0].mxu0
        %3323 = vmatprep.mubr.f32.mxu0 0.0
        %3324 = vmatmul.mubr.f32.gmra.mrb[0].mxu0 %v3121
        %v3325 = vpop.f32.mrb[0].mxu0
        %v3326 = vadd.f32 %v3058, %v3325
        %v3327 = vpop.f32.mrb[0].mxu0
        %3328 = vmatprep.mubr.f32.mxu0 0.0
        %3329 = vmatmul.mubr.f32.gmra.mrb[0].mxu0 %v3124
        %v3330 = vpop.f32.mrb[0].mxu0
        %v3331 = vadd.f32 %v3058, %v3330
        %v3332 = vpop.f32.mrb[0].mxu0
        %3333 = vmatprep.mubr.f32.mxu0 0.0
        %3334 = vmatmul.mubr.f32.gmra.mrb[0].mxu0 %v3127
        %v3335 = vpop.f32.mrb[0].mxu0
        %v3336 = vadd.f32 %v3058, %v3335
        %v3337 = vpop.f32.mrb[0].mxu0
        %3338 = vmatprep.mubr.f32.mxu0 0.0
        %3339 = vmatmul.mubr.f32.gmra.mrb[0].mxu0 %v3130
        %v3340 = vpop.f32.mrb[0].mxu0
        %v3341 = vadd.f32 %v3058, %v3340
        %v3342 = vpop.f32.mrb[0].mxu0
        %3343 = vmatprep.mubr.f32.mxu0 0.0
        %3344 = vmatmul.mubr.f32.gmra.mrb[0].mxu0 %v3133
        %v3345 = vpop.f32.mrb[0].mxu0
        %v3346 = vadd.f32 %v3058, %v3345
        %v3347 = vpop.f32.mrb[0].mxu0
        %3348 = vmatprep.mubr.f32.mxu0 0.0
        %3349 = vmatmul.mubr.f32.gmra.mrb[0].mxu0 %v3136
        %v3350 = vpop.f32.mrb[0].mxu0
        %v3351 = vadd.f32 %v3058, %v3350
        %v3352 = vpop.f32.mrb[0].mxu0
        %3353 = vmatprep.mubr.f32.mxu0 0.0
        %3354 = vmatmul.mubr.f32.gmra.mrb[0].mxu0 %v3139
        %v3355 = vpop.f32.mrb[0].mxu0
        %v3356 = vadd.f32 %v3058, %v3355
        %v3357 = vpop.f32.mrb[0].mxu0
        %3358 = vmatprep.mubr.f32.mxu0 0.0
        %3359 = vmatmul.mubr.f32.gmra.mrb[0].mxu0 %v3142
        %v3360 = vpop.f32.mrb[0].mxu0
        %v3361 = vadd.f32 %v3058, %v3360
        %v3362 = vpop.f32.mrb[0].mxu0
        %3363 = vmatprep.mubr.f32.mxu0 0.0
        %3364 = vmatmul.mubr.f32.gmra.mrb[0].mxu0 %v3145
        %v3365 = vpop.f32.mrb[0].mxu0
        %v3366 = vadd.f32 %v3058, %v3365
        %v3367 = vpop.f32.mrb[0].mxu0
        %3368 = vmatprep.mubr.f32.mxu0 0.0
        %3369 = vmatmul.mubr.f32.gmra.mrb[0].mxu0 %v3148
        %v3370 = vpop.f32.mrb[0].mxu0
        %v3371 = vadd.f32 %v3058, %v3370
        %v3372 = vpop.f32.mrb[0].mxu0
        %3373 = vmatprep.mubr.f32.mxu0 0.0
        %3374 = vmatmul.mubr.f32.gmra.mrb[0].mxu0 %v3151
        %v3375 = vpop.f32.mrb[0].mxu0
        %v3376 = vadd.f32 %v3058, %v3375
        %v3377 = vpop.f32.mrb[0].mxu0
        %3378 = vmatprep.mubr.f32.mxu0 0.0
        %3379 = vmatmul.mubr.f32.gmra.mrb[0].mxu0 %v3154
        %v3380 = vpop.f32.mrb[0].mxu0
        %v3381 = vadd.f32 %v3058, %v3380
        %v3382 = vpop.f32.mrb[0].mxu0
        %3383 = vdwg.mxu0
        %v3384 = vrot.slane %v3226, 7
        %v3385 = vrot.slane %v3236, 7
        %v3386 = vrot.slane %v3246, 7
        %v3387 = vrot.slane %v3256, 7
        %v3388 = vrot.slane %v3266, 7
        %v3389 = vrot.slane %v3276, 7
        %v3390 = vrot.slane %v3286, 7
        %v3391 = vrot.slane %v3296, 7
        %v3392 = vrot.slane %v3306, 7
        %v3393 = vrot.slane %v3316, 7
        %v3394 = vrot.slane %v3326, 7
        %v3395 = vrot.slane %v3336, 7
        %v3396 = vrot.slane %v3346, 7
        %v3397 = vrot.slane %v3356, 7
        %v3398 = vrot.slane %v3366, 7
        %v3399 = vrot.slane %v3376, 7
        %v3400 = vrot.slane %v3231, 7
        %v3401 = vrot.slane %v3241, 7
        %v3402 = vrot.slane %v3251, 7
        %v3403 = vrot.slane %v3261, 7
        %v3404 = vrot.slane %v3271, 7
        %v3405 = vrot.slane %v3281, 7
        %v3406 = vrot.slane %v3291, 7
        %v3407 = vrot.slane %v3301, 7
        %v3408 = vrot.slane %v3311, 7
        %v3409 = vrot.slane %v3321, 7
        %v3410 = vrot.slane %v3331, 7
        %v3411 = vrot.slane %v3341, 7
        %v3412 = vrot.slane %v3351, 7
        %v3413 = vrot.slane %v3361, 7
        %v3414 = vrot.slane %v3371, 7
        %v3415 = vrot.slane %v3381, 7
        %v3416 = vsel %vm1116, %v3384, %v3400
        %v3417 = vsel %vm1116, %v3385, %v3401
        %v3418 = vsel %vm1116, %v3386, %v3402
        %v3419 = vsel %vm1116, %v3387, %v3403
        %v3420 = vsel %vm1116, %v3388, %v3404
        %v3421 = vsel %vm1116, %v3389, %v3405
        %v3422 = vsel %vm1116, %v3390, %v3406
        %v3423 = vsel %vm1116, %v3391, %v3407
        %v3424 = vsel %vm1116, %v3392, %v3408
        %v3425 = vsel %vm1116, %v3393, %v3409
        %v3426 = vsel %vm1116, %v3394, %v3410
        %v3427 = vsel %vm1116, %v3395, %v3411
        %v3428 = vsel %vm1116, %v3396, %v3412
        %v3429 = vsel %vm1116, %v3397, %v3413
        %v3430 = vsel %vm1116, %v3398, %v3414
        %v3431 = vsel %vm1116, %v3399, %v3415
        %v3432 = vsel %vm1116, %v3400, %v3384
        %v3433 = vsel %vm1116, %v3401, %v3385
        %v3434 = vsel %vm1116, %v3402, %v3386
        %v3435 = vsel %vm1116, %v3403, %v3387
        %v3436 = vsel %vm1116, %v3404, %v3388
        %v3437 = vsel %vm1116, %v3405, %v3389
        %v3438 = vsel %vm1116, %v3406, %v3390
        %v3439 = vsel %vm1116, %v3407, %v3391
        %v3440 = vsel %vm1116, %v3408, %v3392
        %v3441 = vsel %vm1116, %v3409, %v3393
        %v3442 = vsel %vm1116, %v3410, %v3394
        %v3443 = vsel %vm1116, %v3411, %v3395
        %v3444 = vsel %vm1116, %v3412, %v3396
        %v3445 = vsel %vm1116, %v3413, %v3397
        %v3446 = vsel %vm1116, %v3414, %v3398
        %v3447 = vsel %vm1116, %v3415, %v3399
        %v3448 = vsel %vm1151, %v3432, 0.0
        %v3449 = vsel %vm1152, %v3416, 0.0
        %v3450 = vsel %vm1151, %v3433, 0.0
        %v3451 = vsel %vm1152, %v3417, 0.0
        %v3452 = vsel %vm1151, %v3434, 0.0
        %v3453 = vsel %vm1152, %v3418, 0.0
        %v3454 = vsel %vm1151, %v3435, 0.0
        %v3455 = vsel %vm1152, %v3419, 0.0
        %v3456 = vsel %vm1151, %v3436, 0.0
        %v3457 = vsel %vm1152, %v3420, 0.0
        %v3458 = vsel %vm1151, %v3437, 0.0
        %v3459 = vsel %vm1152, %v3421, 0.0
        %v3460 = vsel %vm1151, %v3438, 0.0
        %v3461 = vsel %vm1152, %v3422, 0.0
        %v3462 = vsel %vm1151, %v3439, 0.0
        %v3463 = vsel %vm1152, %v3423, 0.0
        %v3464 = vsel %vm1151, %v3440, 0.0
        %v3465 = vsel %vm1152, %v3424, 0.0
        %v3466 = vsel %vm1151, %v3441, 0.0
        %v3467 = vsel %vm1152, %v3425, 0.0
        %v3468 = vsel %vm1151, %v3442, 0.0
        %v3469 = vsel %vm1152, %v3426, 0.0
        %v3470 = vsel %vm1151, %v3443, 0.0
        %v3471 = vsel %vm1152, %v3427, 0.0
        %v3472 = vsel %vm1151, %v3444, 0.0
        %v3473 = vsel %vm1152, %v3428, 0.0
        %v3474 = vsel %vm1151, %v3445, 0.0
        %v3475 = vsel %vm1152, %v3429, 0.0
        %v3476 = vsel %vm1151, %v3446, 0.0
        %v3477 = vsel %vm1152, %v3430, 0.0
        %v3478 = vsel %vm1151, %v3447, 0.0
        %v3479 = vsel %vm1152, %v3431, 0.0
        %v3480 = vrot.slane %v3226, 1
        %v3481 = vrot.slane %v3236, 1
        %v3482 = vrot.slane %v3246, 1
        %v3483 = vrot.slane %v3256, 1
        %v3484 = vrot.slane %v3266, 1
        %v3485 = vrot.slane %v3276, 1
        %v3486 = vrot.slane %v3286, 1
        %v3487 = vrot.slane %v3296, 1
        %v3488 = vrot.slane %v3306, 1
        %v3489 = vrot.slane %v3316, 1
        %v3490 = vrot.slane %v3326, 1
        %v3491 = vrot.slane %v3336, 1
        %v3492 = vrot.slane %v3346, 1
        %v3493 = vrot.slane %v3356, 1
        %v3494 = vrot.slane %v3366, 1
        %v3495 = vrot.slane %v3376, 1
        %v3496 = vrot.slane %v3231, 1
        %v3497 = vrot.slane %v3241, 1
        %v3498 = vrot.slane %v3251, 1
        %v3499 = vrot.slane %v3261, 1
        %v3500 = vrot.slane %v3271, 1
        %v3501 = vrot.slane %v3281, 1
        %v3502 = vrot.slane %v3291, 1
        %v3503 = vrot.slane %v3301, 1
        %v3504 = vrot.slane %v3311, 1
        %v3505 = vrot.slane %v3321, 1
        %v3506 = vrot.slane %v3331, 1
        %v3507 = vrot.slane %v3341, 1
        %v3508 = vrot.slane %v3351, 1
        %v3509 = vrot.slane %v3361, 1
        %v3510 = vrot.slane %v3371, 1
        %v3511 = vrot.slane %v3381, 1
        %v3512 = vsel %vm1219, %v3480, %v3496
        %v3513 = vsel %vm1219, %v3481, %v3497
        %v3514 = vsel %vm1219, %v3482, %v3498
        %v3515 = vsel %vm1219, %v3483, %v3499
        %v3516 = vsel %vm1219, %v3484, %v3500
        %v3517 = vsel %vm1219, %v3485, %v3501
        %v3518 = vsel %vm1219, %v3486, %v3502
        %v3519 = vsel %vm1219, %v3487, %v3503
        %v3520 = vsel %vm1219, %v3488, %v3504
        %v3521 = vsel %vm1219, %v3489, %v3505
        %v3522 = vsel %vm1219, %v3490, %v3506
        %v3523 = vsel %vm1219, %v3491, %v3507
        %v3524 = vsel %vm1219, %v3492, %v3508
        %v3525 = vsel %vm1219, %v3493, %v3509
        %v3526 = vsel %vm1219, %v3494, %v3510
        %v3527 = vsel %vm1219, %v3495, %v3511
        %v3528 = vsel %vm1219, %v3496, %v3480
        %v3529 = vsel %vm1219, %v3497, %v3481
        %v3530 = vsel %vm1219, %v3498, %v3482
        %v3531 = vsel %vm1219, %v3499, %v3483
        %v3532 = vsel %vm1219, %v3500, %v3484
        %v3533 = vsel %vm1219, %v3501, %v3485
        %v3534 = vsel %vm1219, %v3502, %v3486
        %v3535 = vsel %vm1219, %v3503, %v3487
        %v3536 = vsel %vm1219, %v3504, %v3488
        %v3537 = vsel %vm1219, %v3505, %v3489
        %v3538 = vsel %vm1219, %v3506, %v3490
        %v3539 = vsel %vm1219, %v3507, %v3491
        %v3540 = vsel %vm1219, %v3508, %v3492
        %v3541 = vsel %vm1219, %v3509, %v3493
        %v3542 = vsel %vm1219, %v3510, %v3494
        %v3543 = vsel %vm1219, %v3511, %v3495
        %v3544 = vsel %vm1254, %v3512, 0.0
        %v3545 = vsel %vm1255, %v3528, 0.0
        %v3546 = vsel %vm1254, %v3513, 0.0
        %v3547 = vsel %vm1255, %v3529, 0.0
        %v3548 = vsel %vm1254, %v3514, 0.0
        %v3549 = vsel %vm1255, %v3530, 0.0
        %v3550 = vsel %vm1254, %v3515, 0.0
        %v3551 = vsel %vm1255, %v3531, 0.0
        %v3552 = vsel %vm1254, %v3516, 0.0
        %v3553 = vsel %vm1255, %v3532, 0.0
        %v3554 = vsel %vm1254, %v3517, 0.0
        %v3555 = vsel %vm1255, %v3533, 0.0
        %v3556 = vsel %vm1254, %v3518, 0.0
        %v3557 = vsel %vm1255, %v3534, 0.0
        %v3558 = vsel %vm1254, %v3519, 0.0
        %v3559 = vsel %vm1255, %v3535, 0.0
        %v3560 = vsel %vm1254, %v3520, 0.0
        %v3561 = vsel %vm1255, %v3536, 0.0
        %v3562 = vsel %vm1254, %v3521, 0.0
        %v3563 = vsel %vm1255, %v3537, 0.0
        %v3564 = vsel %vm1254, %v3522, 0.0
        %v3565 = vsel %vm1255, %v3538, 0.0
        %v3566 = vsel %vm1254, %v3523, 0.0
        %v3567 = vsel %vm1255, %v3539, 0.0
        %v3568 = vsel %vm1254, %v3524, 0.0
        %v3569 = vsel %vm1255, %v3540, 0.0
        %v3570 = vsel %vm1254, %v3525, 0.0
        %v3571 = vsel %vm1255, %v3541, 0.0
        %v3572 = vsel %vm1254, %v3526, 0.0
        %v3573 = vsel %vm1255, %v3542, 0.0
        %v3574 = vsel %vm1254, %v3527, 0.0
        %v3575 = vsel %vm1255, %v3543, 0.0
        %3608 = vrot.lane.b32.xlu0 %v3226, 4
        %v3609 = vpop.permute.xlu0 %3608
        %3610 = vrot.lane.b32.xlu0 %v3231, 4
        %v3611 = vpop.permute.xlu0 %3610
        %3612 = vrot.lane.b32.xlu0 %v3236, 4
        %v3613 = vpop.permute.xlu0 %3612
        %3614 = vrot.lane.b32.xlu0 %v3241, 4
        %v3615 = vpop.permute.xlu0 %3614
        %3616 = vrot.lane.b32.xlu0 %v3246, 4
        %v3617 = vpop.permute.xlu0 %3616
        %3618 = vrot.lane.b32.xlu0 %v3251, 4
        %v3619 = vpop.permute.xlu0 %3618
        %3620 = vrot.lane.b32.xlu0 %v3256, 4
        %v3621 = vpop.permute.xlu0 %3620
        %3622 = vrot.lane.b32.xlu0 %v3261, 4
        %v3623 = vpop.permute.xlu0 %3622
        %3624 = vrot.lane.b32.xlu0 %v3266, 4
        %v3625 = vpop.permute.xlu0 %3624
        %3626 = vrot.lane.b32.xlu0 %v3271, 4
        %v3627 = vpop.permute.xlu0 %3626
        %3628 = vrot.lane.b32.xlu0 %v3276, 4
        %v3629 = vpop.permute.xlu0 %3628
        %3630 = vrot.lane.b32.xlu0 %v3281, 4
        %v3631 = vpop.permute.xlu0 %3630
        %3632 = vrot.lane.b32.xlu0 %v3286, 4
        %v3633 = vpop.permute.xlu0 %3632
        %3634 = vrot.lane.b32.xlu0 %v3291, 4
        %v3635 = vpop.permute.xlu0 %3634
        %3636 = vrot.lane.b32.xlu0 %v3296, 4
        %v3637 = vpop.permute.xlu0 %3636
        %3638 = vrot.lane.b32.xlu0 %v3301, 4
        %v3639 = vpop.permute.xlu0 %3638
        %3640 = vrot.lane.b32.xlu0 %v3306, 4
        %v3641 = vpop.permute.xlu0 %3640
        %3642 = vrot.lane.b32.xlu0 %v3311, 4
        %v3643 = vpop.permute.xlu0 %3642
        %3644 = vrot.lane.b32.xlu0 %v3316, 4
        %v3645 = vpop.permute.xlu0 %3644
        %3646 = vrot.lane.b32.xlu0 %v3321, 4
        %v3647 = vpop.permute.xlu0 %3646
        %3648 = vrot.lane.b32.xlu0 %v3326, 4
        %v3649 = vpop.permute.xlu0 %3648
        %3650 = vrot.lane.b32.xlu0 %v3331, 4
        %v3651 = vpop.permute.xlu0 %3650
        %3652 = vrot.lane.b32.xlu0 %v3336, 4
        %v3653 = vpop.permute.xlu0 %3652
        %3654 = vrot.lane.b32.xlu0 %v3341, 4
        %v3655 = vpop.permute.xlu0 %3654
        %3656 = vrot.lane.b32.xlu0 %v3346, 4
        %v3657 = vpop.permute.xlu0 %3656
        %3658 = vrot.lane.b32.xlu0 %v3351, 4
        %v3659 = vpop.permute.xlu0 %3658
        %3660 = vrot.lane.b32.xlu0 %v3356, 4
        %v3661 = vpop.permute.xlu0 %3660
        %3662 = vrot.lane.b32.xlu0 %v3361, 4
        %v3663 = vpop.permute.xlu0 %3662
        %3664 = vrot.lane.b32.xlu0 %v3366, 4
        %v3665 = vpop.permute.xlu0 %3664
        %3666 = vrot.lane.b32.xlu0 %v3371, 4
        %v3667 = vpop.permute.xlu0 %3666
        %3668 = vrot.lane.b32.xlu0 %v3376, 4
        %v3669 = vpop.permute.xlu0 %3668
        %3670 = vrot.lane.b32.xlu0 %v3381, 4
        %v3671 = vpop.permute.xlu0 %3670
        %3736 = vrot.lane.b32.xlu0 %v3544, 8
        %v3737 = vpop.permute.xlu0 %3736
        %3738 = vrot.lane.b32.xlu0 %v3545, 8
        %v3739 = vpop.permute.xlu0 %3738
        %3740 = vrot.lane.b32.xlu0 %v3546, 8
        %v3741 = vpop.permute.xlu0 %3740
        %3742 = vrot.lane.b32.xlu0 %v3547, 8
        %v3743 = vpop.permute.xlu0 %3742
        %3744 = vrot.lane.b32.xlu0 %v3548, 8
        %v3745 = vpop.permute.xlu0 %3744
        %3746 = vrot.lane.b32.xlu0 %v3549, 8
        %v3747 = vpop.permute.xlu0 %3746
        %3748 = vrot.lane.b32.xlu0 %v3550, 8
        %v3749 = vpop.permute.xlu0 %3748
        %3750 = vrot.lane.b32.xlu0 %v3551, 8
        %v3751 = vpop.permute.xlu0 %3750
        %3752 = vrot.lane.b32.xlu0 %v3552, 8
        %v3753 = vpop.permute.xlu0 %3752
        %3754 = vrot.lane.b32.xlu0 %v3553, 8
        %v3755 = vpop.permute.xlu0 %3754
        %3756 = vrot.lane.b32.xlu0 %v3554, 8
        %v3757 = vpop.permute.xlu0 %3756
        %3758 = vrot.lane.b32.xlu0 %v3555, 8
        %v3759 = vpop.permute.xlu0 %3758
        %3760 = vrot.lane.b32.xlu0 %v3556, 8
        %v3761 = vpop.permute.xlu0 %3760
        %3762 = vrot.lane.b32.xlu0 %v3557, 8
        %v3763 = vpop.permute.xlu0 %3762
        %3764 = vrot.lane.b32.xlu0 %v3558, 8
        %v3765 = vpop.permute.xlu0 %3764
        %3766 = vrot.lane.b32.xlu0 %v3559, 8
        %v3767 = vpop.permute.xlu0 %3766
        %3768 = vrot.lane.b32.xlu0 %v3560, 8
        %v3769 = vpop.permute.xlu0 %3768
        %3770 = vrot.lane.b32.xlu0 %v3561, 8
        %v3771 = vpop.permute.xlu0 %3770
        %3772 = vrot.lane.b32.xlu0 %v3562, 8
        %v3773 = vpop.permute.xlu0 %3772
        %3774 = vrot.lane.b32.xlu0 %v3563, 8
        %v3775 = vpop.permute.xlu0 %3774
        %3776 = vrot.lane.b32.xlu0 %v3564, 8
        %v3777 = vpop.permute.xlu0 %3776
        %3778 = vrot.lane.b32.xlu0 %v3565, 8
        %v3779 = vpop.permute.xlu0 %3778
        %3780 = vrot.lane.b32.xlu0 %v3566, 8
        %v3781 = vpop.permute.xlu0 %3780
        %3782 = vrot.lane.b32.xlu0 %v3567, 8
        %v3783 = vpop.permute.xlu0 %3782
        %3784 = vrot.lane.b32.xlu0 %v3568, 8
        %v3785 = vpop.permute.xlu0 %3784
        %3786 = vrot.lane.b32.xlu0 %v3569, 8
        %v3787 = vpop.permute.xlu0 %3786
        %3788 = vrot.lane.b32.xlu0 %v3570, 8
        %v3789 = vpop.permute.xlu0 %3788
        %3790 = vrot.lane.b32.xlu0 %v3571, 8
        %v3791 = vpop.permute.xlu0 %3790
        %3792 = vrot.lane.b32.xlu0 %v3572, 8
        %v3793 = vpop.permute.xlu0 %3792
        %3794 = vrot.lane.b32.xlu0 %v3573, 8
        %v3795 = vpop.permute.xlu0 %3794
        %3796 = vrot.lane.b32.xlu0 %v3574, 8
        %v3797 = vpop.permute.xlu0 %3796
        %3798 = vrot.lane.b32.xlu0 %v3575, 8
        %v3799 = vpop.permute.xlu0 %3798
        %v3832 = vsel %vm716, %v3448, %v3609
        %v3833 = vsel %vm716, %v3449, %v3611
        %v3834 = vsel %vm716, %v3450, %v3613
        %v3835 = vsel %vm716, %v3451, %v3615
        %v3836 = vsel %vm716, %v3452, %v3617
        %v3837 = vsel %vm716, %v3453, %v3619
        %v3838 = vsel %vm716, %v3454, %v3621
        %v3839 = vsel %vm716, %v3455, %v3623
        %v3840 = vsel %vm716, %v3456, %v3625
        %v3841 = vsel %vm716, %v3457, %v3627
        %v3842 = vsel %vm716, %v3458, %v3629
        %v3843 = vsel %vm716, %v3459, %v3631
        %v3844 = vsel %vm716, %v3460, %v3633
        %v3845 = vsel %vm716, %v3461, %v3635
        %v3846 = vsel %vm716, %v3462, %v3637
        %v3847 = vsel %vm716, %v3463, %v3639
        %v3848 = vsel %vm716, %v3464, %v3641
        %v3849 = vsel %vm716, %v3465, %v3643
        %v3850 = vsel %vm716, %v3466, %v3645
        %v3851 = vsel %vm716, %v3467, %v3647
        %v3852 = vsel %vm716, %v3468, %v3649
        %v3853 = vsel %vm716, %v3469, %v3651
        %v3854 = vsel %vm716, %v3470, %v3653
        %v3855 = vsel %vm716, %v3471, %v3655
        %v3856 = vsel %vm716, %v3472, %v3657
        %v3857 = vsel %vm716, %v3473, %v3659
        %v3858 = vsel %vm716, %v3474, %v3661
        %v3859 = vsel %vm716, %v3475, %v3663
        %v3860 = vsel %vm716, %v3476, %v3665
        %v3861 = vsel %vm716, %v3477, %v3667
        %v3862 = vsel %vm716, %v3478, %v3669
        %v3863 = vsel %vm716, %v3479, %v3671
        %v3864 = vsel %vm757, %v3832, %v3737
        %v3865 = vsel %vm757, %v3833, %v3739
        %v3866 = vsel %vm757, %v3834, %v3741
        %v3867 = vsel %vm757, %v3835, %v3743
        %v3868 = vsel %vm757, %v3836, %v3745
        %v3869 = vsel %vm757, %v3837, %v3747
        %v3870 = vsel %vm757, %v3838, %v3749
        %v3871 = vsel %vm757, %v3839, %v3751
        %v3872 = vsel %vm757, %v3840, %v3753
        %v3873 = vsel %vm757, %v3841, %v3755
        %v3874 = vsel %vm757, %v3842, %v3757
        %v3875 = vsel %vm757, %v3843, %v3759
        %v3876 = vsel %vm757, %v3844, %v3761
        %v3877 = vsel %vm757, %v3845, %v3763
        %v3878 = vsel %vm757, %v3846, %v3765
        %v3879 = vsel %vm757, %v3847, %v3767
        %v3880 = vsel %vm757, %v3848, %v3769
        %v3881 = vsel %vm757, %v3849, %v3771
        %v3882 = vsel %vm757, %v3850, %v3773
        %v3883 = vsel %vm757, %v3851, %v3775
        %v3884 = vsel %vm757, %v3852, %v3777
        %v3885 = vsel %vm757, %v3853, %v3779
        %v3886 = vsel %vm757, %v3854, %v3781
        %v3887 = vsel %vm757, %v3855, %v3783
        %v3888 = vsel %vm757, %v3856, %v3785
        %v3889 = vsel %vm757, %v3857, %v3787
        %v3890 = vsel %vm757, %v3858, %v3789
        %v3891 = vsel %vm757, %v3859, %v3791
        %v3892 = vsel %vm757, %v3860, %v3793
        %v3893 = vsel %vm757, %v3861, %v3795
        %v3894 = vsel %vm757, %v3862, %v3797
        %v3895 = vsel %vm757, %v3863, %v3799
        %3896 = vst.msk [vmem:[#allocation3] sm:$0xff] %vm1608, 0.0
        %3897 = vst.msk [vmem:[#allocation3 + $0x8] sm:$0xff] %vm1608, 0.0
        %3898 = vst.msk [vmem:[#allocation3 + $0x10] sm:$0xff] %vm1608, %v3864
        %3899 = vst.msk [vmem:[#allocation3 + $0x18] sm:$0xff] %vm1608, %v3865
        %3900 = vst.msk [vmem:[#allocation3 + $0x20] sm:$0xff] %vm1608, %v3866
        %3901 = vst.msk [vmem:[#allocation3 + $0x28] sm:$0xff] %vm1608, %v3867
        %3902 = vst.msk [vmem:[#allocation3 + $0x30] sm:$0xff] %vm1608, %v3868
        %3903 = vst.msk [vmem:[#allocation3 + $0x38] sm:$0xff] %vm1608, %v3869
        %3904 = vst.msk [vmem:[#allocation3 + $0x40] sm:$0xff] %vm1608, %v3870
        %3905 = vst.msk [vmem:[#allocation3 + $0x48] sm:$0xff] %vm1608, %v3871
        %3906 = vst.msk [vmem:[#allocation3 + $0x50] sm:$0xff] %vm1608, %v3872
        %3907 = vst.msk [vmem:[#allocation3 + $0x58] sm:$0xff] %vm1608, %v3873
        %3908 = vst.msk [vmem:[#allocation3 + $0x60] sm:$0xff] %vm1608, %v3874
        %3909 = vst.msk [vmem:[#allocation3 + $0x68] sm:$0xff] %vm1608, %v3875
        %3910 = vst.msk [vmem:[#allocation3 + $0x70] sm:$0xff] %vm1608, %v3876
        %3911 = vst.msk [vmem:[#allocation3 + $0x78] sm:$0xff] %vm1608, %v3877
        %3912 = vst.msk [vmem:[#allocation3 + $0x80] sm:$0xff] %vm1608, %v3878
        %3913 = vst.msk [vmem:[#allocation3 + $0x88] sm:$0xff] %vm1608, %v3879
        %3914 = vst.msk [vmem:[#allocation3 + $0x90] sm:$0xff] %vm1608, %v3880
        %3915 = vst.msk [vmem:[#allocation3 + $0x98] sm:$0xff] %vm1608, %v3881
        %3916 = vst.msk [vmem:[#allocation3 + $0xa0] sm:$0xff] %vm1608, %v3882
        %3917 = vst.msk [vmem:[#allocation3 + $0xa8] sm:$0xff] %vm1608, %v3883
        %3918 = vst.msk [vmem:[#allocation3 + $0xb0] sm:$0xff] %vm1608, %v3884
        %3919 = vst.msk [vmem:[#allocation3 + $0xb8] sm:$0xff] %vm1608, %v3885
        %3920 = vst.msk [vmem:[#allocation3 + $0xc0] sm:$0xff] %vm1608, %v3886
        %3921 = vst.msk [vmem:[#allocation3 + $0xc8] sm:$0xff] %vm1608, %v3887
        %3922 = vst.msk [vmem:[#allocation3 + $0xd0] sm:$0xff] %vm1608, %v3888
        %3923 = vst.msk [vmem:[#allocation3 + $0xd8] sm:$0xff] %vm1608, %v3889
        %3924 = vst.msk [vmem:[#allocation3 + $0xe0] sm:$0xff] %vm1608, %v3890
        %3925 = vst.msk [vmem:[#allocation3 + $0xe8] sm:$0xff] %vm1608, %v3891
        %3926 = vst.msk [vmem:[#allocation3 + $0xf0] sm:$0xff] %vm1608, %v3892
        %3927 = vst.msk [vmem:[#allocation3 + $0xf8] sm:$0xff] %vm1608, %v3893
        %3928 = vst.msk [vmem:[#allocation3 + $0x100] sm:$0xff] %vm1608, %v3894
        %3929 = vst.msk [vmem:[#allocation3 + $0x108] sm:$0xff] %vm1608, %v3895
        %3930 = vst.msk [vmem:[#allocation3 + $0x110] sm:$0xff] %vm1608, 0.0
        %3931 = vst.msk [vmem:[#allocation3 + $0x118] sm:$0xff] %vm1608, 0.0
        %v3932 = vld [vmem:[#allocation3] sm:$0xff]
        %v3933 = vld [vmem:[#allocation3 + $0x8] sm:$0xff]
        %v3934 = vld [vmem:[#allocation3 + $0x10] sm:$0xff]
        %v3935 = vld [vmem:[#allocation3 + $0x18] sm:$0xff]
        %v3936 = vld [vmem:[#allocation3 + $0x20] sm:$0xff]
        %v3937 = vld [vmem:[#allocation3 + $0x28] sm:$0xff]
        %v3938 = vld [vmem:[#allocation3 + $0x30] sm:$0xff]
        %v3939 = vld [vmem:[#allocation3 + $0x38] sm:$0xff]
        %v3940 = vld [vmem:[#allocation3 + $0x40] sm:$0xff]
        %v3941 = vld [vmem:[#allocation3 + $0x48] sm:$0xff]
        %v3942 = vld [vmem:[#allocation3 + $0x50] sm:$0xff]
        %v3943 = vld [vmem:[#allocation3 + $0x58] sm:$0xff]
        %v3944 = vld [vmem:[#allocation3 + $0x60] sm:$0xff]
        %v3945 = vld [vmem:[#allocation3 + $0x68] sm:$0xff]
        %v3946 = vld [vmem:[#allocation3 + $0x70] sm:$0xff]
        %v3947 = vld [vmem:[#allocation3 + $0x78] sm:$0xff]
        %v3948 = vld [vmem:[#allocation3 + $0x80] sm:$0xff]
        %v3949 = vld [vmem:[#allocation3 + $0x88] sm:$0xff]
        %v3950 = vld [vmem:[#allocation3 + $0x90] sm:$0xff]
        %v3951 = vld [vmem:[#allocation3 + $0x98] sm:$0xff]
        %v3952 = vld [vmem:[#allocation3 + $0xa0] sm:$0xff]
        %v3953 = vld [vmem:[#allocation3 + $0xa8] sm:$0xff]
        %v3954 = vld [vmem:[#allocation3 + $0xb0] sm:$0xff]
        %v3955 = vld [vmem:[#allocation3 + $0xb8] sm:$0xff]
        %v3956 = vld [vmem:[#allocation3 + $0xc0] sm:$0xff]
        %v3957 = vld [vmem:[#allocation3 + $0xc8] sm:$0xff]
        %v3958 = vld [vmem:[#allocation3 + $0xd0] sm:$0xff]
        %v3959 = vld [vmem:[#allocation3 + $0xd8] sm:$0xff]
        %v3960 = vld [vmem:[#allocation3 + $0xe0] sm:$0xff]
        %v3961 = vld [vmem:[#allocation3 + $0xe8] sm:$0xff]
        %v3962 = vld [vmem:[#allocation3 + $0xf0] sm:$0xff]
        %v3963 = vld [vmem:[#allocation3 + $0xf8] sm:$0xff]
        %v3964 = vld [vmem:[#allocation18] sm:$0xff]
        %v3965 = vld [vmem:[#allocation18 + $0x8] sm:$0xf]
        %v3966 = vld [vmem:[#allocation19] sm:$0x1]
        %v3968 = vlaneseq
        %v3969 = vshrl.u32 %v3968, 7
        %v3970 = vsub.s32 0, %v3969
        %v3971 = vrot.slane %v3966, %v3970
        %v3974 = vsel %vm1608, %v3932, 0
        %v3977 = vsel %vm1608, %v3933, 0
        %v3980 = vsel %vm1608, %v3934, 0
        %v3983 = vsel %vm1608, %v3935, 0
        %v3986 = vsel %vm1608, %v3936, 0
        %v3989 = vsel %vm1608, %v3937, 0
        %v3992 = vsel %vm1608, %v3938, 0
        %v3995 = vsel %vm1608, %v3939, 0
        %v3998 = vsel %vm1608, %v3940, 0
        %v4001 = vsel %vm1608, %v3941, 0
        %v4004 = vsel %vm1608, %v3942, 0
        %v4007 = vsel %vm1608, %v3943, 0
        %v4010 = vsel %vm1608, %v3944, 0
        %v4013 = vsel %vm1608, %v3945, 0
        %v4016 = vsel %vm1608, %v3946, 0
        %v4019 = vsel %vm1608, %v3947, 0
        %v4022 = vsel %vm1608, %v3948, 0
        %v4025 = vsel %vm1608, %v3949, 0
        %v4028 = vsel %vm1608, %v3950, 0
        %v4031 = vsel %vm1608, %v3951, 0
        %v4034 = vsel %vm1608, %v3952, 0
        %v4037 = vsel %vm1608, %v3953, 0
        %v4040 = vsel %vm1608, %v3954, 0
        %v4043 = vsel %vm1608, %v3955, 0
        %v4046 = vsel %vm1608, %v3956, 0
        %v4049 = vsel %vm1608, %v3957, 0
        %v4052 = vsel %vm1608, %v3958, 0
        %v4055 = vsel %vm1608, %v3959, 0
        %v4058 = vsel %vm1608, %v3960, 0
        %v4061 = vsel %vm1608, %v3961, 0
        %v4064 = vsel %vm1608, %v3962, 0
        %v4067 = vsel %vm1608, %v3963, 0
        %v4070 = vsel %vm1782, %v3965, 0
        %4072 = vmatprep.subr.mxu0 0.0
        %4073 = vmatpush1.msra.mxu0 %v3964
        %4074 = vmatprep.subr.mxu0 0.0
        %4075 = vmatpush1.msra.mxu0 %v4070
        %4076 = vmatprep.subr.mxu0 0.0
        %4077 = vmatpush1.msra.mxu0 0.0
        %4078 = vmatprep.subr.mxu0 0.0
        %4079 = vmatpush1.msra.mxu0 0.0
        %4080 = vmatprep.subr.mxu0 0.0
        %4081 = vmatpush1.msra.mxu0 0.0
        %4082 = vmatprep.subr.mxu0 0.0
        %4083 = vmatpush1.msra.mxu0 0.0
        %4084 = vmatprep.subr.mxu0 0.0
        %4085 = vmatpush1.msra.mxu0 0.0
        %4086 = vmatprep.subr.mxu0 0.0
        %4087 = vmatpush1.msra.mxu0 0.0
        %4088 = vmatprep.subr.mxu0 0.0
        %4089 = vmatpush1.msra.mxu0 0.0
        %4090 = vmatprep.subr.mxu0 0.0
        %4091 = vmatpush1.msra.mxu0 0.0
        %4092 = vmatprep.subr.mxu0 0.0
        %4093 = vmatpush1.msra.mxu0 0.0
        %4094 = vmatprep.subr.mxu0 0.0
        %4095 = vmatpush1.msra.mxu0 0.0
        %4096 = vmatprep.subr.mxu0 0.0
        %4097 = vmatpush1.msra.mxu0 0.0
        %4098 = vmatprep.subr.mxu0 0.0
        %4099 = vmatpush1.msra.mxu0 0.0
        %4100 = vmatprep.subr.mxu0 0.0
        %4101 = vmatpush1.msra.mxu0 0.0
        %4102 = vmatprep.subr.mxu0 0.0
        %4103 = vmatpush1.msra.mxu0 0.0
        %4104 = vmatprep.subr.mxu0 0.0
        %4105 = vmatpush1.msra.mxu0 0.0
        %4106 = vmatprep.subr.mxu0 0.0
        %4107 = vmatpush1.msra.mxu0 0.0
        %4108 = vmatprep.subr.mxu0 0.0
        %4109 = vmatpush1.msra.mxu0 0.0
        %4110 = vmatprep.subr.mxu0 0.0
        %4111 = vmatpush1.msra.mxu0 0.0
        %4112 = vmatprep.subr.mxu0 0.0
        %4113 = vmatpush1.msra.mxu0 0.0
        %4114 = vmatprep.subr.mxu0 0.0
        %4115 = vmatpush1.msra.mxu0 0.0
        %4116 = vmatprep.subr.mxu0 0.0
        %4117 = vmatpush1.msra.mxu0 0.0
        %4118 = vmatprep.subr.mxu0 0.0
        %4119 = vmatpush1.msra.mxu0 0.0
        %4120 = vmatprep.subr.mxu0 0.0
        %4121 = vmatpush1.msra.mxu0 0.0
        %4122 = vmatprep.subr.mxu0 0.0
        %4123 = vmatpush1.msra.mxu0 0.0
        %4124 = vmatprep.subr.mxu0 0.0
        %4125 = vmatpush1.msra.mxu0 0.0
        %4126 = vmatprep.subr.mxu0 0.0
        %4127 = vmatpush1.msra.mxu0 0.0
        %4128 = vmatprep.subr.mxu0 0.0
        %4129 = vmatpush1.msra.mxu0 0.0
        %4130 = vmatprep.subr.mxu0 0.0
        %4131 = vmatpush1.msra.mxu0 0.0
        %4132 = vmatprep.subr.mxu0 0.0
        %4133 = vmatpush1.msra.mxu0 0.0
        %4134 = vmatprep.subr.mxu0 0.0
        %4135 = vmatpush1.msra.mxu0 0.0
        %4136 = vmatprep.mubr.f32.mxu0 0.0
        %4137 = vmatmul.mubr.f32.gmra.mrb[0].mxu0 %v3974
        %v4138 = vpop.f32.mrb[0].mxu0
        %v4139 = vadd.f32 %v3971, %v4138
        %v4140 = vpop.f32.mrb[0].mxu0
        %4141 = vmatprep.mubr.f32.mxu0 0.0
        %4142 = vmatmul.mubr.f32.gmra.mrb[0].mxu0 %v3977
        %v4143 = vpop.f32.mrb[0].mxu0
        %v4144 = vadd.f32 %v3971, %v4143
        %v4145 = vpop.f32.mrb[0].mxu0
        %4146 = vmatprep.mubr.f32.mxu0 0.0
        %4147 = vmatmul.mubr.f32.gmra.mrb[0].mxu0 %v3980
        %v4148 = vpop.f32.mrb[0].mxu0
        %v4149 = vadd.f32 %v3971, %v4148
        %v4150 = vpop.f32.mrb[0].mxu0
        %4151 = vmatprep.mubr.f32.mxu0 0.0
        %4152 = vmatmul.mubr.f32.gmra.mrb[0].mxu0 %v3983
        %v4153 = vpop.f32.mrb[0].mxu0
        %v4154 = vadd.f32 %v3971, %v4153
        %v4155 = vpop.f32.mrb[0].mxu0
        %4156 = vmatprep.mubr.f32.mxu0 0.0
        %4157 = vmatmul.mubr.f32.gmra.mrb[0].mxu0 %v3986
        %v4158 = vpop.f32.mrb[0].mxu0
        %v4159 = vadd.f32 %v3971, %v4158
        %v4160 = vpop.f32.mrb[0].mxu0
        %4161 = vmatprep.mubr.f32.mxu0 0.0
        %4162 = vmatmul.mubr.f32.gmra.mrb[0].mxu0 %v3989
        %v4163 = vpop.f32.mrb[0].mxu0
        %v4164 = vadd.f32 %v3971, %v4163
        %v4165 = vpop.f32.mrb[0].mxu0
        %4166 = vmatprep.mubr.f32.mxu0 0.0
        %4167 = vmatmul.mubr.f32.gmra.mrb[0].mxu0 %v3992
        %v4168 = vpop.f32.mrb[0].mxu0
        %v4169 = vadd.f32 %v3971, %v4168
        %v4170 = vpop.f32.mrb[0].mxu0
        %4171 = vmatprep.mubr.f32.mxu0 0.0
        %4172 = vmatmul.mubr.f32.gmra.mrb[0].mxu0 %v3995
        %v4173 = vpop.f32.mrb[0].mxu0
        %v4174 = vadd.f32 %v3971, %v4173
        %v4175 = vpop.f32.mrb[0].mxu0
        %4176 = vmatprep.mubr.f32.mxu0 0.0
        %4177 = vmatmul.mubr.f32.gmra.mrb[0].mxu0 %v3998
        %v4178 = vpop.f32.mrb[0].mxu0
        %v4179 = vadd.f32 %v3971, %v4178
        %v4180 = vpop.f32.mrb[0].mxu0
        %4181 = vmatprep.mubr.f32.mxu0 0.0
        %4182 = vmatmul.mubr.f32.gmra.mrb[0].mxu0 %v4001
        %v4183 = vpop.f32.mrb[0].mxu0
        %v4184 = vadd.f32 %v3971, %v4183
        %v4185 = vpop.f32.mrb[0].mxu0
        %4186 = vmatprep.mubr.f32.mxu0 0.0
        %4187 = vmatmul.mubr.f32.gmra.mrb[0].mxu0 %v4004
        %v4188 = vpop.f32.mrb[0].mxu0
        %v4189 = vadd.f32 %v3971, %v4188
        %v4190 = vpop.f32.mrb[0].mxu0
        %4191 = vmatprep.mubr.f32.mxu0 0.0
        %4192 = vmatmul.mubr.f32.gmra.mrb[0].mxu0 %v4007
        %v4193 = vpop.f32.mrb[0].mxu0
        %v4194 = vadd.f32 %v3971, %v4193
        %v4195 = vpop.f32.mrb[0].mxu0
        %4196 = vmatprep.mubr.f32.mxu0 0.0
        %4197 = vmatmul.mubr.f32.gmra.mrb[0].mxu0 %v4010
        %v4198 = vpop.f32.mrb[0].mxu0
        %v4199 = vadd.f32 %v3971, %v4198
        %v4200 = vpop.f32.mrb[0].mxu0
        %4201 = vmatprep.mubr.f32.mxu0 0.0
        %4202 = vmatmul.mubr.f32.gmra.mrb[0].mxu0 %v4013
        %v4203 = vpop.f32.mrb[0].mxu0
        %v4204 = vadd.f32 %v3971, %v4203
        %v4205 = vpop.f32.mrb[0].mxu0
        %4206 = vmatprep.mubr.f32.mxu0 0.0
        %4207 = vmatmul.mubr.f32.gmra.mrb[0].mxu0 %v4016
        %v4208 = vpop.f32.mrb[0].mxu0
        %v4209 = vadd.f32 %v3971, %v4208
        %v4210 = vpop.f32.mrb[0].mxu0
        %4211 = vmatprep.mubr.f32.mxu0 0.0
        %4212 = vmatmul.mubr.f32.gmra.mrb[0].mxu0 %v4019
        %v4213 = vpop.f32.mrb[0].mxu0
        %v4214 = vadd.f32 %v3971, %v4213
        %v4215 = vpop.f32.mrb[0].mxu0
        %4216 = vmatprep.mubr.f32.mxu0 0.0
        %4217 = vmatmul.mubr.f32.gmra.mrb[0].mxu0 %v4022
        %v4218 = vpop.f32.mrb[0].mxu0
        %v4219 = vadd.f32 %v3971, %v4218
        %v4220 = vpop.f32.mrb[0].mxu0
        %4221 = vmatprep.mubr.f32.mxu0 0.0
        %4222 = vmatmul.mubr.f32.gmra.mrb[0].mxu0 %v4025
        %v4223 = vpop.f32.mrb[0].mxu0
        %v4224 = vadd.f32 %v3971, %v4223
        %v4225 = vpop.f32.mrb[0].mxu0
        %4226 = vmatprep.mubr.f32.mxu0 0.0
        %4227 = vmatmul.mubr.f32.gmra.mrb[0].mxu0 %v4028
        %v4228 = vpop.f32.mrb[0].mxu0
        %v4229 = vadd.f32 %v3971, %v4228
        %v4230 = vpop.f32.mrb[0].mxu0
        %4231 = vmatprep.mubr.f32.mxu0 0.0
        %4232 = vmatmul.mubr.f32.gmra.mrb[0].mxu0 %v4031
        %v4233 = vpop.f32.mrb[0].mxu0
        %v4234 = vadd.f32 %v3971, %v4233
        %v4235 = vpop.f32.mrb[0].mxu0
        %4236 = vmatprep.mubr.f32.mxu0 0.0
        %4237 = vmatmul.mubr.f32.gmra.mrb[0].mxu0 %v4034
        %v4238 = vpop.f32.mrb[0].mxu0
        %v4239 = vadd.f32 %v3971, %v4238
        %v4240 = vpop.f32.mrb[0].mxu0
        %4241 = vmatprep.mubr.f32.mxu0 0.0
        %4242 = vmatmul.mubr.f32.gmra.mrb[0].mxu0 %v4037
        %v4243 = vpop.f32.mrb[0].mxu0
        %v4244 = vadd.f32 %v3971, %v4243
        %v4245 = vpop.f32.mrb[0].mxu0
        %4246 = vmatprep.mubr.f32.mxu0 0.0
        %4247 = vmatmul.mubr.f32.gmra.mrb[0].mxu0 %v4040
        %v4248 = vpop.f32.mrb[0].mxu0
        %v4249 = vadd.f32 %v3971, %v4248
        %v4250 = vpop.f32.mrb[0].mxu0
        %4251 = vmatprep.mubr.f32.mxu0 0.0
        %4252 = vmatmul.mubr.f32.gmra.mrb[0].mxu0 %v4043
        %v4253 = vpop.f32.mrb[0].mxu0
        %v4254 = vadd.f32 %v3971, %v4253
        %v4255 = vpop.f32.mrb[0].mxu0
        %4256 = vmatprep.mubr.f32.mxu0 0.0
        %4257 = vmatmul.mubr.f32.gmra.mrb[0].mxu0 %v4046
        %v4258 = vpop.f32.mrb[0].mxu0
        %v4259 = vadd.f32 %v3971, %v4258
        %v4260 = vpop.f32.mrb[0].mxu0
        %4261 = vmatprep.mubr.f32.mxu0 0.0
        %4262 = vmatmul.mubr.f32.gmra.mrb[0].mxu0 %v4049
        %v4263 = vpop.f32.mrb[0].mxu0
        %v4264 = vadd.f32 %v3971, %v4263
        %v4265 = vpop.f32.mrb[0].mxu0
        %4266 = vmatprep.mubr.f32.mxu0 0.0
        %4267 = vmatmul.mubr.f32.gmra.mrb[0].mxu0 %v4052
        %v4268 = vpop.f32.mrb[0].mxu0
        %v4269 = vadd.f32 %v3971, %v4268
        %v4270 = vpop.f32.mrb[0].mxu0
        %4271 = vmatprep.mubr.f32.mxu0 0.0
        %4272 = vmatmul.mubr.f32.gmra.mrb[0].mxu0 %v4055
        %v4273 = vpop.f32.mrb[0].mxu0
        %v4274 = vadd.f32 %v3971, %v4273
        %v4275 = vpop.f32.mrb[0].mxu0
        %4276 = vmatprep.mubr.f32.mxu0 0.0
        %4277 = vmatmul.mubr.f32.gmra.mrb[0].mxu0 %v4058
        %v4278 = vpop.f32.mrb[0].mxu0
        %v4279 = vadd.f32 %v3971, %v4278
        %v4280 = vpop.f32.mrb[0].mxu0
        %4281 = vmatprep.mubr.f32.mxu0 0.0
        %4282 = vmatmul.mubr.f32.gmra.mrb[0].mxu0 %v4061
        %v4283 = vpop.f32.mrb[0].mxu0
        %v4284 = vadd.f32 %v3971, %v4283
        %v4285 = vpop.f32.mrb[0].mxu0
        %4286 = vmatprep.mubr.f32.mxu0 0.0
        %4287 = vmatmul.mubr.f32.gmra.mrb[0].mxu0 %v4064
        %v4288 = vpop.f32.mrb[0].mxu0
        %v4289 = vadd.f32 %v3971, %v4288
        %v4290 = vpop.f32.mrb[0].mxu0
        %4291 = vmatprep.mubr.f32.mxu0 0.0
        %4292 = vmatmul.mubr.f32.gmra.mrb[0].mxu0 %v4067
        %v4293 = vpop.f32.mrb[0].mxu0
        %v4294 = vadd.f32 %v3971, %v4293
        %v4295 = vpop.f32.mrb[0].mxu0
        %4296 = vdwg.mxu0
        %s4297 = scalar_lea.vmem [#allocation3], 16
        %v4298 = vld [vmem:[%s4297] sm:$0xff]
        %v4299 = vld [vmem:[%s4297 + $0x8] sm:$0xff]
        %v4300 = vld [vmem:[%s4297 + $0x10] sm:$0xff]
        %v4301 = vld [vmem:[%s4297 + $0x18] sm:$0xff]
        %v4302 = vld [vmem:[%s4297 + $0x20] sm:$0xff]
        %v4303 = vld [vmem:[%s4297 + $0x28] sm:$0xff]
        %v4304 = vld [vmem:[%s4297 + $0x30] sm:$0xff]
        %v4305 = vld [vmem:[%s4297 + $0x38] sm:$0xff]
        %v4306 = vld [vmem:[%s4297 + $0x40] sm:$0xff]
        %v4307 = vld [vmem:[%s4297 + $0x48] sm:$0xff]
        %v4308 = vld [vmem:[%s4297 + $0x50] sm:$0xff]
        %v4309 = vld [vmem:[%s4297 + $0x58] sm:$0xff]
        %v4310 = vld [vmem:[%s4297 + $0x60] sm:$0xff]
        %v4311 = vld [vmem:[%s4297 + $0x68] sm:$0xff]
        %v4312 = vld [vmem:[%s4297 + $0x70] sm:$0xff]
        %v4313 = vld [vmem:[%s4297 + $0x78] sm:$0xff]
        %v4314 = vld [vmem:[%s4297 + $0x80] sm:$0xff]
        %v4315 = vld [vmem:[%s4297 + $0x88] sm:$0xff]
        %v4316 = vld [vmem:[%s4297 + $0x90] sm:$0xff]
        %v4317 = vld [vmem:[%s4297 + $0x98] sm:$0xff]
        %v4318 = vld [vmem:[%s4297 + $0xa0] sm:$0xff]
        %v4319 = vld [vmem:[%s4297 + $0xa8] sm:$0xff]
        %v4320 = vld [vmem:[%s4297 + $0xb0] sm:$0xff]
        %v4321 = vld [vmem:[%s4297 + $0xb8] sm:$0xff]
        %v4322 = vld [vmem:[%s4297 + $0xc0] sm:$0xff]
        %v4323 = vld [vmem:[%s4297 + $0xc8] sm:$0xff]
        %v4324 = vld [vmem:[%s4297 + $0xd0] sm:$0xff]
        %v4325 = vld [vmem:[%s4297 + $0xd8] sm:$0xff]
        %v4326 = vld [vmem:[%s4297 + $0xe0] sm:$0xff]
        %v4327 = vld [vmem:[%s4297 + $0xe8] sm:$0xff]
        %v4328 = vld [vmem:[%s4297 + $0xf0] sm:$0xff]
        %v4329 = vld [vmem:[%s4297 + $0xf8] sm:$0xff]
        %s4330 = scalar_lea.vmem [#allocation18], 16
        %v4331 = vld [vmem:[%s4330] sm:$0xff]
        %v4332 = vld [vmem:[%s4330 + $0x8] sm:$0xf]
        %v4334 = vsel %vm1608, %v4298, 0
        %v4337 = vsel %vm1608, %v4299, 0
        %v4340 = vsel %vm1608, %v4300, 0
        %v4343 = vsel %vm1608, %v4301, 0
        %v4346 = vsel %vm1608, %v4302, 0
        %v4349 = vsel %vm1608, %v4303, 0
        %v4352 = vsel %vm1608, %v4304, 0
        %v4355 = vsel %vm1608, %v4305, 0
        %v4358 = vsel %vm1608, %v4306, 0
        %v4361 = vsel %vm1608, %v4307, 0
        %v4364 = vsel %vm1608, %v4308, 0
        %v4367 = vsel %vm1608, %v4309, 0
        %v4370 = vsel %vm1608, %v4310, 0
        %v4373 = vsel %vm1608, %v4311, 0
        %v4376 = vsel %vm1608, %v4312, 0
        %v4379 = vsel %vm1608, %v4313, 0
        %v4382 = vsel %vm1608, %v4314, 0
        %v4385 = vsel %vm1608, %v4315, 0
        %v4388 = vsel %vm1608, %v4316, 0
        %v4391 = vsel %vm1608, %v4317, 0
        %v4394 = vsel %vm1608, %v4318, 0
        %v4397 = vsel %vm1608, %v4319, 0
        %v4400 = vsel %vm1608, %v4320, 0
        %v4403 = vsel %vm1608, %v4321, 0
        %v4406 = vsel %vm1608, %v4322, 0
        %v4409 = vsel %vm1608, %v4323, 0
        %v4412 = vsel %vm1608, %v4324, 0
        %v4415 = vsel %vm1608, %v4325, 0
        %v4418 = vsel %vm1608, %v4326, 0
        %v4421 = vsel %vm1608, %v4327, 0
        %v4424 = vsel %vm1608, %v4328, 0
        %v4427 = vsel %vm1608, %v4329, 0
        %v4430 = vsel %vm1782, %v4332, 0
        %4432 = vmatprep.subr.mxu0 0.0
        %4433 = vmatpush1.msra.mxu0 %v4331
        %4434 = vmatprep.subr.mxu0 0.0
        %4435 = vmatpush1.msra.mxu0 %v4430
        %4436 = vmatprep.subr.mxu0 0.0
        %4437 = vmatpush1.msra.mxu0 0.0
        %4438 = vmatprep.subr.mxu0 0.0
        %4439 = vmatpush1.msra.mxu0 0.0
        %4440 = vmatprep.subr.mxu0 0.0
        %4441 = vmatpush1.msra.mxu0 0.0
        %4442 = vmatprep.subr.mxu0 0.0
        %4443 = vmatpush1.msra.mxu0 0.0
        %4444 = vmatprep.subr.mxu0 0.0
        %4445 = vmatpush1.msra.mxu0 0.0
        %4446 = vmatprep.subr.mxu0 0.0
        %4447 = vmatpush1.msra.mxu0 0.0
        %4448 = vmatprep.subr.mxu0 0.0
        %4449 = vmatpush1.msra.mxu0 0.0
        %4450 = vmatprep.subr.mxu0 0.0
        %4451 = vmatpush1.msra.mxu0 0.0
        %4452 = vmatprep.subr.mxu0 0.0
        %4453 = vmatpush1.msra.mxu0 0.0
        %4454 = vmatprep.subr.mxu0 0.0
        %4455 = vmatpush1.msra.mxu0 0.0
        %4456 = vmatprep.subr.mxu0 0.0
        %4457 = vmatpush1.msra.mxu0 0.0
        %4458 = vmatprep.subr.mxu0 0.0
        %4459 = vmatpush1.msra.mxu0 0.0
        %4460 = vmatprep.subr.mxu0 0.0
        %4461 = vmatpush1.msra.mxu0 0.0
        %4462 = vmatprep.subr.mxu0 0.0
        %4463 = vmatpush1.msra.mxu0 0.0
        %4464 = vmatprep.subr.mxu0 0.0
        %4465 = vmatpush1.msra.mxu0 0.0
        %4466 = vmatprep.subr.mxu0 0.0
        %4467 = vmatpush1.msra.mxu0 0.0
        %4468 = vmatprep.subr.mxu0 0.0
        %4469 = vmatpush1.msra.mxu0 0.0
        %4470 = vmatprep.subr.mxu0 0.0
        %4471 = vmatpush1.msra.mxu0 0.0
        %4472 = vmatprep.subr.mxu0 0.0
        %4473 = vmatpush1.msra.mxu0 0.0
        %4474 = vmatprep.subr.mxu0 0.0
        %4475 = vmatpush1.msra.mxu0 0.0
        %4476 = vmatprep.subr.mxu0 0.0
        %4477 = vmatpush1.msra.mxu0 0.0
        %4478 = vmatprep.subr.mxu0 0.0
        %4479 = vmatpush1.msra.mxu0 0.0
        %4480 = vmatprep.subr.mxu0 0.0
        %4481 = vmatpush1.msra.mxu0 0.0
        %4482 = vmatprep.subr.mxu0 0.0
        %4483 = vmatpush1.msra.mxu0 0.0
        %4484 = vmatprep.subr.mxu0 0.0
        %4485 = vmatpush1.msra.mxu0 0.0
        %4486 = vmatprep.subr.mxu0 0.0
        %4487 = vmatpush1.msra.mxu0 0.0
        %4488 = vmatprep.subr.mxu0 0.0
        %4489 = vmatpush1.msra.mxu0 0.0
        %4490 = vmatprep.subr.mxu0 0.0
        %4491 = vmatpush1.msra.mxu0 0.0
        %4492 = vmatprep.subr.mxu0 0.0
        %4493 = vmatpush1.msra.mxu0 0.0
        %4494 = vmatprep.subr.mxu0 0.0
        %4495 = vmatpush1.msra.mxu0 0.0
        %4496 = vmatprep.mubr.f32.mxu0 0.0
        %4497 = vmatmul.mubr.f32.gmra.mrb[0].mxu0 %v4334
        %v4498 = vpop.f32.mrb[0].mxu0
        %v4499 = vadd.f32 0.0, %v4498
        %v4500 = vpop.f32.mrb[0].mxu0
        %4501 = vmatprep.mubr.f32.mxu0 0.0
        %4502 = vmatmul.mubr.f32.gmra.mrb[0].mxu0 %v4337
        %v4503 = vpop.f32.mrb[0].mxu0
        %v4504 = vadd.f32 0.0, %v4503
        %v4505 = vpop.f32.mrb[0].mxu0
        %4506 = vmatprep.mubr.f32.mxu0 0.0
        %4507 = vmatmul.mubr.f32.gmra.mrb[0].mxu0 %v4340
        %v4508 = vpop.f32.mrb[0].mxu0
        %v4509 = vadd.f32 0.0, %v4508
        %v4510 = vpop.f32.mrb[0].mxu0
        %4511 = vmatprep.mubr.f32.mxu0 0.0
        %4512 = vmatmul.mubr.f32.gmra.mrb[0].mxu0 %v4343
        %v4513 = vpop.f32.mrb[0].mxu0
        %v4514 = vadd.f32 0.0, %v4513
        %v4515 = vpop.f32.mrb[0].mxu0
        %4516 = vmatprep.mubr.f32.mxu0 0.0
        %4517 = vmatmul.mubr.f32.gmra.mrb[0].mxu0 %v4346
        %v4518 = vpop.f32.mrb[0].mxu0
        %v4519 = vadd.f32 0.0, %v4518
        %v4520 = vpop.f32.mrb[0].mxu0
        %4521 = vmatprep.mubr.f32.mxu0 0.0
        %4522 = vmatmul.mubr.f32.gmra.mrb[0].mxu0 %v4349
        %v4523 = vpop.f32.mrb[0].mxu0
        %v4524 = vadd.f32 0.0, %v4523
        %v4525 = vpop.f32.mrb[0].mxu0
        %4526 = vmatprep.mubr.f32.mxu0 0.0
        %4527 = vmatmul.mubr.f32.gmra.mrb[0].mxu0 %v4352
        %v4528 = vpop.f32.mrb[0].mxu0
        %v4529 = vadd.f32 0.0, %v4528
        %v4530 = vpop.f32.mrb[0].mxu0
        %4531 = vmatprep.mubr.f32.mxu0 0.0
        %4532 = vmatmul.mubr.f32.gmra.mrb[0].mxu0 %v4355
        %v4533 = vpop.f32.mrb[0].mxu0
        %v4534 = vadd.f32 0.0, %v4533
        %v4535 = vpop.f32.mrb[0].mxu0
        %4536 = vmatprep.mubr.f32.mxu0 0.0
        %4537 = vmatmul.mubr.f32.gmra.mrb[0].mxu0 %v4358
        %v4538 = vpop.f32.mrb[0].mxu0
        %v4539 = vadd.f32 0.0, %v4538
        %v4540 = vpop.f32.mrb[0].mxu0
        %4541 = vmatprep.mubr.f32.mxu0 0.0
        %4542 = vmatmul.mubr.f32.gmra.mrb[0].mxu0 %v4361
        %v4543 = vpop.f32.mrb[0].mxu0
        %v4544 = vadd.f32 0.0, %v4543
        %v4545 = vpop.f32.mrb[0].mxu0
        %4546 = vmatprep.mubr.f32.mxu0 0.0
        %4547 = vmatmul.mubr.f32.gmra.mrb[0].mxu0 %v4364
        %v4548 = vpop.f32.mrb[0].mxu0
        %v4549 = vadd.f32 0.0, %v4548
        %v4550 = vpop.f32.mrb[0].mxu0
        %4551 = vmatprep.mubr.f32.mxu0 0.0
        %4552 = vmatmul.mubr.f32.gmra.mrb[0].mxu0 %v4367
        %v4553 = vpop.f32.mrb[0].mxu0
        %v4554 = vadd.f32 0.0, %v4553
        %v4555 = vpop.f32.mrb[0].mxu0
        %4556 = vmatprep.mubr.f32.mxu0 0.0
        %4557 = vmatmul.mubr.f32.gmra.mrb[0].mxu0 %v4370
        %v4558 = vpop.f32.mrb[0].mxu0
        %v4559 = vadd.f32 0.0, %v4558
        %v4560 = vpop.f32.mrb[0].mxu0
        %4561 = vmatprep.mubr.f32.mxu0 0.0
        %4562 = vmatmul.mubr.f32.gmra.mrb[0].mxu0 %v4373
        %v4563 = vpop.f32.mrb[0].mxu0
        %v4564 = vadd.f32 0.0, %v4563
        %v4565 = vpop.f32.mrb[0].mxu0
        %4566 = vmatprep.mubr.f32.mxu0 0.0
        %4567 = vmatmul.mubr.f32.gmra.mrb[0].mxu0 %v4376
        %v4568 = vpop.f32.mrb[0].mxu0
        %v4569 = vadd.f32 0.0, %v4568
        %v4570 = vpop.f32.mrb[0].mxu0
        %4571 = vmatprep.mubr.f32.mxu0 0.0
        %4572 = vmatmul.mubr.f32.gmra.mrb[0].mxu0 %v4379
        %v4573 = vpop.f32.mrb[0].mxu0
        %v4574 = vadd.f32 0.0, %v4573
        %v4575 = vpop.f32.mrb[0].mxu0
        %4576 = vmatprep.mubr.f32.mxu0 0.0
        %4577 = vmatmul.mubr.f32.gmra.mrb[0].mxu0 %v4382
        %v4578 = vpop.f32.mrb[0].mxu0
        %v4579 = vadd.f32 0.0, %v4578
        %v4580 = vpop.f32.mrb[0].mxu0
        %4581 = vmatprep.mubr.f32.mxu0 0.0
        %4582 = vmatmul.mubr.f32.gmra.mrb[0].mxu0 %v4385
        %v4583 = vpop.f32.mrb[0].mxu0
        %v4584 = vadd.f32 0.0, %v4583
        %v4585 = vpop.f32.mrb[0].mxu0
        %4586 = vmatprep.mubr.f32.mxu0 0.0
        %4587 = vmatmul.mubr.f32.gmra.mrb[0].mxu0 %v4388
        %v4588 = vpop.f32.mrb[0].mxu0
        %v4589 = vadd.f32 0.0, %v4588
        %v4590 = vpop.f32.mrb[0].mxu0
        %4591 = vmatprep.mubr.f32.mxu0 0.0
        %4592 = vmatmul.mubr.f32.gmra.mrb[0].mxu0 %v4391
        %v4593 = vpop.f32.mrb[0].mxu0
        %v4594 = vadd.f32 0.0, %v4593
        %v4595 = vpop.f32.mrb[0].mxu0
        %4596 = vmatprep.mubr.f32.mxu0 0.0
        %4597 = vmatmul.mubr.f32.gmra.mrb[0].mxu0 %v4394
        %v4598 = vpop.f32.mrb[0].mxu0
        %v4599 = vadd.f32 0.0, %v4598
        %v4600 = vpop.f32.mrb[0].mxu0
        %4601 = vmatprep.mubr.f32.mxu0 0.0
        %4602 = vmatmul.mubr.f32.gmra.mrb[0].mxu0 %v4397
        %v4603 = vpop.f32.mrb[0].mxu0
        %v4604 = vadd.f32 0.0, %v4603
        %v4605 = vpop.f32.mrb[0].mxu0
        %4606 = vmatprep.mubr.f32.mxu0 0.0
        %4607 = vmatmul.mubr.f32.gmra.mrb[0].mxu0 %v4400
        %v4608 = vpop.f32.mrb[0].mxu0
        %v4609 = vadd.f32 0.0, %v4608
        %v4610 = vpop.f32.mrb[0].mxu0
        %4611 = vmatprep.mubr.f32.mxu0 0.0
        %4612 = vmatmul.mubr.f32.gmra.mrb[0].mxu0 %v4403
        %v4613 = vpop.f32.mrb[0].mxu0
        %v4614 = vadd.f32 0.0, %v4613
        %v4615 = vpop.f32.mrb[0].mxu0
        %4616 = vmatprep.mubr.f32.mxu0 0.0
        %4617 = vmatmul.mubr.f32.gmra.mrb[0].mxu0 %v4406
        %v4618 = vpop.f32.mrb[0].mxu0
        %v4619 = vadd.f32 0.0, %v4618
        %v4620 = vpop.f32.mrb[0].mxu0
        %4621 = vmatprep.mubr.f32.mxu0 0.0
        %4622 = vmatmul.mubr.f32.gmra.mrb[0].mxu0 %v4409
        %v4623 = vpop.f32.mrb[0].mxu0
        %v4624 = vadd.f32 0.0, %v4623
        %v4625 = vpop.f32.mrb[0].mxu0
        %4626 = vmatprep.mubr.f32.mxu0 0.0
        %4627 = vmatmul.mubr.f32.gmra.mrb[0].mxu0 %v4412
        %v4628 = vpop.f32.mrb[0].mxu0
        %v4629 = vadd.f32 0.0, %v4628
        %v4630 = vpop.f32.mrb[0].mxu0
        %4631 = vmatprep.mubr.f32.mxu0 0.0
        %4632 = vmatmul.mubr.f32.gmra.mrb[0].mxu0 %v4415
        %v4633 = vpop.f32.mrb[0].mxu0
        %v4634 = vadd.f32 0.0, %v4633
        %v4635 = vpop.f32.mrb[0].mxu0
        %4636 = vmatprep.mubr.f32.mxu0 0.0
        %4637 = vmatmul.mubr.f32.gmra.mrb[0].mxu0 %v4418
        %v4638 = vpop.f32.mrb[0].mxu0
        %v4639 = vadd.f32 0.0, %v4638
        %v4640 = vpop.f32.mrb[0].mxu0
        %4641 = vmatprep.mubr.f32.mxu0 0.0
        %4642 = vmatmul.mubr.f32.gmra.mrb[0].mxu0 %v4421
        %v4643 = vpop.f32.mrb[0].mxu0
        %v4644 = vadd.f32 0.0, %v4643
        %v4645 = vpop.f32.mrb[0].mxu0
        %4646 = vmatprep.mubr.f32.mxu0 0.0
        %4647 = vmatmul.mubr.f32.gmra.mrb[0].mxu0 %v4424
        %v4648 = vpop.f32.mrb[0].mxu0
        %v4649 = vadd.f32 0.0, %v4648
        %v4650 = vpop.f32.mrb[0].mxu0
        %4651 = vmatprep.mubr.f32.mxu0 0.0
        %4652 = vmatmul.mubr.f32.gmra.mrb[0].mxu0 %v4427
        %v4653 = vpop.f32.mrb[0].mxu0
        %v4654 = vadd.f32 0.0, %v4653
        %v4655 = vpop.f32.mrb[0].mxu0
        %4656 = vdwg.mxu0
        %v4657 = vadd.f32 %v4139, %v4499
        %v4658 = vadd.f32 %v4144, %v4504
        %v4659 = vadd.f32 %v4149, %v4509
        %v4660 = vadd.f32 %v4154, %v4514
        %v4661 = vadd.f32 %v4159, %v4519
        %v4662 = vadd.f32 %v4164, %v4524
        %v4663 = vadd.f32 %v4169, %v4529
        %v4664 = vadd.f32 %v4174, %v4534
        %v4665 = vadd.f32 %v4179, %v4539
        %v4666 = vadd.f32 %v4184, %v4544
        %v4667 = vadd.f32 %v4189, %v4549
        %v4668 = vadd.f32 %v4194, %v4554
        %v4669 = vadd.f32 %v4199, %v4559
        %v4670 = vadd.f32 %v4204, %v4564
        %v4671 = vadd.f32 %v4209, %v4569
        %v4672 = vadd.f32 %v4214, %v4574
        %v4673 = vadd.f32 %v4219, %v4579
        %v4674 = vadd.f32 %v4224, %v4584
        %v4675 = vadd.f32 %v4229, %v4589
        %v4676 = vadd.f32 %v4234, %v4594
        %v4677 = vadd.f32 %v4239, %v4599
        %v4678 = vadd.f32 %v4244, %v4604
        %v4679 = vadd.f32 %v4249, %v4609
        %v4680 = vadd.f32 %v4254, %v4614
        %v4681 = vadd.f32 %v4259, %v4619
        %v4682 = vadd.f32 %v4264, %v4624
        %v4683 = vadd.f32 %v4269, %v4629
        %v4684 = vadd.f32 %v4274, %v4634
        %v4685 = vadd.f32 %v4279, %v4639
        %v4686 = vadd.f32 %v4284, %v4644
        %v4687 = vadd.f32 %v4289, %v4649
        %v4688 = vadd.f32 %v4294, %v4654
        %s4689 = scalar_lea.vmem [#allocation3], 32
        %v4690 = vld [vmem:[%s4689] sm:$0xff]
        %v4691 = vld [vmem:[%s4689 + $0x8] sm:$0xff]
        %v4692 = vld [vmem:[%s4689 + $0x10] sm:$0xff]
        %v4693 = vld [vmem:[%s4689 + $0x18] sm:$0xff]
        %v4694 = vld [vmem:[%s4689 + $0x20] sm:$0xff]
        %v4695 = vld [vmem:[%s4689 + $0x28] sm:$0xff]
        %v4696 = vld [vmem:[%s4689 + $0x30] sm:$0xff]
        %v4697 = vld [vmem:[%s4689 + $0x38] sm:$0xff]
        %v4698 = vld [vmem:[%s4689 + $0x40] sm:$0xff]
        %v4699 = vld [vmem:[%s4689 + $0x48] sm:$0xff]
        %v4700 = vld [vmem:[%s4689 + $0x50] sm:$0xff]
        %v4701 = vld [vmem:[%s4689 + $0x58] sm:$0xff]
        %v4702 = vld [vmem:[%s4689 + $0x60] sm:$0xff]
        %v4703 = vld [vmem:[%s4689 + $0x68] sm:$0xff]
        %v4704 = vld [vmem:[%s4689 + $0x70] sm:$0xff]
        %v4705 = vld [vmem:[%s4689 + $0x78] sm:$0xff]
        %v4706 = vld [vmem:[%s4689 + $0x80] sm:$0xff]
        %v4707 = vld [vmem:[%s4689 + $0x88] sm:$0xff]
        %v4708 = vld [vmem:[%s4689 + $0x90] sm:$0xff]
        %v4709 = vld [vmem:[%s4689 + $0x98] sm:$0xff]
        %v4710 = vld [vmem:[%s4689 + $0xa0] sm:$0xff]
        %v4711 = vld [vmem:[%s4689 + $0xa8] sm:$0xff]
        %v4712 = vld [vmem:[%s4689 + $0xb0] sm:$0xff]
        %v4713 = vld [vmem:[%s4689 + $0xb8] sm:$0xff]
        %v4714 = vld [vmem:[%s4689 + $0xc0] sm:$0xff]
        %v4715 = vld [vmem:[%s4689 + $0xc8] sm:$0xff]
        %v4716 = vld [vmem:[%s4689 + $0xd0] sm:$0xff]
        %v4717 = vld [vmem:[%s4689 + $0xd8] sm:$0xff]
        %v4718 = vld [vmem:[%s4689 + $0xe0] sm:$0xff]
        %v4719 = vld [vmem:[%s4689 + $0xe8] sm:$0xff]
        %v4720 = vld [vmem:[%s4689 + $0xf0] sm:$0xff]
        %v4721 = vld [vmem:[%s4689 + $0xf8] sm:$0xff]
        %s4722 = scalar_lea.vmem [#allocation18], 32
        %v4723 = vld [vmem:[%s4722] sm:$0xff]
        %v4724 = vld [vmem:[%s4722 + $0x8] sm:$0xf]
        %v4726 = vsel %vm1608, %v4690, 0
        %v4729 = vsel %vm1608, %v4691, 0
        %v4732 = vsel %vm1608, %v4692, 0
        %v4735 = vsel %vm1608, %v4693, 0
        %v4738 = vsel %vm1608, %v4694, 0
        %v4741 = vsel %vm1608, %v4695, 0
        %v4744 = vsel %vm1608, %v4696, 0
        %v4747 = vsel %vm1608, %v4697, 0
        %v4750 = vsel %vm1608, %v4698, 0
        %v4753 = vsel %vm1608, %v4699, 0
        %v4756 = vsel %vm1608, %v4700, 0
        %v4759 = vsel %vm1608, %v4701, 0
        %v4762 = vsel %vm1608, %v4702, 0
        %v4765 = vsel %vm1608, %v4703, 0
        %v4768 = vsel %vm1608, %v4704, 0
        %v4771 = vsel %vm1608, %v4705, 0
        %v4774 = vsel %vm1608, %v4706, 0
        %v4777 = vsel %vm1608, %v4707, 0
        %v4780 = vsel %vm1608, %v4708, 0
        %v4783 = vsel %vm1608, %v4709, 0
        %v4786 = vsel %vm1608, %v4710, 0
        %v4789 = vsel %vm1608, %v4711, 0
        %v4792 = vsel %vm1608, %v4712, 0
        %v4795 = vsel %vm1608, %v4713, 0
        %v4798 = vsel %vm1608, %v4714, 0
        %v4801 = vsel %vm1608, %v4715, 0
        %v4804 = vsel %vm1608, %v4716, 0
        %v4807 = vsel %vm1608, %v4717, 0
        %v4810 = vsel %vm1608, %v4718, 0
        %v4813 = vsel %vm1608, %v4719, 0
        %v4816 = vsel %vm1608, %v4720, 0
        %v4819 = vsel %vm1608, %v4721, 0
        %v4822 = vsel %vm1782, %v4724, 0
        %4824 = vmatprep.subr.mxu0 0.0
        %4825 = vmatpush1.msra.mxu0 %v4723
        %4826 = vmatprep.subr.mxu0 0.0
        %4827 = vmatpush1.msra.mxu0 %v4822
        %4828 = vmatprep.subr.mxu0 0.0
        %4829 = vmatpush1.msra.mxu0 0.0
        %4830 = vmatprep.subr.mxu0 0.0
        %4831 = vmatpush1.msra.mxu0 0.0
        %4832 = vmatprep.subr.mxu0 0.0
        %4833 = vmatpush1.msra.mxu0 0.0
        %4834 = vmatprep.subr.mxu0 0.0
        %4835 = vmatpush1.msra.mxu0 0.0
        %4836 = vmatprep.subr.mxu0 0.0
        %4837 = vmatpush1.msra.mxu0 0.0
        %4838 = vmatprep.subr.mxu0 0.0
        %4839 = vmatpush1.msra.mxu0 0.0
        %4840 = vmatprep.subr.mxu0 0.0
        %4841 = vmatpush1.msra.mxu0 0.0
        %4842 = vmatprep.subr.mxu0 0.0
        %4843 = vmatpush1.msra.mxu0 0.0
        %4844 = vmatprep.subr.mxu0 0.0
        %4845 = vmatpush1.msra.mxu0 0.0
        %4846 = vmatprep.subr.mxu0 0.0
        %4847 = vmatpush1.msra.mxu0 0.0
        %4848 = vmatprep.subr.mxu0 0.0
        %4849 = vmatpush1.msra.mxu0 0.0
        %4850 = vmatprep.subr.mxu0 0.0
        %4851 = vmatpush1.msra.mxu0 0.0
        %4852 = vmatprep.subr.mxu0 0.0
        %4853 = vmatpush1.msra.mxu0 0.0
        %4854 = vmatprep.subr.mxu0 0.0
        %4855 = vmatpush1.msra.mxu0 0.0
        %4856 = vmatprep.subr.mxu0 0.0
        %4857 = vmatpush1.msra.mxu0 0.0
        %4858 = vmatprep.subr.mxu0 0.0
        %4859 = vmatpush1.msra.mxu0 0.0
        %4860 = vmatprep.subr.mxu0 0.0
        %4861 = vmatpush1.msra.mxu0 0.0
        %4862 = vmatprep.subr.mxu0 0.0
        %4863 = vmatpush1.msra.mxu0 0.0
        %4864 = vmatprep.subr.mxu0 0.0
        %4865 = vmatpush1.msra.mxu0 0.0
        %4866 = vmatprep.subr.mxu0 0.0
        %4867 = vmatpush1.msra.mxu0 0.0
        %4868 = vmatprep.subr.mxu0 0.0
        %4869 = vmatpush1.msra.mxu0 0.0
        %4870 = vmatprep.subr.mxu0 0.0
        %4871 = vmatpush1.msra.mxu0 0.0
        %4872 = vmatprep.subr.mxu0 0.0
        %4873 = vmatpush1.msra.mxu0 0.0
        %4874 = vmatprep.subr.mxu0 0.0
        %4875 = vmatpush1.msra.mxu0 0.0
        %4876 = vmatprep.subr.mxu0 0.0
        %4877 = vmatpush1.msra.mxu0 0.0
        %4878 = vmatprep.subr.mxu0 0.0
        %4879 = vmatpush1.msra.mxu0 0.0
        %4880 = vmatprep.subr.mxu0 0.0
        %4881 = vmatpush1.msra.mxu0 0.0
        %4882 = vmatprep.subr.mxu0 0.0
        %4883 = vmatpush1.msra.mxu0 0.0
        %4884 = vmatprep.subr.mxu0 0.0
        %4885 = vmatpush1.msra.mxu0 0.0
        %4886 = vmatprep.subr.mxu0 0.0
        %4887 = vmatpush1.msra.mxu0 0.0
        %4888 = vmatprep.mubr.f32.mxu0 0.0
        %4889 = vmatmul.mubr.f32.gmra.mrb[0].mxu0 %v4726
        %v4890 = vpop.f32.mrb[0].mxu0
        %v4891 = vadd.f32 0.0, %v4890
        %v4892 = vpop.f32.mrb[0].mxu0
        %4893 = vmatprep.mubr.f32.mxu0 0.0
        %4894 = vmatmul.mubr.f32.gmra.mrb[0].mxu0 %v4729
        %v4895 = vpop.f32.mrb[0].mxu0
        %v4896 = vadd.f32 0.0, %v4895
        %v4897 = vpop.f32.mrb[0].mxu0
        %4898 = vmatprep.mubr.f32.mxu0 0.0
        %4899 = vmatmul.mubr.f32.gmra.mrb[0].mxu0 %v4732
        %v4900 = vpop.f32.mrb[0].mxu0
        %v4901 = vadd.f32 0.0, %v4900
        %v4902 = vpop.f32.mrb[0].mxu0
        %4903 = vmatprep.mubr.f32.mxu0 0.0
        %4904 = vmatmul.mubr.f32.gmra.mrb[0].mxu0 %v4735
        %v4905 = vpop.f32.mrb[0].mxu0
        %v4906 = vadd.f32 0.0, %v4905
        %v4907 = vpop.f32.mrb[0].mxu0
        %4908 = vmatprep.mubr.f32.mxu0 0.0
        %4909 = vmatmul.mubr.f32.gmra.mrb[0].mxu0 %v4738
        %v4910 = vpop.f32.mrb[0].mxu0
        %v4911 = vadd.f32 0.0, %v4910
        %v4912 = vpop.f32.mrb[0].mxu0
        %4913 = vmatprep.mubr.f32.mxu0 0.0
        %4914 = vmatmul.mubr.f32.gmra.mrb[0].mxu0 %v4741
        %v4915 = vpop.f32.mrb[0].mxu0
        %v4916 = vadd.f32 0.0, %v4915
        %v4917 = vpop.f32.mrb[0].mxu0
        %4918 = vmatprep.mubr.f32.mxu0 0.0
        %4919 = vmatmul.mubr.f32.gmra.mrb[0].mxu0 %v4744
        %v4920 = vpop.f32.mrb[0].mxu0
        %v4921 = vadd.f32 0.0, %v4920
        %v4922 = vpop.f32.mrb[0].mxu0
        %4923 = vmatprep.mubr.f32.mxu0 0.0
        %4924 = vmatmul.mubr.f32.gmra.mrb[0].mxu0 %v4747
        %v4925 = vpop.f32.mrb[0].mxu0
        %v4926 = vadd.f32 0.0, %v4925
        %v4927 = vpop.f32.mrb[0].mxu0
        %4928 = vmatprep.mubr.f32.mxu0 0.0
        %4929 = vmatmul.mubr.f32.gmra.mrb[0].mxu0 %v4750
        %v4930 = vpop.f32.mrb[0].mxu0
        %v4931 = vadd.f32 0.0, %v4930
        %v4932 = vpop.f32.mrb[0].mxu0
        %4933 = vmatprep.mubr.f32.mxu0 0.0
        %4934 = vmatmul.mubr.f32.gmra.mrb[0].mxu0 %v4753
        %v4935 = vpop.f32.mrb[0].mxu0
        %v4936 = vadd.f32 0.0, %v4935
        %v4937 = vpop.f32.mrb[0].mxu0
        %4938 = vmatprep.mubr.f32.mxu0 0.0
        %4939 = vmatmul.mubr.f32.gmra.mrb[0].mxu0 %v4756
        %v4940 = vpop.f32.mrb[0].mxu0
        %v4941 = vadd.f32 0.0, %v4940
        %v4942 = vpop.f32.mrb[0].mxu0
        %4943 = vmatprep.mubr.f32.mxu0 0.0
        %4944 = vmatmul.mubr.f32.gmra.mrb[0].mxu0 %v4759
        %v4945 = vpop.f32.mrb[0].mxu0
        %v4946 = vadd.f32 0.0, %v4945
        %v4947 = vpop.f32.mrb[0].mxu0
        %4948 = vmatprep.mubr.f32.mxu0 0.0
        %4949 = vmatmul.mubr.f32.gmra.mrb[0].mxu0 %v4762
        %v4950 = vpop.f32.mrb[0].mxu0
        %v4951 = vadd.f32 0.0, %v4950
        %v4952 = vpop.f32.mrb[0].mxu0
        %4953 = vmatprep.mubr.f32.mxu0 0.0
        %4954 = vmatmul.mubr.f32.gmra.mrb[0].mxu0 %v4765
        %v4955 = vpop.f32.mrb[0].mxu0
        %v4956 = vadd.f32 0.0, %v4955
        %v4957 = vpop.f32.mrb[0].mxu0
        %4958 = vmatprep.mubr.f32.mxu0 0.0
        %4959 = vmatmul.mubr.f32.gmra.mrb[0].mxu0 %v4768
        %v4960 = vpop.f32.mrb[0].mxu0
        %v4961 = vadd.f32 0.0, %v4960
        %v4962 = vpop.f32.mrb[0].mxu0
        %4963 = vmatprep.mubr.f32.mxu0 0.0
        %4964 = vmatmul.mubr.f32.gmra.mrb[0].mxu0 %v4771
        %v4965 = vpop.f32.mrb[0].mxu0
        %v4966 = vadd.f32 0.0, %v4965
        %v4967 = vpop.f32.mrb[0].mxu0
        %4968 = vmatprep.mubr.f32.mxu0 0.0
        %4969 = vmatmul.mubr.f32.gmra.mrb[0].mxu0 %v4774
        %v4970 = vpop.f32.mrb[0].mxu0
        %v4971 = vadd.f32 0.0, %v4970
        %v4972 = vpop.f32.mrb[0].mxu0
        %4973 = vmatprep.mubr.f32.mxu0 0.0
        %4974 = vmatmul.mubr.f32.gmra.mrb[0].mxu0 %v4777
        %v4975 = vpop.f32.mrb[0].mxu0
        %v4976 = vadd.f32 0.0, %v4975
        %v4977 = vpop.f32.mrb[0].mxu0
        %4978 = vmatprep.mubr.f32.mxu0 0.0
        %4979 = vmatmul.mubr.f32.gmra.mrb[0].mxu0 %v4780
        %v4980 = vpop.f32.mrb[0].mxu0
        %v4981 = vadd.f32 0.0, %v4980
        %v4982 = vpop.f32.mrb[0].mxu0
        %4983 = vmatprep.mubr.f32.mxu0 0.0
        %4984 = vmatmul.mubr.f32.gmra.mrb[0].mxu0 %v4783
        %v4985 = vpop.f32.mrb[0].mxu0
        %v4986 = vadd.f32 0.0, %v4985
        %v4987 = vpop.f32.mrb[0].mxu0
        %4988 = vmatprep.mubr.f32.mxu0 0.0
        %4989 = vmatmul.mubr.f32.gmra.mrb[0].mxu0 %v4786
        %v4990 = vpop.f32.mrb[0].mxu0
        %v4991 = vadd.f32 0.0, %v4990
        %v4992 = vpop.f32.mrb[0].mxu0
        %4993 = vmatprep.mubr.f32.mxu0 0.0
        %4994 = vmatmul.mubr.f32.gmra.mrb[0].mxu0 %v4789
        %v4995 = vpop.f32.mrb[0].mxu0
        %v4996 = vadd.f32 0.0, %v4995
        %v4997 = vpop.f32.mrb[0].mxu0
        %4998 = vmatprep.mubr.f32.mxu0 0.0
        %4999 = vmatmul.mubr.f32.gmra.mrb[0].mxu0 %v4792
        %v5000 = vpop.f32.mrb[0].mxu0
        %v5001 = vadd.f32 0.0, %v5000
        %v5002 = vpop.f32.mrb[0].mxu0
        %5003 = vmatprep.mubr.f32.mxu0 0.0
        %5004 = vmatmul.mubr.f32.gmra.mrb[0].mxu0 %v4795
        %v5005 = vpop.f32.mrb[0].mxu0
        %v5006 = vadd.f32 0.0, %v5005
        %v5007 = vpop.f32.mrb[0].mxu0
        %5008 = vmatprep.mubr.f32.mxu0 0.0
        %5009 = vmatmul.mubr.f32.gmra.mrb[0].mxu0 %v4798
        %v5010 = vpop.f32.mrb[0].mxu0
        %v5011 = vadd.f32 0.0, %v5010
        %v5012 = vpop.f32.mrb[0].mxu0
        %5013 = vmatprep.mubr.f32.mxu0 0.0
        %5014 = vmatmul.mubr.f32.gmra.mrb[0].mxu0 %v4801
        %v5015 = vpop.f32.mrb[0].mxu0
        %v5016 = vadd.f32 0.0, %v5015
        %v5017 = vpop.f32.mrb[0].mxu0
        %5018 = vmatprep.mubr.f32.mxu0 0.0
        %5019 = vmatmul.mubr.f32.gmra.mrb[0].mxu0 %v4804
        %v5020 = vpop.f32.mrb[0].mxu0
        %v5021 = vadd.f32 0.0, %v5020
        %v5022 = vpop.f32.mrb[0].mxu0
        %5023 = vmatprep.mubr.f32.mxu0 0.0
        %5024 = vmatmul.mubr.f32.gmra.mrb[0].mxu0 %v4807
        %v5025 = vpop.f32.mrb[0].mxu0
        %v5026 = vadd.f32 0.0, %v5025
        %v5027 = vpop.f32.mrb[0].mxu0
        %5028 = vmatprep.mubr.f32.mxu0 0.0
        %5029 = vmatmul.mubr.f32.gmra.mrb[0].mxu0 %v4810
        %v5030 = vpop.f32.mrb[0].mxu0
        %v5031 = vadd.f32 0.0, %v5030
        %v5032 = vpop.f32.mrb[0].mxu0
        %5033 = vmatprep.mubr.f32.mxu0 0.0
        %5034 = vmatmul.mubr.f32.gmra.mrb[0].mxu0 %v4813
        %v5035 = vpop.f32.mrb[0].mxu0
        %v5036 = vadd.f32 0.0, %v5035
        %v5037 = vpop.f32.mrb[0].mxu0
        %5038 = vmatprep.mubr.f32.mxu0 0.0
        %5039 = vmatmul.mubr.f32.gmra.mrb[0].mxu0 %v4816
        %v5040 = vpop.f32.mrb[0].mxu0
        %v5041 = vadd.f32 0.0, %v5040
        %v5042 = vpop.f32.mrb[0].mxu0
        %5043 = vmatprep.mubr.f32.mxu0 0.0
        %5044 = vmatmul.mubr.f32.gmra.mrb[0].mxu0 %v4819
        %v5045 = vpop.f32.mrb[0].mxu0
        %v5046 = vadd.f32 0.0, %v5045
        %v5047 = vpop.f32.mrb[0].mxu0
        %5048 = vdwg.mxu0
        %v5049 = vadd.f32 %v4657, %v4891
        %v5050 = vadd.f32 %v4658, %v4896
        %v5051 = vadd.f32 %v4659, %v4901
        %v5052 = vadd.f32 %v4660, %v4906
        %v5053 = vadd.f32 %v4661, %v4911
        %v5054 = vadd.f32 %v4662, %v4916
        %v5055 = vadd.f32 %v4663, %v4921
        %v5056 = vadd.f32 %v4664, %v4926
        %v5057 = vadd.f32 %v4665, %v4931
        %v5058 = vadd.f32 %v4666, %v4936
        %v5059 = vadd.f32 %v4667, %v4941
        %v5060 = vadd.f32 %v4668, %v4946
        %v5061 = vadd.f32 %v4669, %v4951
        %v5062 = vadd.f32 %v4670, %v4956
        %v5063 = vadd.f32 %v4671, %v4961
        %v5064 = vadd.f32 %v4672, %v4966
        %v5065 = vadd.f32 %v4673, %v4971
        %v5066 = vadd.f32 %v4674, %v4976
        %v5067 = vadd.f32 %v4675, %v4981
        %v5068 = vadd.f32 %v4676, %v4986
        %v5069 = vadd.f32 %v4677, %v4991
        %v5070 = vadd.f32 %v4678, %v4996
        %v5071 = vadd.f32 %v4679, %v5001
        %v5072 = vadd.f32 %v4680, %v5006
        %v5073 = vadd.f32 %v4681, %v5011
        %v5074 = vadd.f32 %v4682, %v5016
        %v5075 = vadd.f32 %v4683, %v5021
        %v5076 = vadd.f32 %v4684, %v5026
        %v5077 = vadd.f32 %v4685, %v5031
        %v5078 = vadd.f32 %v4686, %v5036
        %v5079 = vadd.f32 %v4687, %v5041
        %v5080 = vadd.f32 %v4688, %v5046
        %vm5081 = vcmp.gt.f32.partialorder %v5049, 0.0
        %vm5082 = vcmp.gt.f32.partialorder %v5050, 0.0
        %vm5083 = vcmp.gt.f32.partialorder %v5051, 0.0
        %vm5084 = vcmp.gt.f32.partialorder %v5052, 0.0
        %vm5085 = vcmp.gt.f32.partialorder %v5053, 0.0
        %vm5086 = vcmp.gt.f32.partialorder %v5054, 0.0
        %vm5087 = vcmp.gt.f32.partialorder %v5055, 0.0
        %vm5088 = vcmp.gt.f32.partialorder %v5056, 0.0
        %vm5089 = vcmp.gt.f32.partialorder %v5057, 0.0
        %vm5090 = vcmp.gt.f32.partialorder %v5058, 0.0
        %vm5091 = vcmp.gt.f32.partialorder %v5059, 0.0
        %vm5092 = vcmp.gt.f32.partialorder %v5060, 0.0
        %vm5093 = vcmp.gt.f32.partialorder %v5061, 0.0
        %vm5094 = vcmp.gt.f32.partialorder %v5062, 0.0
        %vm5095 = vcmp.gt.f32.partialorder %v5063, 0.0
        %vm5096 = vcmp.gt.f32.partialorder %v5064, 0.0
        %vm5097 = vcmp.gt.f32.partialorder %v5065, 0.0
        %vm5098 = vcmp.gt.f32.partialorder %v5066, 0.0
        %vm5099 = vcmp.gt.f32.partialorder %v5067, 0.0
        %vm5100 = vcmp.gt.f32.partialorder %v5068, 0.0
        %vm5101 = vcmp.gt.f32.partialorder %v5069, 0.0
        %vm5102 = vcmp.gt.f32.partialorder %v5070, 0.0
        %vm5103 = vcmp.gt.f32.partialorder %v5071, 0.0
        %vm5104 = vcmp.gt.f32.partialorder %v5072, 0.0
        %vm5105 = vcmp.gt.f32.partialorder %v5073, 0.0
        %vm5106 = vcmp.gt.f32.partialorder %v5074, 0.0
        %vm5107 = vcmp.gt.f32.partialorder %v5075, 0.0
        %vm5108 = vcmp.gt.f32.partialorder %v5076, 0.0
        %vm5109 = vcmp.gt.f32.partialorder %v5077, 0.0
        %vm5110 = vcmp.gt.f32.partialorder %v5078, 0.0
        %vm5111 = vcmp.gt.f32.partialorder %v5079, 0.0
        %vm5112 = vcmp.gt.f32.partialorder %v5080, 0.0
        %v5113 = vmul.f32 %v5049, 0.01
        %v5114 = vmul.f32 %v5050, 0.01
        %v5115 = vmul.f32 %v5051, 0.01
        %v5116 = vmul.f32 %v5052, 0.01
        %v5117 = vmul.f32 %v5053, 0.01
        %v5118 = vmul.f32 %v5054, 0.01
        %v5119 = vmul.f32 %v5055, 0.01
        %v5120 = vmul.f32 %v5056, 0.01
        %v5121 = vmul.f32 %v5057, 0.01
        %v5122 = vmul.f32 %v5058, 0.01
        %v5123 = vmul.f32 %v5059, 0.01
        %v5124 = vmul.f32 %v5060, 0.01
        %v5125 = vmul.f32 %v5061, 0.01
        %v5126 = vmul.f32 %v5062, 0.01
        %v5127 = vmul.f32 %v5063, 0.01
        %v5128 = vmul.f32 %v5064, 0.01
        %v5129 = vmul.f32 %v5065, 0.01
        %v5130 = vmul.f32 %v5066, 0.01
        %v5131 = vmul.f32 %v5067, 0.01
        %v5132 = vmul.f32 %v5068, 0.01
        %v5133 = vmul.f32 %v5069, 0.01
        %v5134 = vmul.f32 %v5070, 0.01
        %v5135 = vmul.f32 %v5071, 0.01
        %v5136 = vmul.f32 %v5072, 0.01
        %v5137 = vmul.f32 %v5073, 0.01
        %v5138 = vmul.f32 %v5074, 0.01
        %v5139 = vmul.f32 %v5075, 0.01
        %v5140 = vmul.f32 %v5076, 0.01
        %v5141 = vmul.f32 %v5077, 0.01
        %v5142 = vmul.f32 %v5078, 0.01
        %v5143 = vmul.f32 %v5079, 0.01
        %v5144 = vmul.f32 %v5080, 0.01
        %v5145 = vsel %vm5081, %v5049, %v5113
        %v5146 = vsel %vm5082, %v5050, %v5114
        %v5147 = vsel %vm5083, %v5051, %v5115
        %v5148 = vsel %vm5084, %v5052, %v5116
        %v5149 = vsel %vm5085, %v5053, %v5117
        %v5150 = vsel %vm5086, %v5054, %v5118
        %v5151 = vsel %vm5087, %v5055, %v5119
        %v5152 = vsel %vm5088, %v5056, %v5120
        %v5153 = vsel %vm5089, %v5057, %v5121
        %v5154 = vsel %vm5090, %v5058, %v5122
        %v5155 = vsel %vm5091, %v5059, %v5123
        %v5156 = vsel %vm5092, %v5060, %v5124
        %v5157 = vsel %vm5093, %v5061, %v5125
        %v5158 = vsel %vm5094, %v5062, %v5126
        %v5159 = vsel %vm5095, %v5063, %v5127
        %v5160 = vsel %vm5096, %v5064, %v5128
        %v5161 = vsel %vm5097, %v5065, %v5129
        %v5162 = vsel %vm5098, %v5066, %v5130
        %v5163 = vsel %vm5099, %v5067, %v5131
        %v5164 = vsel %vm5100, %v5068, %v5132
        %v5165 = vsel %vm5101, %v5069, %v5133
        %v5166 = vsel %vm5102, %v5070, %v5134
        %v5167 = vsel %vm5103, %v5071, %v5135
        %v5168 = vsel %vm5104, %v5072, %v5136
        %v5169 = vsel %vm5105, %v5073, %v5137
        %v5170 = vsel %vm5106, %v5074, %v5138
        %v5171 = vsel %vm5107, %v5075, %v5139
        %v5172 = vsel %vm5108, %v5076, %v5140
        %v5173 = vsel %vm5109, %v5077, %v5141
        %v5174 = vsel %vm5110, %v5078, %v5142
        %v5175 = vsel %vm5111, %v5079, %v5143
        %v5176 = vsel %vm5112, %v5080, %v5144
        %5177 = vst.msk [vmem:[%s523] sm:$0xff] %vm716, %v5145
        %5178 = vst.msk [vmem:[%s523 + $0x8] sm:$0xff] %vm716, %v5146
        %5179 = vst.msk [vmem:[%s523 + $0x10] sm:$0xff] %vm716, %v5147
        %5180 = vst.msk [vmem:[%s523 + $0x18] sm:$0xff] %vm716, %v5148
        %5181 = vst.msk [vmem:[%s523 + $0x20] sm:$0xff] %vm716, %v5149
        %5182 = vst.msk [vmem:[%s523 + $0x28] sm:$0xff] %vm716, %v5150
        %5183 = vst.msk [vmem:[%s523 + $0x30] sm:$0xff] %vm716, %v5151
        %5184 = vst.msk [vmem:[%s523 + $0x38] sm:$0xff] %vm716, %v5152
        %5185 = vst.msk [vmem:[%s523 + $0x40] sm:$0xff] %vm716, %v5153
        %5186 = vst.msk [vmem:[%s523 + $0x48] sm:$0xff] %vm716, %v5154
        %5187 = vst.msk [vmem:[%s523 + $0x50] sm:$0xff] %vm716, %v5155
        %5188 = vst.msk [vmem:[%s523 + $0x58] sm:$0xff] %vm716, %v5156
        %5189 = vst.msk [vmem:[%s523 + $0x60] sm:$0xff] %vm716, %v5157
        %5190 = vst.msk [vmem:[%s523 + $0x68] sm:$0xff] %vm716, %v5158
        %5191 = vst.msk [vmem:[%s523 + $0x70] sm:$0xff] %vm716, %v5159
        %5192 = vst.msk [vmem:[%s523 + $0x78] sm:$0xff] %vm716, %v5160
        %5193 = vst.msk [vmem:[%s523 + $0x80] sm:$0xff] %vm716, %v5161
        %5194 = vst.msk [vmem:[%s523 + $0x88] sm:$0xff] %vm716, %v5162
        %5195 = vst.msk [vmem:[%s523 + $0x90] sm:$0xff] %vm716, %v5163
        %5196 = vst.msk [vmem:[%s523 + $0x98] sm:$0xff] %vm716, %v5164
        %5197 = vst.msk [vmem:[%s523 + $0xa0] sm:$0xff] %vm716, %v5165
        %5198 = vst.msk [vmem:[%s523 + $0xa8] sm:$0xff] %vm716, %v5166
        %5199 = vst.msk [vmem:[%s523 + $0xb0] sm:$0xff] %vm716, %v5167
        %5200 = vst.msk [vmem:[%s523 + $0xb8] sm:$0xff] %vm716, %v5168
        %5201 = vst.msk [vmem:[%s523 + $0xc0] sm:$0xff] %vm716, %v5169
        %5202 = vst.msk [vmem:[%s523 + $0xc8] sm:$0xff] %vm716, %v5170
        %5203 = vst.msk [vmem:[%s523 + $0xd0] sm:$0xff] %vm716, %v5171
        %5204 = vst.msk [vmem:[%s523 + $0xd8] sm:$0xff] %vm716, %v5172
        %5205 = vst.msk [vmem:[%s523 + $0xe0] sm:$0xff] %vm716, %v5173
        %5206 = vst.msk [vmem:[%s523 + $0xe8] sm:$0xff] %vm716, %v5174
        %5207 = vst.msk [vmem:[%s523 + $0xf0] sm:$0xff] %vm716, %v5175
        %5208 = vst.msk [vmem:[%s523 + $0xf8] sm:$0xff] %vm716, %v5176
        %s5209 = sand.u32 %s262, 1
        %s5210 = scalar_lea.sflag [#allocation6], %s5209
        %s5211 = sand.u32 %s262, 1
        %s5212 = smul.addr %s5211, 256
        %s5213 = scalar_lea.vmem [#allocation21], %s5212
        // Predicated region
        $region101: #{tpu_custom_call.1} parent=59 // pred_check
          %p5214 = pneg %p272
        $region102: #{tpu_custom_call.1} parent=59 // pred_check_branch
          %5216 = sbr.rel (%p5214) target = $region104
        $region103: #{tpu_custom_call.1} parent=59 // pred_region
          %s5218 = ssub.s32 4096, 4096
          %5219 = vsyncadd %s5210, %s5218
          %s5220 = smul.addr %s34, 32
          %s5221 = smul.addr %s5220, 128
          %s5222 = scalar_lea.hbm %s10, %s5221
          %s5223 = sshll.u32 %s5213, 4
          %s5224 = int_to_ptr.vmem [resolvable:$true] %s5223
          %5229 = dma.vmem_to_hbm [thread:$0]  %s5224, 4096, %s5222, %s5210, 128, 128, 8
        $region104: #{tpu_custom_call.1} parent=59 // pred_fallthru
          _
      $region60: #{tpu_custom_call.1} parent=5 // pred_fallthru
        _
      %p5230 = scmp.le.s32.totalorder 2, %s29
      // Predicated region
      $region105: #{tpu_custom_call.1} parent=5 // pred_check
        %p5231 = pneg %p5230
      $region106: #{tpu_custom_call.1} parent=5 // pred_check_branch
        %5233 = sbr.rel (%p5231) target = $region108
      $region107: #{tpu_custom_call.1} parent=5 // pred_region
        %s5234 = ssub.s32 %s29, 2
        // Predicated region
        $region109: #{tpu_custom_call.1} parent=107 // pred_check
          %p5235 = pneg %p278
        $region110: #{tpu_custom_call.1} parent=107 // pred_check_branch
          %5237 = sbr.rel (%p5235) target = $region112
        $region111: #{tpu_custom_call.1} parent=107 // pred_region
          %s5238 = sand.u32 %s263, 1
          %s5239 = scalar_lea.sflag [#allocation6], %s5238
          %s5240 = sand.u32 %s263, 1
          %s5241 = smul.addr %s5240, 256
          %s5242 = scalar_lea.vmem [#allocation21], %s5241
          %5243 = dma.done %s5239, 4096
        $region112: #{tpu_custom_call.1} parent=107 // pred_fallthru
          _
      $region108: #{tpu_custom_call.1} parent=5 // pred_fallthru
        _
    $region6: #{tpu_custom_call.1} parent=1 // loop_footer
      %s33 = sadd.s32 1, %s29
    $region7: #{tpu_custom_call.1} parent=1 // loop_footer_branch
      %28 = sbr.rel target = $region3
    $region8: #{tpu_custom_call.1} parent=1 // loop_exit
      _
    %5244 = vsyncpa [#allocation5], 1
    %s5245 = scalar_lea.sflag [#allocation5], 1
    %5246 = vsyncpa %s5245, 1
    %5247 = vsyncpa [#allocation8], 1
    %s5248 = scalar_lea.sflag [#allocation8], 1
    %5249 = vsyncpa %s5248, 1
    %5250 = vsyncpa [#allocation11], 1
    %5251 = vsyncpa [#allocation14], 1
    %5252 = vsyncpa [#allocation17], 1
    %5253 = vsyncpa [#allocation20], 1
    %5254 = vsyncpa [#allocation6], 1
    %s5255 = scalar_lea.sflag [#allocation6], 1
    %5256 = vsyncpa %s5255, 1

</llo_original>
